<compile_context>
chip_gen: v5e
topology: v5e:2x2
jax: 0.10.0
libtpu: 0.0.40
codegen_flags: <defaults>
</compile_context>

<pallas_src>
import functools

import jax
import jax.numpy as jnp
from jax.experimental import pallas as pl
from jax.experimental.pallas import tpu as pltpu

KERNEL_SIZE = 55          # conv_params = {'kernel_size': 55}
_EPS = 1e-8
_LANE = 128
_K_PAD = 64               # KERNEL_SIZE padded up for friendly sublane/lane layout


def _round_up(x, m):
    return ((x + m - 1) // m) * m


def _choose_tile(n, tile_n):
    """128-multiple row tile; keep the grid >= 2 programs when possible (v7x: 2 TCs)."""
    n128 = _round_up(max(n, 1), _LANE)
    cap = max(_LANE, (n128 // (2 * _LANE)) * _LANE)
    tn = min(_round_up(tile_n, _LANE), cap)
    n_pad = _round_up(n128, tn)
    return tn, n_pad


def _pad_rows(x, n_pad):
    n = x.shape[0]
    if n == n_pad:
        return x
    return jnp.pad(x, [(0, n_pad - n)] + [(0, 0)] * (x.ndim - 1))


def _vmem_limit_bytes():
    # Generation-aware scoped-VMEM limit: v5e/v6e have 128 MiB physical per core,
    # v7x only 64 MiB per TensorCore -> stay conservative there.
    try:
        kind = jax.devices()[0].device_kind.lower()
    except Exception:
        kind = ""
    if "v5" in kind or "v6" in kind:
        return 96 * 1024 * 1024
    return 44 * 1024 * 1024


@functools.lru_cache(maxsize=None)
def _compiler_params():
    return pltpu.CompilerParams(
        dimension_semantics=("parallel",),
        vmem_limit_bytes=_vmem_limit_bytes(),
    )


# ---------------------------------------------------------------------------
# Pallas kernels (bf16 MXU matmuls, fp32 accumulate + fp32 epilogue)
# ---------------------------------------------------------------------------
def _conv_kernel_plain(x_ref, w_ref, b_ref, o_ref):
    # x: (TN, K*Cin) bf16, w: (K*Cin, Cp) bf16, b: (1, Cp) f32, o: (TN, Cp).
    acc = jnp.dot(x_ref[...], w_ref[...], preferred_element_type=jnp.float32)
    o_ref[...] = jnp.maximum(acc + b_ref[...], 0.0).astype(o_ref.dtype)


def _conv_kernel_norm(xw_ref, s_ref, w_ref, b_ref, o_ref):
    # xw: importance-weighted gathered feats (TN, K*Cin) bf16, s: (TN, 1) f32.
    acc = jnp.dot(xw_ref[...], w_ref[...], preferred_element_type=jnp.float32)
    inv = pl.reciprocal(jnp.maximum(s_ref[...], _EPS), approx=True)   # EUP slot
    o_ref[...] = jnp.maximum(acc * inv + b_ref[...], 0.0).astype(o_ref.dtype)


def _conv_kernel_split(xa_ref, imp_ref, s_ref, e_ref, wa_ref, wb_ref, b_ref, o_ref):
    # Fused conv1a (plain, columns [0:Ca]) + conv1b (normalized, columns [Ca:Ca+Cb]).
    # Only the plain gathered stream xa is read from HBM; the importance-weighted
    # copy is rebuilt in VMEM: imp (TN, Kp) bf16 @ E (Kp, K*Cin) expands imp over Cin.
    xa = xa_ref[...]
    imp_x = jnp.dot(imp_ref[...], e_ref[...], preferred_element_type=jnp.float32)
    xw = (xa.astype(jnp.float32) * imp_x).astype(jnp.bfloat16)
    acc_a = jnp.dot(xa, wa_ref[...], preferred_element_type=jnp.float32)
    acc_b = jnp.dot(xw, wb_ref[...], preferred_element_type=jnp.float32)
    inv = pl.reciprocal(jnp.maximum(s_ref[...], _EPS), approx=True)
    o_ref[...] = jnp.maximum(acc_a + acc_b * inv + b_ref[...], 0.0).astype(o_ref.dtype)


# ---------------------------------------------------------------------------
# Conv wrappers (gather glue stays XLA-side, fused with the bf16 cast)
# ---------------------------------------------------------------------------
def sparse_conv_plain(p, feats, nbr_idx, *, tile_n, out_dtype=jnp.float32):
    n = nbr_idx.shape[0]
    tn, n_pad = _choose_tile(n, tile_n)
    idx = _pad_rows(nbr_idx, n_pad)                               # pad indices, not the stream
    x = feats[idx].reshape(n_pad, -1).astype(jnp.bfloat16)        # (n_pad, K*Cin) bf16
    kc = x.shape[1]
    cp = p['cout_pad']
    # NOTE: weight/bias blocks are grid-invariant; Pallas revisits them without re-DMA.
    out = pl.pallas_call(
        _conv_kernel_plain,
        out_shape=jax.ShapeDtypeStruct((n_pad, cp), out_dtype),
        grid=(n_pad // tn,),
        in_specs=[pl.BlockSpec((tn, kc), lambda i: (i, 0)),
                  pl.BlockSpec((kc, cp), lambda i: (0, 0)),
                  pl.BlockSpec((1, cp), lambda i: (0, 0))],
        out_specs=pl.BlockSpec((tn, cp), lambda i: (i, 0)),
        compiler_params=_compiler_params(),
    )(x, p['w'], p['b'])
    return out[:n, :p['cout']]


def sparse_conv_norm(p, feats, nbr_idx, importance, *, tile_n, out_dtype=jnp.float32):
    n = nbr_idx.shape[0]
    tn, n_pad = _choose_tile(n, tile_n)
    idx = _pad_rows(nbr_idx, n_pad)
    imp = importance[idx].astype(jnp.float32)                      # (n_pad, K) f32
    s = jnp.sum(imp, axis=-1, keepdims=True)                       # (n_pad, 1) f32
    xw = (feats[idx].astype(jnp.float32) * imp[..., None]
          ).reshape(n_pad, -1).astype(jnp.bfloat16)                # (n_pad, K*Cin) bf16
    kc = xw.shape[1]
    cp = p['cout_pad']
    out = pl.pallas_call(
        _conv_kernel_norm,
        out_shape=jax.ShapeDtypeStruct((n_pad, cp), out_dtype),
        grid=(n_pad // tn,),
        in_specs=[pl.BlockSpec((tn, kc), lambda i: (i, 0)),
                  pl.BlockSpec((tn, 1), lambda i: (i, 0)),
                  pl.BlockSpec((kc, cp), lambda i: (0, 0)),
                  pl.BlockSpec((1, cp), lambda i: (0, 0))],
        out_specs=pl.BlockSpec((tn, cp), lambda i: (i, 0)),
        compiler_params=_compiler_params(),
    )(xw, s, p['w'], p['b'])
    return out[:n, :p['cout']], s[:n, 0]


def sparse_conv_split(p, feats, nbr_idx, importance, *, tile_n, out_dtype=jnp.float32):
    n = nbr_idx.shape[0]
    tn, n_pad = _choose_tile(n, tile_n)
    idx = _pad_rows(nbr_idx, n_pad)
    xa = feats[idx].reshape(n_pad, -1).astype(jnp.bfloat16)        # (n_pad, K*Cin) bf16
    imp = importance[idx].astype(jnp.float32)                      # (n_pad, K)     f32
    s = jnp.sum(imp, axis=-1, keepdims=True)                       # (n_pad, 1)     f32
    imp_b = jnp.pad(imp.astype(jnp.bfloat16),
                    ((0, 0), (0, _K_PAD - KERNEL_SIZE)))           # (n_pad, 64)    bf16
    kc = xa.shape[1]
    cp = p['cout_pad']
    out = pl.pallas_call(
        _conv_kernel_split,
        out_shape=jax.ShapeDtypeStruct((n_pad, cp), out_dtype),
        grid=(n_pad // tn,),
        in_specs=[pl.BlockSpec((tn, kc), lambda i: (i, 0)),        # xa
                  pl.BlockSpec((tn, _K_PAD), lambda i: (i, 0)),    # imp (bf16)
                  pl.BlockSpec((tn, 1), lambda i: (i, 0)),         # sum(imp) f32
                  pl.BlockSpec((_K_PAD, kc), lambda i: (0, 0)),    # expand matrix E
                  pl.BlockSpec((kc, cp), lambda i: (0, 0)),        # wa
                  pl.BlockSpec((kc, cp), lambda i: (0, 0)),        # wb
                  pl.BlockSpec((1, cp), lambda i: (0, 0))],        # bias
        out_specs=pl.BlockSpec((tn, cp), lambda i: (i, 0)),
        compiler_params=_compiler_params(),
    )(xa, imp_b, s, p['expand'], p['wa'], p['wb'], p['b'])
    return out[:n, :p['cout']], s[:n, 0]


# ---------------------------------------------------------------------------
# SparseConvBlock
# ---------------------------------------------------------------------------
class SparseConvBlockPallas:
    def __init__(self, input_channels, output_channels, normalized_channels=0,
                 *, tile_n=512, key=None):
        if key is None:
            key = jax.random.PRNGKey(42)
        self.input_channels = input_channels
        self.output_channels = output_channels
        self.normalized_channels = normalized_channels
        self.tile_n = tile_n
        K = KERNEL_SIZE

        def init_wb(k, cin, cout):
            wk, bk = jax.random.split(k)
            scale = 1.0 / jnp.sqrt(jnp.float32(K * cin))
            w = jax.random.normal(wk, (K, cin, cout), dtype=jnp.float32) * scale
            b = 0.01 * jax.random.normal(bk, (cout,), dtype=jnp.float32)
            return w, b

        self.convs = {}

        def prep_single(name, cin, cout, norm, idx):
            w, b = init_wb(jax.random.fold_in(key, idx), cin, cout)
            kc = K * cin
            cp = _round_up(cout, _LANE)
            w_pad = jnp.zeros((kc, cp), jnp.bfloat16).at[:, :cout].set(
                w.reshape(kc, cout).astype(jnp.bfloat16))
            b_pad = jnp.zeros((1, cp), jnp.float32).at[:, :cout].set(b[None, :])
            self.convs[name] = dict(kind='norm' if norm else 'plain', w=w_pad, b=b_pad,
                                    cin=cin, cout=cout, cout_pad=cp)

        def prep_split(name, cin, ca, cb, idx):
            # conv1a (plain, ca filters) and conv1b (normalized, cb filters) fused.
            wa, ba = init_wb(jax.random.fold_in(key, idx), cin, ca)
            wb, bb = init_wb(jax.random.fold_in(key, idx + 1), cin, cb)
            kc = K * cin
            cout = ca + cb
            cp = _round_up(cout, _LANE)
            wa_pad = jnp.zeros((kc, cp), jnp.bfloat16).at[:, :ca].set(
                wa.reshape(kc, ca).astype(jnp.bfloat16))
            wb_pad = jnp.zeros((kc, cp), jnp.bfloat16).at[:, ca:cout].set(
                wb.reshape(kc, cb).astype(jnp.bfloat16))
            b_pad = (jnp.zeros((1, cp), jnp.float32)
                     .at[:, :ca].set(ba[None, :])
                     .at[:, ca:cout].set(bb[None, :]))
            # E[k, k*Cin + c] = 1 -> imp @ E repeats imp[k] over the Cin lanes of slot k.
            expand = jnp.zeros((_K_PAD, kc), jnp.bfloat16).at[:K, :].set(
                jnp.repeat(jnp.eye(K, dtype=jnp.float32), cin, axis=1).astype(jnp.bfloat16))
            self.convs[name] = dict(kind='split', wa=wa_pad, wb=wb_pad, b=b_pad,
                                    expand=expand, cin=cin, cout=cout, cout_pad=cp,
                                    ca=ca, cb=cb)

        nc = normalized_channels
        if nc == 'all':
            prep_single('conv1', input_channels, output_channels, True, 0)
            prep_single('conv2', output_channels, output_channels, True, 1)
            prep_single('conv3', output_channels, output_channels, True, 2)
            prep_single('conv4', output_channels, output_channels, True, 3)
        elif nc and nc >= output_channels:
            prep_single('conv1', input_channels, output_channels, True, 0)
            prep_single('conv2', output_channels, output_channels, False, 1)
            prep_single('conv3', output_channels, output_channels, False, 2)
            prep_single('conv4', output_channels, output_channels, False, 3)
        elif nc and nc < output_channels:
            prep_split('conv1', input_channels, output_channels - nc, nc, 0)
            prep_single('conv2', output_channels, output_channels, False, 2)
            prep_single('conv3', output_channels, output_channels, False, 3)
            prep_single('conv4', output_channels, output_channels, False, 4)
        else:
            prep_single('conv1', input_channels, output_channels, False, 0)
            prep_single('conv2', output_channels, output_channels, False, 1)
            prep_single('conv3', output_channels, output_channels, False, 2)
            prep_single('conv4', output_channels, output_channels, False, 3)

    def forward(self, feats, neighbors, importance=None):
        nbr = neighbors['neighbors_index']
        nc = self.normalized_channels
        tn = self.tile_n
        bf = jnp.bfloat16
        f32 = jnp.float32
        if nc == 'all':
            f1, out_imp = sparse_conv_norm(self.convs['conv1'], feats, nbr, importance,
                                           tile_n=tn, out_dtype=bf)
            f2, _ = sparse_conv_norm(self.convs['conv2'], f1, nbr, importance,
                                     tile_n=tn, out_dtype=bf)
            f3, _ = sparse_conv_norm(self.convs['conv3'], f2, nbr, importance,
                                     tile_n=tn, out_dtype=bf)
            f4, _ = sparse_conv_norm(self.convs['conv4'], f3, nbr, importance,
                                     tile_n=tn, out_dtype=f32)
            return f4, out_imp
        elif nc and nc < self.output_channels:
            f1, out_imp = sparse_conv_split(self.convs['conv1'], feats, nbr, importance,
                                            tile_n=tn, out_dtype=bf)
            f2 = sparse_conv_plain(self.convs['conv2'], f1, nbr, tile_n=tn, out_dtype=bf)
            f3 = sparse_conv_plain(self.convs['conv3'], f2, nbr, tile_n=tn, out_dtype=bf)
            f4 = sparse_conv_plain(self.convs['conv4'], f3, nbr, tile_n=tn, out_dtype=f32)
            return f4, out_imp
        elif nc:
            f1, out_imp = sparse_conv_norm(self.convs['conv1'], feats, nbr, importance,
                                           tile_n=tn, out_dtype=bf)
            f2 = sparse_conv_plain(self.convs['conv2'], f1, nbr, tile_n=tn, out_dtype=bf)
            f3 = sparse_conv_plain(self.convs['conv3'], f2, nbr, tile_n=tn, out_dtype=bf)
            f4 = sparse_conv_plain(self.convs['conv4'], f3, nbr, tile_n=tn, out_dtype=f32)
            return f4, out_imp
        else:
            f1 = sparse_conv_plain(self.convs['conv1'], feats, nbr, tile_n=tn, out_dtype=bf)
            f2 = sparse_conv_plain(self.convs['conv2'], f1, nbr, tile_n=tn, out_dtype=bf)
            f3 = sparse_conv_plain(self.convs['conv3'], f2, nbr, tile_n=tn, out_dtype=bf)
            f4 = sparse_conv_plain(self.convs['conv4'], f3, nbr, tile_n=tn, out_dtype=f32)
            return f4


# ---------------------------------------------------------------------------
# Pure-JAX reference (mirrors the same bf16 rounding points) for checking
# ---------------------------------------------------------------------------
def reference_forward(block, feats, nbr, importance=None):
    f32 = jnp.float32
    bf16 = jnp.bfloat16
    n = nbr.shape[0]

    def plain(p, f):
        x = f[nbr].reshape(n, -1).astype(bf16).astype(f32)
        out = jnp.maximum(x @ p['w'].astype(f32) + p['b'], 0.0)
        return out[:, :p['cout']]

    def norm(p, f):
        g = f[nbr].astype(f32)
        imp = importance[nbr].astype(f32)
        s = imp.sum(-1, keepdims=True)
        xw = (g * imp[..., None]).reshape(n, -1).astype(bf16).astype(f32)
        out = jnp.maximum((xw @ p['w'].astype(f32)) / jnp.maximum(s, _EPS) + p['b'], 0.0)
        return out[:, :p['cout']], s[:, 0]

    def split(p, f):
        xa = f[nbr].reshape(n, -1).astype(bf16).astype(f32)
        imp = importance[nbr].astype(f32)
        s = imp.sum(-1, keepdims=True)
        imp_rep = jnp.repeat(imp.astype(bf16).astype(f32), p['cin'], axis=1)
        xw = (xa * imp_rep).astype(bf16).astype(f32)
        acc = xa @ p['wa'].astype(f32) + (xw @ p['wb'].astype(f32)) / jnp.maximum(s, _EPS)
        out = jnp.maximum(acc + p['b'], 0.0)
        return out[:, :p['cout']], s[:, 0]

    nc = block.normalized_channels
    if nc == 'all':
        f1, oi = norm(block.convs['conv1'], feats)
        f2, _ = norm(block.convs['conv2'], f1.astype(bf16))
        f3, _ = norm(block.convs['conv3'], f2.astype(bf16))
        f4, _ = norm(block.convs['conv4'], f3.astype(bf16))
        return f4, oi
    elif nc and nc < block.output_channels:
        f1, oi = split(block.convs['conv1'], feats)
        f2 = plain(block.convs['conv2'], f1.astype(bf16))
        f3 = plain(block.convs['conv3'], f2.astype(bf16))
        f4 = plain(block.convs['conv4'], f3.astype(bf16))
        return f4, oi
    elif nc:
        f1, oi = norm(block.convs['conv1'], feats)
        f2 = plain(block.convs['conv2'], f1.astype(bf16))
        f3 = plain(block.convs['conv3'], f2.astype(bf16))
        f4 = plain(block.convs['conv4'], f3.astype(bf16))
        return f4, oi
    else:
        f1 = plain(block.convs['conv1'], feats)
        f2 = plain(block.convs['conv2'], f1.astype(bf16))
        f3 = plain(block.convs['conv3'], f2.astype(bf16))
        return plain(block.convs['conv4'], f3.astype(bf16))


# ---------------------------------------------------------------------------
# Demo
# ---------------------------------------------------------------------------
if __name__ == "__main__":
    N, CIN, COUT, NORM_C = 64, 4, 32, 8
    K = KERNEL_SIZE

    key = jax.random.PRNGKey(0)
    kf, kn, ki = jax.random.split(key, 3)
    feats = jax.random.normal(kf, (N, CIN), dtype=jnp.float32)
    neighbors = {'neighbors_index': jax.random.randint(kn, (N, K), 0, N, dtype=jnp.int32)}
    importance = jax.random.uniform(ki, (N,), dtype=jnp.float32, minval=0.1, maxval=1.0)

    # Path 1: 0 < normalized_channels < output_channels -> fused conv1a/conv1b split
    # kernel + plain convs (exercises _conv_kernel_split and _conv_kernel_plain).
    block = SparseConvBlockPallas(CIN, COUT, normalized_channels=NORM_C)
    out, out_imp = jax.jit(block.forward)(feats, neighbors, importance)
    jax.block_until_ready((out, out_imp))
    assert out.shape == (N, COUT) and out_imp.shape == (N,)
    ref_out, ref_imp = reference_forward(block, feats, neighbors['neighbors_index'], importance)
    assert float(jnp.max(jnp.abs(out.astype(jnp.float32) - ref_out))) < 1e-1
    assert float(jnp.max(jnp.abs(out_imp - ref_imp))) < 1e-1

    # Path 2: normalized_channels='all' -> normalized kernel on every conv.
    block_all = SparseConvBlockPallas(CIN, 16, normalized_channels='all')
    out2, out_imp2 = jax.jit(block_all.forward)(feats, neighbors, importance)
    jax.block_until_ready((out2, out_imp2))
    assert out2.shape == (N, 16) and out_imp2.shape == (N,)
    ref_out2, ref_imp2 = reference_forward(block_all, feats, neighbors['neighbors_index'], importance)
    assert float(jnp.max(jnp.abs(out2.astype(jnp.float32) - ref_out2))) < 1e-1
    assert float(jnp.max(jnp.abs(out_imp2 - ref_imp2))) < 1e-1

    print("KERNEL_OK")
</pallas_src>

<mosaic_0001>
module attributes {stable_mosaic.version = 11 : i64} {
  func.func @_conv_kernel_split(%arg0: i32, %arg1: memref<128x220xbf16, #tpu.memory_space<vmem>>, %arg2: memref<128x64xbf16, #tpu.memory_space<vmem>>, %arg3: memref<128x1xf32, #tpu.memory_space<vmem>>, %arg4: memref<64x220xbf16, #tpu.memory_space<vmem>>, %arg5: memref<220x128xbf16, #tpu.memory_space<vmem>>, %arg6: memref<220x128xbf16, #tpu.memory_space<vmem>>, %arg7: memref<1x128xf32, #tpu.memory_space<vmem>>, %arg8: memref<128x128xbf16, #tpu.memory_space<vmem>>) attributes {dimension_semantics = [#tpu.dimension_semantics<parallel>], iteration_bounds = array<i64: 1>, scalar_prefetch = 0 : i64, scratch_operands = 0 : i64, tpu.core_type = #tpu.core_type<tc>, window_params = [{transform_indices = @transform_0, window_bounds = array<i64: 128, 220>}, {transform_indices = @transform_1, window_bounds = array<i64: 128, 64>}, {transform_indices = @transform_2, window_bounds = array<i64: 128, 1>}, {pipeline_mode = #tpu.pipeline_mode<synchronous>, transform_indices = @transform_3, window_bounds = array<i64: 64, 220>}, {pipeline_mode = #tpu.pipeline_mode<synchronous>, transform_indices = @transform_4, window_bounds = array<i64: 220, 128>}, {pipeline_mode = #tpu.pipeline_mode<synchronous>, transform_indices = @transform_5, window_bounds = array<i64: 220, 128>}, {pipeline_mode = #tpu.pipeline_mode<synchronous>, transform_indices = @transform_6, window_bounds = array<i64: 1, 128>}, {transform_indices = @transform_7, window_bounds = array<i64: 128, 128>}]} {
    %c0 = arith.constant 0 : index
    %c0_0 = arith.constant 0 : index
    %0 = vector.load %arg1[%c0, %c0_0] : memref<128x220xbf16, #tpu.memory_space<vmem>>, vector<128x220xbf16>
    %c0_1 = arith.constant 0 : index
    %c0_2 = arith.constant 0 : index
    %1 = vector.load %arg2[%c0_1, %c0_2] : memref<128x64xbf16, #tpu.memory_space<vmem>>, vector<128x64xbf16>
    %c0_3 = arith.constant 0 : index
    %c0_4 = arith.constant 0 : index
    %2 = vector.load %arg4[%c0_3, %c0_4] : memref<64x220xbf16, #tpu.memory_space<vmem>>, vector<64x220xbf16>
    %cst = arith.constant dense<0.000000e+00> : vector<128x220xf32>
    %3 = tpu.matmul %1, %2, %cst {dimension_numbers = #tpu.dot_dimension_numbers<[1], [0], [0], [1], [0, 0, 1, 1], [], []>} : vector<128x64xbf16>, vector<64x220xbf16>, vector<128x220xf32> -> vector<128x220xf32>
    %4 = arith.extf %0 : vector<128x220xbf16> to vector<128x220xf32>
    %5 = arith.mulf %4, %3 : vector<128x220xf32>
    %6 = arith.truncf %5 : vector<128x220xf32> to vector<128x220xbf16>
    %c0_5 = arith.constant 0 : index
    %c0_6 = arith.constant 0 : index
    %7 = vector.load %arg5[%c0_5, %c0_6] : memref<220x128xbf16, #tpu.memory_space<vmem>>, vector<220x128xbf16>
    %cst_7 = arith.constant dense<0.000000e+00> : vector<128x128xf32>
    %8 = tpu.matmul %0, %7, %cst_7 {dimension_numbers = #tpu.dot_dimension_numbers<[1], [0], [0], [1], [0, 0, 1, 1], [], []>} : vector<128x220xbf16>, vector<220x128xbf16>, vector<128x128xf32> -> vector<128x128xf32>
    %c0_8 = arith.constant 0 : index
    %c0_9 = arith.constant 0 : index
    %9 = vector.load %arg6[%c0_8, %c0_9] : memref<220x128xbf16, #tpu.memory_space<vmem>>, vector<220x128xbf16>
    %cst_10 = arith.constant dense<0.000000e+00> : vector<128x128xf32>
    %10 = tpu.matmul %6, %9, %cst_10 {dimension_numbers = #tpu.dot_dimension_numbers<[1], [0], [0], [1], [0, 0, 1, 1], [], []>} : vector<128x220xbf16>, vector<220x128xbf16>, vector<128x128xf32> -> vector<128x128xf32>
    %c0_11 = arith.constant 0 : index
    %c0_12 = arith.constant 0 : index
    %11 = vector.load %arg3[%c0_11, %c0_12] : memref<128x1xf32, #tpu.memory_space<vmem>>, vector<128x1xf32>
    %cst_13 = arith.constant 9.99999993E-9 : f32
    %12 = vector.broadcast %cst_13 : f32 to vector<128x1xf32>
    %13 = arith.maximumf %11, %12 : vector<128x1xf32>
    %14 = tpu.reciprocal %13 {approx = true} : vector<128x1xf32> -> vector<128x1xf32>
    %15 = vector.broadcast %14 : vector<128x1xf32> to vector<128x128xf32>
    %16 = arith.mulf %10, %15 : vector<128x128xf32>
    %17 = arith.addf %8, %16 : vector<128x128xf32>
    %c0_14 = arith.constant 0 : index
    %c0_15 = arith.constant 0 : index
    %18 = vector.load %arg7[%c0_14, %c0_15] : memref<1x128xf32, #tpu.memory_space<vmem>>, vector<1x128xf32>
    %19 = vector.broadcast %18 : vector<1x128xf32> to vector<128x128xf32>
    %20 = arith.addf %17, %19 : vector<128x128xf32>
    %cst_16 = arith.constant 0.000000e+00 : f32
    %21 = vector.broadcast %cst_16 : f32 to vector<128x128xf32>
    %22 = arith.maximumf %20, %21 : vector<128x128xf32>
    %23 = arith.truncf %22 : vector<128x128xf32> to vector<128x128xbf16>
    %c0_17 = arith.constant 0 : index
    %c0_18 = arith.constant 0 : index
    %24 = vector.load %arg8[%c0_17, %c0_18] : memref<128x128xbf16, #tpu.memory_space<vmem>>, vector<128x128xbf16>
    tpu.vector_store %arg8[%c0_17, %c0_18], %23 {strides = array<i32>} : memref<128x128xbf16, #tpu.memory_space<vmem>>, vector<128x128xbf16>,
    return
  }
  func.func @transform_0(%arg0: i32) -> (i32, i32) {
    %c0_i32 = arith.constant 0 : i32
    %c0_i32_0 = arith.constant 0 : i32
    return %arg0, %c0_i32 : i32, i32
  }
  func.func @transform_1(%arg0: i32) -> (i32, i32) {
    %c0_i32 = arith.constant 0 : i32
    %c0_i32_0 = arith.constant 0 : i32
    return %arg0, %c0_i32 : i32, i32
  }
  func.func @transform_2(%arg0: i32) -> (i32, i32) {
    %c0_i32 = arith.constant 0 : i32
    %c0_i32_0 = arith.constant 0 : i32
    return %arg0, %c0_i32 : i32, i32
  }
  func.func @transform_3(%arg0: i32) -> (i32, i32) {
    %c0_i32 = arith.constant 0 : i32
    %c0_i32_0 = arith.constant 0 : i32
    %c0_i32_1 = arith.constant 0 : i32
    return %c0_i32, %c0_i32_0 : i32, i32
  }
  func.func @transform_4(%arg0: i32) -> (i32, i32) {
    %c0_i32 = arith.constant 0 : i32
    %c0_i32_0 = arith.constant 0 : i32
    %c0_i32_1 = arith.constant 0 : i32
    return %c0_i32, %c0_i32_0 : i32, i32
  }
  func.func @transform_5(%arg0: i32) -> (i32, i32) {
    %c0_i32 = arith.constant 0 : i32
    %c0_i32_0 = arith.constant 0 : i32
    %c0_i32_1 = arith.constant 0 : i32
    return %c0_i32, %c0_i32_0 : i32, i32
  }
  func.func @transform_6(%arg0: i32) -> (i32, i32) {
    %c0_i32 = arith.constant 0 : i32
    %c0_i32_0 = arith.constant 0 : i32
    %c0_i32_1 = arith.constant 0 : i32
    return %c0_i32, %c0_i32_0 : i32, i32
  }
  func.func @transform_7(%arg0: i32) -> (i32, i32) {
    %c0_i32 = arith.constant 0 : i32
    %c0_i32_0 = arith.constant 0 : i32
    return %arg0, %c0_i32 : i32, i32
  }
}

module attributes {stable_mosaic.version = 11 : i64} {
  func.func @_conv_kernel_plain(%arg0: i32, %arg1: memref<128x1760xbf16, #tpu.memory_space<vmem>>, %arg2: memref<1760x128xbf16, #tpu.memory_space<vmem>>, %arg3: memref<1x128xf32, #tpu.memory_space<vmem>>, %arg4: memref<128x128xbf16, #tpu.memory_space<vmem>>) attributes {dimension_semantics = [#tpu.dimension_semantics<parallel>], iteration_bounds = array<i64: 1>, scalar_prefetch = 0 : i64, scratch_operands = 0 : i64, tpu.core_type = #tpu.core_type<tc>, window_params = [{transform_indices = @transform_0, window_bounds = array<i64: 128, 1760>}, {pipeline_mode = #tpu.pipeline_mode<synchronous>, transform_indices = @transform_1, window_bounds = array<i64: 1760, 128>}, {pipeline_mode = #tpu.pipeline_mode<synchronous>, transform_indices = @transform_2, window_bounds = array<i64: 1, 128>}, {transform_indices = @transform_3, window_bounds = array<i64: 128, 128>}]} {
    %c0 = arith.constant 0 : index
    %c0_0 = arith.constant 0 : index
    %0 = vector.load %arg1[%c0, %c0_0] : memref<128x1760xbf16, #tpu.memory_space<vmem>>, vector<128x1760xbf16>
    %c0_1 = arith.constant 0 : index
    %c0_2 = arith.constant 0 : index
    %1 = vector.load %arg2[%c0_1, %c0_2] : memref<1760x128xbf16, #tpu.memory_space<vmem>>, vector<1760x128xbf16>
    %cst = arith.constant dense<0.000000e+00> : vector<128x128xf32>
    %2 = tpu.matmul %0, %1, %cst {dimension_numbers = #tpu.dot_dimension_numbers<[1], [0], [0], [1], [0, 0, 1, 1], [], []>} : vector<128x1760xbf16>, vector<1760x128xbf16>, vector<128x128xf32> -> vector<128x128xf32>
    %c0_3 = arith.constant 0 : index
    %c0_4 = arith.constant 0 : index
    %3 = vector.load %arg3[%c0_3, %c0_4] : memref<1x128xf32, #tpu.memory_space<vmem>>, vector<1x128xf32>
    %4 = vector.broadcast %3 : vector<1x128xf32> to vector<128x128xf32>
    %5 = arith.addf %2, %4 : vector<128x128xf32>
    %cst_5 = arith.constant 0.000000e+00 : f32
    %6 = vector.broadcast %cst_5 : f32 to vector<128x128xf32>
    %7 = arith.maximumf %5, %6 : vector<128x128xf32>
    %8 = arith.truncf %7 : vector<128x128xf32> to vector<128x128xbf16>
    %c0_6 = arith.constant 0 : index
    %c0_7 = arith.constant 0 : index
    %9 = vector.load %arg4[%c0_6, %c0_7] : memref<128x128xbf16, #tpu.memory_space<vmem>>, vector<128x128xbf16>
    tpu.vector_store %arg4[%c0_6, %c0_7], %8 {strides = array<i32>} : memref<128x128xbf16, #tpu.memory_space<vmem>>, vector<128x128xbf16>,
    return
  }
  func.func @transform_0(%arg0: i32) -> (i32, i32) {
    %c0_i32 = arith.constant 0 : i32
    %c0_i32_0 = arith.constant 0 : i32
    return %arg0, %c0_i32 : i32, i32
  }
  func.func @transform_1(%arg0: i32) -> (i32, i32) {
    %c0_i32 = arith.constant 0 : i32
    %c0_i32_0 = arith.constant 0 : i32
    %c0_i32_1 = arith.constant 0 : i32
    return %c0_i32, %c0_i32_0 : i32, i32
  }
  func.func @transform_2(%arg0: i32) -> (i32, i32) {
    %c0_i32 = arith.constant 0 : i32
    %c0_i32_0 = arith.constant 0 : i32
    %c0_i32_1 = arith.constant 0 : i32
    return %c0_i32, %c0_i32_0 : i32, i32
  }
  func.func @transform_3(%arg0: i32) -> (i32, i32) {
    %c0_i32 = arith.constant 0 : i32
    %c0_i32_0 = arith.constant 0 : i32
    return %arg0, %c0_i32 : i32, i32
  }
}

module attributes {stable_mosaic.version = 11 : i64} {
  func.func @_conv_kernel_plain(%arg0: i32, %arg1: memref<128x1760xbf16, #tpu.memory_space<vmem>>, %arg2: memref<1760x128xbf16, #tpu.memory_space<vmem>>, %arg3: memref<1x128xf32, #tpu.memory_space<vmem>>, %arg4: memref<128x128xf32, #tpu.memory_space<vmem>>) attributes {dimension_semantics = [#tpu.dimension_semantics<parallel>], iteration_bounds = array<i64: 1>, scalar_prefetch = 0 : i64, scratch_operands = 0 : i64, tpu.core_type = #tpu.core_type<tc>, window_params = [{transform_indices = @transform_0, window_bounds = array<i64: 128, 1760>}, {pipeline_mode = #tpu.pipeline_mode<synchronous>, transform_indices = @transform_1, window_bounds = array<i64: 1760, 128>}, {pipeline_mode = #tpu.pipeline_mode<synchronous>, transform_indices = @transform_2, window_bounds = array<i64: 1, 128>}, {transform_indices = @transform_3, window_bounds = array<i64: 128, 128>}]} {
    %c0 = arith.constant 0 : index
    %c0_0 = arith.constant 0 : index
    %0 = vector.load %arg1[%c0, %c0_0] : memref<128x1760xbf16, #tpu.memory_space<vmem>>, vector<128x1760xbf16>
    %c0_1 = arith.constant 0 : index
    %c0_2 = arith.constant 0 : index
    %1 = vector.load %arg2[%c0_1, %c0_2] : memref<1760x128xbf16, #tpu.memory_space<vmem>>, vector<1760x128xbf16>
    %cst = arith.constant dense<0.000000e+00> : vector<128x128xf32>
    %2 = tpu.matmul %0, %1, %cst {dimension_numbers = #tpu.dot_dimension_numbers<[1], [0], [0], [1], [0, 0, 1, 1], [], []>} : vector<128x1760xbf16>, vector<1760x128xbf16>, vector<128x128xf32> -> vector<128x128xf32>
    %c0_3 = arith.constant 0 : index
    %c0_4 = arith.constant 0 : index
    %3 = vector.load %arg3[%c0_3, %c0_4] : memref<1x128xf32, #tpu.memory_space<vmem>>, vector<1x128xf32>
    %4 = vector.broadcast %3 : vector<1x128xf32> to vector<128x128xf32>
    %5 = arith.addf %2, %4 : vector<128x128xf32>
    %cst_5 = arith.constant 0.000000e+00 : f32
    %6 = vector.broadcast %cst_5 : f32 to vector<128x128xf32>
    %7 = arith.maximumf %5, %6 : vector<128x128xf32>
    %c0_6 = arith.constant 0 : index
    %c0_7 = arith.constant 0 : index
    %8 = vector.load %arg4[%c0_6, %c0_7] : memref<128x128xf32, #tpu.memory_space<vmem>>, vector<128x128xf32>
    tpu.vector_store %arg4[%c0_6, %c0_7], %7 {strides = array<i32>} : memref<128x128xf32, #tpu.memory_space<vmem>>, vector<128x128xf32>,
    return
  }
  func.func @transform_0(%arg0: i32) -> (i32, i32) {
    %c0_i32 = arith.constant 0 : i32
    %c0_i32_0 = arith.constant 0 : i32
    return %arg0, %c0_i32 : i32, i32
  }
  func.func @transform_1(%arg0: i32) -> (i32, i32) {
    %c0_i32 = arith.constant 0 : i32
    %c0_i32_0 = arith.constant 0 : i32
    %c0_i32_1 = arith.constant 0 : i32
    return %c0_i32, %c0_i32_0 : i32, i32
  }
  func.func @transform_2(%arg0: i32) -> (i32, i32) {
    %c0_i32 = arith.constant 0 : i32
    %c0_i32_0 = arith.constant 0 : i32
    %c0_i32_1 = arith.constant 0 : i32
    return %c0_i32, %c0_i32_0 : i32, i32
  }
  func.func @transform_3(%arg0: i32) -> (i32, i32) {
    %c0_i32 = arith.constant 0 : i32
    %c0_i32_0 = arith.constant 0 : i32
    return %arg0, %c0_i32 : i32, i32
  }
}

</mosaic_0001>

<llo_original>
// kernel: forward.4
$region0: #{forward.4}
  #allocation0 [shape = 'u32[]', space=smem, size = 0x4, offset = 0x4, fixed_abs, tag = 'smem constant byte address 0x4 - core index']
  #allocation1 [shape = 'u32[72,128]{1,0:T(1,128)}', space=vmem, size = 0x9000, scoped, tag = 'internal scratch']
  %s0 = inlined_call_operand.vmem [shape: bf16[128,220], index: 0, kind: input, shape index: {}]
  %s1 = inlined_call_operand.vmem [shape: bf16[128,64], index: 1, kind: input, shape index: {}]
  %s2 = inlined_call_operand.vmem [shape: f32[128,1], index: 2, kind: input, shape index: {}]
  %s3 = inlined_call_operand.vmem [shape: bf16[64,220], index: 3, kind: input, shape index: {}]
  %s4 = inlined_call_operand.vmem [shape: bf16[220,128], index: 4, kind: input, shape index: {}]
  %s5 = inlined_call_operand.vmem [shape: bf16[220,128], index: 5, kind: input, shape index: {}]
  %s6 = inlined_call_operand.vmem [shape: f32[1,128], index: 6, kind: input, shape index: {}]
  %s7 = inlined_call_operand.vmem [shape: bf16[128,128], index: 7, kind: output, shape index: {}]
  %s8 = sld [smem:[#allocation0]]
  $region38: #{forward.4} parent=0
    _
  %s10 = ssub.s32 1, %s8
  %s11 = scalar_select 0, %s10, %s8
  // Predicated region
  $region2: #{forward.4} parent=0 // pred_check
    _
  $region3: #{forward.4} parent=0 // pred_check_branch
    %13 = sbr.rel (0) target = $region5
  $region4: #{forward.4} parent=0 // pred_region
    _
  $region5: #{forward.4} parent=0 // pred_fallthru
    _
  // Predicated region
  $region6: #{forward.4} parent=0 // pred_check
    _
  $region7: #{forward.4} parent=0 // pred_check_branch
    %15 = sbr.rel (0) target = $region9
  $region8: #{forward.4} parent=0 // pred_region
    _
  $region9: #{forward.4} parent=0 // pred_fallthru
    _
  // Predicated region
  $region10: #{forward.4} parent=0 // pred_check
    _
  $region11: #{forward.4} parent=0 // pred_check_branch
    %17 = sbr.rel (0) target = $region13
  $region12: #{forward.4} parent=0 // pred_region
    _
  $region13: #{forward.4} parent=0 // pred_fallthru
    _
  // Predicated region
  $region14: #{forward.4} parent=0 // pred_check
    _
  $region15: #{forward.4} parent=0 // pred_check_branch
    %19 = sbr.rel (0) target = $region17
  $region16: #{forward.4} parent=0 // pred_region
    _
  $region17: #{forward.4} parent=0 // pred_fallthru
    _
  // Predicated region
  $region18: #{forward.4} parent=0 // pred_check
    _
  $region19: #{forward.4} parent=0 // pred_check_branch
    %21 = sbr.rel (0) target = $region21
  $region20: #{forward.4} parent=0 // pred_region
    _
  $region21: #{forward.4} parent=0 // pred_fallthru
    _
  // Predicated region
  $region22: #{forward.4} parent=0 // pred_check
    _
  $region23: #{forward.4} parent=0 // pred_check_branch
    %23 = sbr.rel (0) target = $region25
  $region24: #{forward.4} parent=0 // pred_region
    _
  $region25: #{forward.4} parent=0 // pred_fallthru
    _
  // Predicated region
  $region26: #{forward.4} parent=0 // pred_check
    _
  $region27: #{forward.4} parent=0 // pred_check_branch
    %25 = sbr.rel (0) target = $region29
  $region28: #{forward.4} parent=0 // pred_region
    _
  $region29: #{forward.4} parent=0 // pred_fallthru
    _
  %v27 = vld [vmem:[%s0] sm:$0xff]
  %v28 = vld [vmem:[%s0 + $0x8] sm:$0xff]
  %v29 = vld [vmem:[%s0 + $0x10] sm:$0xff]
  %v30 = vld [vmem:[%s0 + $0x18] sm:$0xff]
  %v31 = vld [vmem:[%s0 + $0x20] sm:$0xff]
  %v32 = vld [vmem:[%s0 + $0x28] sm:$0xff]
  %v33 = vld [vmem:[%s0 + $0x30] sm:$0xff]
  %v34 = vld [vmem:[%s0 + $0x38] sm:$0xff]
  %v35 = vld [vmem:[%s0 + $0x40] sm:$0xff]
  %v36 = vld [vmem:[%s0 + $0x48] sm:$0xff]
  %v37 = vld [vmem:[%s0 + $0x50] sm:$0xff]
  %v38 = vld [vmem:[%s0 + $0x58] sm:$0xff]
  %v39 = vld [vmem:[%s0 + $0x60] sm:$0xff]
  %v40 = vld [vmem:[%s0 + $0x68] sm:$0xff]
  %v41 = vld [vmem:[%s0 + $0x70] sm:$0xff]
  %v42 = vld [vmem:[%s0 + $0x78] sm:$0xff]
  %v43 = vld [vmem:[%s1] sm:$0xf]
  %v44 = vld [vmem:[%s1 + $0x4] sm:$0xf]
  %v45 = vld [vmem:[%s1 + $0x8] sm:$0xf]
  %v46 = vld [vmem:[%s1 + $0xc] sm:$0xf]
  %v47 = vld [vmem:[%s1 + $0x10] sm:$0xf]
  %v48 = vld [vmem:[%s1 + $0x14] sm:$0xf]
  %v49 = vld [vmem:[%s1 + $0x18] sm:$0xf]
  %v50 = vld [vmem:[%s1 + $0x1c] sm:$0xf]
  %v51 = vld [vmem:[%s1 + $0x20] sm:$0xf]
  %v52 = vld [vmem:[%s1 + $0x24] sm:$0xf]
  %v53 = vld [vmem:[%s1 + $0x28] sm:$0xf]
  %v54 = vld [vmem:[%s1 + $0x2c] sm:$0xf]
  %v55 = vld [vmem:[%s1 + $0x30] sm:$0xf]
  %v56 = vld [vmem:[%s1 + $0x34] sm:$0xf]
  %v57 = vld [vmem:[%s1 + $0x38] sm:$0xf]
  %v58 = vld [vmem:[%s1 + $0x3c] sm:$0xf]
  %v59 = vld [vmem:[%s3] sm:$0xff]
  %v60 = vld [vmem:[%s3 + $0x8] sm:$0xff]
  %v61 = vld [vmem:[%s3 + $0x10] sm:$0xff]
  %v62 = vld [vmem:[%s3 + $0x18] sm:$0xff]
  %v63 = vld [vmem:[%s3 + $0x20] sm:$0xff]
  %v64 = vld [vmem:[%s3 + $0x28] sm:$0xff]
  %v65 = vld [vmem:[%s3 + $0x30] sm:$0xff]
  %v66 = vld [vmem:[%s3 + $0x38] sm:$0xff]
  %v83 = vunpack.c.l.b16 %v43
  %v84 = vunpack.c.l.b16 %v44
  %v85 = vunpack.c.l.b16 %v45
  %v86 = vunpack.c.l.b16 %v46
  %v87 = vunpack.c.l.b16 %v47
  %v88 = vunpack.c.l.b16 %v48
  %v89 = vunpack.c.l.b16 %v49
  %v90 = vunpack.c.l.b16 %v50
  %v91 = vunpack.c.l.b16 %v51
  %v92 = vunpack.c.l.b16 %v52
  %v93 = vunpack.c.l.b16 %v53
  %v94 = vunpack.c.l.b16 %v54
  %v95 = vunpack.c.l.b16 %v55
  %v96 = vunpack.c.l.b16 %v56
  %v97 = vunpack.c.l.b16 %v57
  %v98 = vunpack.c.l.b16 %v58
  %v99 = vpack.c.b16 %v84, %v83
  %v100 = vpack.c.b16 %v86, %v85
  %v101 = vpack.c.b16 %v88, %v87
  %v102 = vpack.c.b16 %v90, %v89
  %v103 = vpack.c.b16 %v92, %v91
  %v104 = vpack.c.b16 %v94, %v93
  %v105 = vpack.c.b16 %v96, %v95
  %v106 = vpack.c.b16 %v98, %v97
  %v115 = vunpack.c.l.b16 %v59
  %v116 = vunpack.c.h.b16 %v59
  %v117 = vunpack.c.l.b16 %v60
  %v118 = vunpack.c.h.b16 %v60
  %v119 = vunpack.c.l.b16 %v61
  %v120 = vunpack.c.h.b16 %v61
  %v121 = vunpack.c.l.b16 %v62
  %v122 = vunpack.c.h.b16 %v62
  %v123 = vunpack.c.l.b16 %v63
  %v124 = vunpack.c.h.b16 %v63
  %v125 = vunpack.c.l.b16 %v64
  %v126 = vunpack.c.h.b16 %v64
  %v127 = vunpack.c.l.b16 %v65
  %v128 = vunpack.c.h.b16 %v65
  %v129 = vunpack.c.l.b16 %v66
  %v130 = vunpack.c.h.b16 %v66
  %v131 = vpack.c.b16 %v117, %v115
  %v132 = vpack.c.b16 %v118, %v116
  %v133 = vpack.c.b16 %v121, %v119
  %v134 = vpack.c.b16 %v122, %v120
  %v135 = vpack.c.b16 %v125, %v123
  %v136 = vpack.c.b16 %v126, %v124
  %v137 = vpack.c.b16 %v129, %v127
  %v138 = vpack.c.b16 %v130, %v128
  %vm147 = vcmask 523264
  %v149 = vsel %vm147, %v99, 0
  %v152 = vsel %vm147, %v100, 0
  %v155 = vsel %vm147, %v101, 0
  %v158 = vsel %vm147, %v102, 0
  %v161 = vsel %vm147, %v103, 0
  %v164 = vsel %vm147, %v104, 0
  %v167 = vsel %vm147, %v105, 0
  %v170 = vsel %vm147, %v106, 0
  %172 = vmatpush.bf16.msra.mxu0 0
  %173 = vmatpush.bf16.msra.mxu0 0
  %174 = vmatpush.bf16.msra.mxu0 0
  %175 = vmatpush.bf16.msra.mxu0 0
  %176 = vmatpush.bf16.msra.mxu0 %v137
  %177 = vmatpush.bf16.msra.mxu0 %v135
  %178 = vmatpush.bf16.msra.mxu0 %v133
  %179 = vmatpush.bf16.msra.mxu0 %v131
  %180 = vmatmul.bf16.gmra.mxu0 %v149
  %v181 = vpop.f32.mrf.mxu0
  %v182 = vadd.f32 0.0, %v181
  %v183 = vpop.f32.mrf.mxu0
  %v184 = vadd.f32 0.0, %v183
  %185 = vmatmul.bf16.gmra.mxu0 %v152
  %v186 = vpop.f32.mrf.mxu0
  %v187 = vadd.f32 0.0, %v186
  %v188 = vpop.f32.mrf.mxu0
  %v189 = vadd.f32 0.0, %v188
  %190 = vmatmul.bf16.gmra.mxu0 %v155
  %v191 = vpop.f32.mrf.mxu0
  %v192 = vadd.f32 0.0, %v191
  %v193 = vpop.f32.mrf.mxu0
  %v194 = vadd.f32 0.0, %v193
  %195 = vmatmul.bf16.gmra.mxu0 %v158
  %v196 = vpop.f32.mrf.mxu0
  %v197 = vadd.f32 0.0, %v196
  %v198 = vpop.f32.mrf.mxu0
  %v199 = vadd.f32 0.0, %v198
  %200 = vmatmul.bf16.gmra.mxu0 %v161
  %v201 = vpop.f32.mrf.mxu0
  %v202 = vadd.f32 0.0, %v201
  %v203 = vpop.f32.mrf.mxu0
  %v204 = vadd.f32 0.0, %v203
  %205 = vmatmul.bf16.gmra.mxu0 %v164
  %v206 = vpop.f32.mrf.mxu0
  %v207 = vadd.f32 0.0, %v206
  %v208 = vpop.f32.mrf.mxu0
  %v209 = vadd.f32 0.0, %v208
  %210 = vmatmul.bf16.gmra.mxu0 %v167
  %v211 = vpop.f32.mrf.mxu0
  %v212 = vadd.f32 0.0, %v211
  %v213 = vpop.f32.mrf.mxu0
  %v214 = vadd.f32 0.0, %v213
  %215 = vmatmul.bf16.gmra.mxu0 %v170
  %v216 = vpop.f32.mrf.mxu0
  %v217 = vadd.f32 0.0, %v216
  %v218 = vpop.f32.mrf.mxu0
  %v219 = vadd.f32 0.0, %v218
  %220 = vdwg.mxu0
  %221 = vmatpush.bf16.msra.mxu0 0
  %222 = vmatpush.bf16.msra.mxu0 0
  %223 = vmatpush.bf16.msra.mxu0 0
  %224 = vmatpush.bf16.msra.mxu0 0
  %225 = vmatpush.bf16.msra.mxu0 %v138
  %226 = vmatpush.bf16.msra.mxu0 %v136
  %227 = vmatpush.bf16.msra.mxu0 %v134
  %228 = vmatpush.bf16.msra.mxu0 %v132
  %229 = vmatmul.bf16.gmra.mxu0 %v149
  %v230 = vpop.f32.mrf.mxu0
  %v231 = vadd.f32 0.0, %v230
  %v232 = vpop.f32.mrf.mxu0
  %v233 = vadd.f32 0.0, %v232
  %234 = vmatmul.bf16.gmra.mxu0 %v152
  %v235 = vpop.f32.mrf.mxu0
  %v236 = vadd.f32 0.0, %v235
  %v237 = vpop.f32.mrf.mxu0
  %v238 = vadd.f32 0.0, %v237
  %239 = vmatmul.bf16.gmra.mxu0 %v155
  %v240 = vpop.f32.mrf.mxu0
  %v241 = vadd.f32 0.0, %v240
  %v242 = vpop.f32.mrf.mxu0
  %v243 = vadd.f32 0.0, %v242
  %244 = vmatmul.bf16.gmra.mxu0 %v158
  %v245 = vpop.f32.mrf.mxu0
  %v246 = vadd.f32 0.0, %v245
  %v247 = vpop.f32.mrf.mxu0
  %v248 = vadd.f32 0.0, %v247
  %249 = vmatmul.bf16.gmra.mxu0 %v161
  %v250 = vpop.f32.mrf.mxu0
  %v251 = vadd.f32 0.0, %v250
  %v252 = vpop.f32.mrf.mxu0
  %v253 = vadd.f32 0.0, %v252
  %254 = vmatmul.bf16.gmra.mxu0 %v164
  %v255 = vpop.f32.mrf.mxu0
  %v256 = vadd.f32 0.0, %v255
  %v257 = vpop.f32.mrf.mxu0
  %v258 = vadd.f32 0.0, %v257
  %259 = vmatmul.bf16.gmra.mxu0 %v167
  %v260 = vpop.f32.mrf.mxu0
  %v261 = vadd.f32 0.0, %v260
  %v262 = vpop.f32.mrf.mxu0
  %v263 = vadd.f32 0.0, %v262
  %264 = vmatmul.bf16.gmra.mxu0 %v170
  %v265 = vpop.f32.mrf.mxu0
  %v266 = vadd.f32 0.0, %v265
  %v267 = vpop.f32.mrf.mxu0
  %v268 = vadd.f32 0.0, %v267
  %269 = vdwg.mxu0
  %v270 = vunpack.c.l.bf16 %v27
  %v271 = vunpack.c.h.bf16 %v27
  %v272 = vunpack.c.l.bf16 %v28
  %v273 = vunpack.c.h.bf16 %v28
  %v274 = vunpack.c.l.bf16 %v29
  %v275 = vunpack.c.h.bf16 %v29
  %v276 = vunpack.c.l.bf16 %v30
  %v277 = vunpack.c.h.bf16 %v30
  %v278 = vunpack.c.l.bf16 %v31
  %v279 = vunpack.c.h.bf16 %v31
  %v280 = vunpack.c.l.bf16 %v32
  %v281 = vunpack.c.h.bf16 %v32
  %v282 = vunpack.c.l.bf16 %v33
  %v283 = vunpack.c.h.bf16 %v33
  %v284 = vunpack.c.l.bf16 %v34
  %v285 = vunpack.c.h.bf16 %v34
  %v286 = vunpack.c.l.bf16 %v35
  %v287 = vunpack.c.h.bf16 %v35
  %v288 = vunpack.c.l.bf16 %v36
  %v289 = vunpack.c.h.bf16 %v36
  %v290 = vunpack.c.l.bf16 %v37
  %v291 = vunpack.c.h.bf16 %v37
  %v292 = vunpack.c.l.bf16 %v38
  %v293 = vunpack.c.h.bf16 %v38
  %v294 = vunpack.c.l.bf16 %v39
  %v295 = vunpack.c.h.bf16 %v39
  %v296 = vunpack.c.l.bf16 %v40
  %v297 = vunpack.c.h.bf16 %v40
  %v298 = vunpack.c.l.bf16 %v41
  %v299 = vunpack.c.h.bf16 %v41
  %v300 = vunpack.c.l.bf16 %v42
  %v301 = vunpack.c.h.bf16 %v42
  %v302 = vmul.f32 %v270, %v182
  %v303 = vmul.f32 %v271, %v231
  %v304 = vmul.f32 %v272, %v184
  %v305 = vmul.f32 %v273, %v233
  %v306 = vmul.f32 %v274, %v187
  %v307 = vmul.f32 %v275, %v236
  %v308 = vmul.f32 %v276, %v189
  %v309 = vmul.f32 %v277, %v238
  %v310 = vmul.f32 %v278, %v192
  %v311 = vmul.f32 %v279, %v241
  %v312 = vmul.f32 %v280, %v194
  %v313 = vmul.f32 %v281, %v243
  %v314 = vmul.f32 %v282, %v197
  %v315 = vmul.f32 %v283, %v246
  %v316 = vmul.f32 %v284, %v199
  %v317 = vmul.f32 %v285, %v248
  %v318 = vmul.f32 %v286, %v202
  %v319 = vmul.f32 %v287, %v251
  %v320 = vmul.f32 %v288, %v204
  %v321 = vmul.f32 %v289, %v253
  %v322 = vmul.f32 %v290, %v207
  %v323 = vmul.f32 %v291, %v256
  %v324 = vmul.f32 %v292, %v209
  %v325 = vmul.f32 %v293, %v258
  %v326 = vmul.f32 %v294, %v212
  %v327 = vmul.f32 %v295, %v261
  %v328 = vmul.f32 %v296, %v214
  %v329 = vmul.f32 %v297, %v263
  %v330 = vmul.f32 %v298, %v217
  %v331 = vmul.f32 %v299, %v266
  %v332 = vmul.f32 %v300, %v219
  %v333 = vmul.f32 %v301, %v268
  %v334 = vpack.c.bf16 %v304, %v302
  %v335 = vpack.c.bf16 %v305, %v303
  %v336 = vpack.c.bf16 %v308, %v306
  %v337 = vpack.c.bf16 %v309, %v307
  %v338 = vpack.c.bf16 %v312, %v310
  %v339 = vpack.c.bf16 %v313, %v311
  %v340 = vpack.c.bf16 %v316, %v314
  %v341 = vpack.c.bf16 %v317, %v315
  %v342 = vpack.c.bf16 %v320, %v318
  %v343 = vpack.c.bf16 %v321, %v319
  %v344 = vpack.c.bf16 %v324, %v322
  %v345 = vpack.c.bf16 %v325, %v323
  %v346 = vpack.c.bf16 %v328, %v326
  %v347 = vpack.c.bf16 %v329, %v327
  %v348 = vpack.c.bf16 %v332, %v330
  %v349 = vpack.c.bf16 %v333, %v331
  %v350 = vld [vmem:[%s4] sm:$0xf]
  %v351 = vld [vmem:[%s4 + $0x4] sm:$0xf]
  %v352 = vld [vmem:[%s4 + $0x8] sm:$0xf]
  %v353 = vld [vmem:[%s4 + $0xc] sm:$0xf]
  %v354 = vld [vmem:[%s4 + $0x10] sm:$0xf]
  %v355 = vld [vmem:[%s4 + $0x14] sm:$0xf]
  %v356 = vld [vmem:[%s4 + $0x18] sm:$0xf]
  %v357 = vld [vmem:[%s4 + $0x1c] sm:$0xf]
  %v358 = vld [vmem:[%s4 + $0x20] sm:$0xf]
  %v359 = vld [vmem:[%s4 + $0x24] sm:$0xf]
  %v360 = vld [vmem:[%s4 + $0x28] sm:$0xf]
  %v361 = vld [vmem:[%s4 + $0x2c] sm:$0xf]
  %v362 = vld [vmem:[%s4 + $0x30] sm:$0xf]
  %v363 = vld [vmem:[%s4 + $0x34] sm:$0xf]
  %v364 = vld [vmem:[%s4 + $0x38] sm:$0xf]
  %v365 = vld [vmem:[%s4 + $0x3c] sm:$0xf]
  %v366 = vld [vmem:[%s4 + $0x40] sm:$0xf]
  %v367 = vld [vmem:[%s4 + $0x44] sm:$0xf]
  %v368 = vld [vmem:[%s4 + $0x48] sm:$0xf]
  %v369 = vld [vmem:[%s4 + $0x4c] sm:$0xf]
  %v370 = vld [vmem:[%s4 + $0x50] sm:$0xf]
  %v371 = vld [vmem:[%s4 + $0x54] sm:$0xf]
  %v372 = vld [vmem:[%s4 + $0x58] sm:$0xf]
  %v373 = vld [vmem:[%s4 + $0x5c] sm:$0xf]
  %v374 = vld [vmem:[%s4 + $0x60] sm:$0xf]
  %v375 = vld [vmem:[%s4 + $0x64] sm:$0xf]
  %v376 = vld [vmem:[%s4 + $0x68] sm:$0xf]
  %v377 = vld [vmem:[%s4 + $0x6c] sm:$0x3]
  %v378 = vld [vmem:[%s5] sm:$0xf]
  %v379 = vld [vmem:[%s5 + $0x4] sm:$0xf]
  %v380 = vld [vmem:[%s5 + $0x8] sm:$0xf]
  %v381 = vld [vmem:[%s5 + $0xc] sm:$0xf]
  %v382 = vld [vmem:[%s5 + $0x10] sm:$0xf]
  %v383 = vld [vmem:[%s5 + $0x14] sm:$0xf]
  %v384 = vld [vmem:[%s5 + $0x18] sm:$0xf]
  %v385 = vld [vmem:[%s5 + $0x1c] sm:$0xf]
  %v386 = vld [vmem:[%s5 + $0x20] sm:$0xf]
  %v387 = vld [vmem:[%s5 + $0x24] sm:$0xf]
  %v388 = vld [vmem:[%s5 + $0x28] sm:$0xf]
  %v389 = vld [vmem:[%s5 + $0x2c] sm:$0xf]
  %v390 = vld [vmem:[%s5 + $0x30] sm:$0xf]
  %v391 = vld [vmem:[%s5 + $0x34] sm:$0xf]
  %v392 = vld [vmem:[%s5 + $0x38] sm:$0xf]
  %v393 = vld [vmem:[%s5 + $0x3c] sm:$0xf]
  %v394 = vld [vmem:[%s5 + $0x40] sm:$0xf]
  %v395 = vld [vmem:[%s5 + $0x44] sm:$0xf]
  %v396 = vld [vmem:[%s5 + $0x48] sm:$0xf]
  %v397 = vld [vmem:[%s5 + $0x4c] sm:$0xf]
  %v398 = vld [vmem:[%s5 + $0x50] sm:$0xf]
  %v399 = vld [vmem:[%s5 + $0x54] sm:$0xf]
  %v400 = vld [vmem:[%s5 + $0x58] sm:$0xf]
  %v401 = vld [vmem:[%s5 + $0x5c] sm:$0xf]
  %v402 = vld [vmem:[%s5 + $0x60] sm:$0xf]
  %v403 = vld [vmem:[%s5 + $0x64] sm:$0xf]
  %v404 = vld [vmem:[%s5 + $0x68] sm:$0xf]
  %v405 = vld [vmem:[%s5 + $0x6c] sm:$0x3]
  %v434 = vunpack.c.l.b16 %v378
  %v435 = vunpack.c.l.b16 %v379
  %v436 = vunpack.c.l.b16 %v380
  %v437 = vunpack.c.l.b16 %v381
  %v438 = vunpack.c.l.b16 %v382
  %v439 = vunpack.c.l.b16 %v383
  %v440 = vunpack.c.l.b16 %v384
  %v441 = vunpack.c.l.b16 %v385
  %v442 = vunpack.c.l.b16 %v386
  %v443 = vunpack.c.l.b16 %v387
  %v444 = vunpack.c.l.b16 %v388
  %v445 = vunpack.c.l.b16 %v389
  %v446 = vunpack.c.l.b16 %v390
  %v447 = vunpack.c.l.b16 %v391
  %v448 = vunpack.c.l.b16 %v392
  %v449 = vunpack.c.l.b16 %v393
  %v450 = vunpack.c.l.b16 %v394
  %v451 = vunpack.c.l.b16 %v395
  %v452 = vunpack.c.l.b16 %v396
  %v453 = vunpack.c.l.b16 %v397
  %v454 = vunpack.c.l.b16 %v398
  %v455 = vunpack.c.l.b16 %v399
  %v456 = vunpack.c.l.b16 %v400
  %v457 = vunpack.c.l.b16 %v401
  %v458 = vunpack.c.l.b16 %v402
  %v459 = vunpack.c.l.b16 %v403
  %v460 = vunpack.c.l.b16 %v404
  %v461 = vunpack.c.l.b16 %v405
  %v462 = vpack.c.b16 %v435, %v434
  %v463 = vpack.c.b16 %v437, %v436
  %v464 = vpack.c.b16 %v439, %v438
  %v465 = vpack.c.b16 %v441, %v440
  %v466 = vpack.c.b16 %v443, %v442
  %v467 = vpack.c.b16 %v445, %v444
  %v468 = vpack.c.b16 %v447, %v446
  %v469 = vpack.c.b16 %v449, %v448
  %v470 = vpack.c.b16 %v451, %v450
  %v471 = vpack.c.b16 %v453, %v452
  %v472 = vpack.c.b16 %v455, %v454
  %v473 = vpack.c.b16 %v457, %v456
  %v474 = vpack.c.b16 %v459, %v458
  %v475 = vpack.c.b16 %v461, %v460
  %vm489 = vcmask 752640
  %v491 = vsel %vm489, %v335, 0
  %v494 = vsel %vm489, %v337, 0
  %v497 = vsel %vm489, %v339, 0
  %v500 = vsel %vm489, %v341, 0
  %v503 = vsel %vm489, %v343, 0
  %v506 = vsel %vm489, %v345, 0
  %v509 = vsel %vm489, %v347, 0
  %v512 = vsel %vm489, %v349, 0
  %vm514 = vcmask 1045504
  %v516 = vsel %vm514, %v475, 0
  %518 = vmatpush.bf16.msra.mxu0 %v469
  %519 = vmatpush.bf16.msra.mxu0 %v468
  %520 = vmatpush.bf16.msra.mxu0 %v467
  %521 = vmatpush.bf16.msra.mxu0 %v466
  %522 = vmatpush.bf16.msra.mxu0 %v465
  %523 = vmatpush.bf16.msra.mxu0 %v464
  %524 = vmatpush.bf16.msra.mxu0 %v463
  %525 = vmatpush.bf16.msra.mxu0 %v462
  %526 = vmatmul.bf16.gmra.mxu0 %v334
  %v527 = vpop.f32.mrf.mxu0
  %v528 = vadd.f32 0.0, %v527
  %v529 = vpop.f32.mrf.mxu0
  %v530 = vadd.f32 0.0, %v529
  %531 = vmatmul.bf16.gmra.mxu0 %v336
  %v532 = vpop.f32.mrf.mxu0
  %v533 = vadd.f32 0.0, %v532
  %v534 = vpop.f32.mrf.mxu0
  %v535 = vadd.f32 0.0, %v534
  %536 = vmatmul.bf16.gmra.mxu0 %v338
  %v537 = vpop.f32.mrf.mxu0
  %v538 = vadd.f32 0.0, %v537
  %v539 = vpop.f32.mrf.mxu0
  %v540 = vadd.f32 0.0, %v539
  %541 = vmatmul.bf16.gmra.mxu0 %v340
  %v542 = vpop.f32.mrf.mxu0
  %v543 = vadd.f32 0.0, %v542
  %v544 = vpop.f32.mrf.mxu0
  %v545 = vadd.f32 0.0, %v544
  %546 = vmatmul.bf16.gmra.mxu0 %v342
  %v547 = vpop.f32.mrf.mxu0
  %v548 = vadd.f32 0.0, %v547
  %v549 = vpop.f32.mrf.mxu0
  %v550 = vadd.f32 0.0, %v549
  %551 = vmatmul.bf16.gmra.mxu0 %v344
  %v552 = vpop.f32.mrf.mxu0
  %v553 = vadd.f32 0.0, %v552
  %v554 = vpop.f32.mrf.mxu0
  %v555 = vadd.f32 0.0, %v554
  %556 = vmatmul.bf16.gmra.mxu0 %v346
  %v557 = vpop.f32.mrf.mxu0
  %v558 = vadd.f32 0.0, %v557
  %v559 = vpop.f32.mrf.mxu0
  %v560 = vadd.f32 0.0, %v559
  %561 = vmatmul.bf16.gmra.mxu0 %v348
  %v562 = vpop.f32.mrf.mxu0
  %v563 = vadd.f32 0.0, %v562
  %v564 = vpop.f32.mrf.mxu0
  %v565 = vadd.f32 0.0, %v564
  %566 = vdwg.mxu0
  %567 = vmatpush.bf16.msra.mxu0 0
  %568 = vmatpush.bf16.msra.mxu0 0
  %569 = vmatpush.bf16.msra.mxu0 %v516
  %570 = vmatpush.bf16.msra.mxu0 %v474
  %571 = vmatpush.bf16.msra.mxu0 %v473
  %572 = vmatpush.bf16.msra.mxu0 %v472
  %573 = vmatpush.bf16.msra.mxu0 %v471
  %574 = vmatpush.bf16.msra.mxu0 %v470
  %575 = vmatmul.bf16.gmra.mxu0 %v491
  %v576 = vpop.f32.mrf.mxu0
  %v577 = vadd.f32 %v528, %v576
  %v578 = vpop.f32.mrf.mxu0
  %v579 = vadd.f32 %v530, %v578
  %580 = vmatmul.bf16.gmra.mxu0 %v494
  %v581 = vpop.f32.mrf.mxu0
  %v582 = vadd.f32 %v533, %v581
  %v583 = vpop.f32.mrf.mxu0
  %v584 = vadd.f32 %v535, %v583
  %585 = vmatmul.bf16.gmra.mxu0 %v497
  %v586 = vpop.f32.mrf.mxu0
  %v587 = vadd.f32 %v538, %v586
  %v588 = vpop.f32.mrf.mxu0
  %v589 = vadd.f32 %v540, %v588
  %590 = vmatmul.bf16.gmra.mxu0 %v500
  %v591 = vpop.f32.mrf.mxu0
  %v592 = vadd.f32 %v543, %v591
  %v593 = vpop.f32.mrf.mxu0
  %v594 = vadd.f32 %v545, %v593
  %595 = vmatmul.bf16.gmra.mxu0 %v503
  %v596 = vpop.f32.mrf.mxu0
  %v597 = vadd.f32 %v548, %v596
  %v598 = vpop.f32.mrf.mxu0
  %v599 = vadd.f32 %v550, %v598
  %600 = vmatmul.bf16.gmra.mxu0 %v506
  %v601 = vpop.f32.mrf.mxu0
  %v602 = vadd.f32 %v553, %v601
  %v603 = vpop.f32.mrf.mxu0
  %v604 = vadd.f32 %v555, %v603
  %605 = vmatmul.bf16.gmra.mxu0 %v509
  %v606 = vpop.f32.mrf.mxu0
  %v607 = vadd.f32 %v558, %v606
  %v608 = vpop.f32.mrf.mxu0
  %v609 = vadd.f32 %v560, %v608
  %610 = vmatmul.bf16.gmra.mxu0 %v512
  %v611 = vpop.f32.mrf.mxu0
  %v612 = vadd.f32 %v563, %v611
  %v613 = vpop.f32.mrf.mxu0
  %v614 = vadd.f32 %v565, %v613
  %615 = vdwg.mxu0
  %v616 = vld [vmem:[%s2] sm:$0xff]
  %v617 = vld [vmem:[%s2 + $0x8] sm:$0xff]
  %v618 = vld [vmem:[%s2 + $0x10] sm:$0xff]
  %v619 = vld [vmem:[%s2 + $0x18] sm:$0xff]
  %v620 = vld [vmem:[%s2 + $0x20] sm:$0xff]
  %v621 = vld [vmem:[%s2 + $0x28] sm:$0xff]
  %v622 = vld [vmem:[%s2 + $0x30] sm:$0xff]
  %v623 = vld [vmem:[%s2 + $0x38] sm:$0xff]
  %v624 = vld [vmem:[%s2 + $0x40] sm:$0xff]
  %v625 = vld [vmem:[%s2 + $0x48] sm:$0xff]
  %v626 = vld [vmem:[%s2 + $0x50] sm:$0xff]
  %v627 = vld [vmem:[%s2 + $0x58] sm:$0xff]
  %v628 = vld [vmem:[%s2 + $0x60] sm:$0xff]
  %v629 = vld [vmem:[%s2 + $0x68] sm:$0xff]
  %v630 = vld [vmem:[%s2 + $0x70] sm:$0xff]
  %v631 = vld [vmem:[%s2 + $0x78] sm:$0xff]
  %v632 = vmax.f32 %v616, 1e-08
  %v633 = vmax.f32 %v617, 1e-08
  %v634 = vmax.f32 %v618, 1e-08
  %v635 = vmax.f32 %v619, 1e-08
  %v636 = vmax.f32 %v620, 1e-08
  %v637 = vmax.f32 %v621, 1e-08
  %v638 = vmax.f32 %v622, 1e-08
  %v639 = vmax.f32 %v623, 1e-08
  %v640 = vmax.f32 %v624, 1e-08
  %v641 = vmax.f32 %v625, 1e-08
  %v642 = vmax.f32 %v626, 1e-08
  %v643 = vmax.f32 %v627, 1e-08
  %v644 = vmax.f32 %v628, 1e-08
  %v645 = vmax.f32 %v629, 1e-08
  %v646 = vmax.f32 %v630, 1e-08
  %v647 = vmax.f32 %v631, 1e-08
  %v648 = vrcp.pop %v632
  %v649 = vrcp.pop %v633
  %v650 = vrcp.pop %v634
  %v651 = vrcp.pop %v635
  %v652 = vrcp.pop %v636
  %v653 = vrcp.pop %v637
  %v654 = vrcp.pop %v638
  %v655 = vrcp.pop %v639
  %v656 = vrcp.pop %v640
  %v657 = vrcp.pop %v641
  %v658 = vrcp.pop %v642
  %v659 = vrcp.pop %v643
  %v660 = vrcp.pop %v644
  %v661 = vrcp.pop %v645
  %v662 = vrcp.pop %v646
  %v663 = vrcp.pop %v647
  %665 = vset.pattern.permute.xlu0 0
  %666 = vperm.xlu0 %665, %v648
  %v667 = vpop.permute.xlu0 %666
  %670 = vset.pattern.permute.xlu0 0
  %671 = vperm.xlu0 %670, %v649
  %v672 = vpop.permute.xlu0 %671
  %675 = vset.pattern.permute.xlu0 0
  %676 = vperm.xlu0 %675, %v650
  %v677 = vpop.permute.xlu0 %676
  %680 = vset.pattern.permute.xlu0 0
  %681 = vperm.xlu0 %680, %v651
  %v682 = vpop.permute.xlu0 %681
  %685 = vset.pattern.permute.xlu0 0
  %686 = vperm.xlu0 %685, %v652
  %v687 = vpop.permute.xlu0 %686
  %690 = vset.pattern.permute.xlu0 0
  %691 = vperm.xlu0 %690, %v653
  %v692 = vpop.permute.xlu0 %691
  %695 = vset.pattern.permute.xlu0 0
  %696 = vperm.xlu0 %695, %v654
  %v697 = vpop.permute.xlu0 %696
  %700 = vset.pattern.permute.xlu0 0
  %701 = vperm.xlu0 %700, %v655
  %v702 = vpop.permute.xlu0 %701
  %705 = vset.pattern.permute.xlu0 0
  %706 = vperm.xlu0 %705, %v656
  %v707 = vpop.permute.xlu0 %706
  %710 = vset.pattern.permute.xlu0 0
  %711 = vperm.xlu0 %710, %v657
  %v712 = vpop.permute.xlu0 %711
  %715 = vset.pattern.permute.xlu0 0
  %716 = vperm.xlu0 %715, %v658
  %v717 = vpop.permute.xlu0 %716
  %720 = vset.pattern.permute.xlu0 0
  %721 = vperm.xlu0 %720, %v659
  %v722 = vpop.permute.xlu0 %721
  %725 = vset.pattern.permute.xlu0 0
  %726 = vperm.xlu0 %725, %v660
  %v727 = vpop.permute.xlu0 %726
  %730 = vset.pattern.permute.xlu0 0
  %731 = vperm.xlu0 %730, %v661
  %v732 = vpop.permute.xlu0 %731
  %735 = vset.pattern.permute.xlu0 0
  %736 = vperm.xlu0 %735, %v662
  %v737 = vpop.permute.xlu0 %736
  %740 = vset.pattern.permute.xlu0 0
  %741 = vperm.xlu0 %740, %v663
  %v742 = vpop.permute.xlu0 %741
  %v744 = vmul.f32 %v577, %v667
  %v745 = vmul.f32 %v579, %v672
  %v746 = vmul.f32 %v582, %v677
  %v747 = vmul.f32 %v584, %v682
  %v748 = vmul.f32 %v587, %v687
  %v749 = vmul.f32 %v589, %v692
  %v750 = vmul.f32 %v592, %v697
  %v751 = vmul.f32 %v594, %v702
  %v752 = vmul.f32 %v597, %v707
  %v753 = vmul.f32 %v599, %v712
  %v754 = vmul.f32 %v602, %v717
  %v755 = vmul.f32 %v604, %v722
  %v756 = vmul.f32 %v607, %v727
  %v757 = vmul.f32 %v609, %v732
  %v758 = vmul.f32 %v612, %v737
  %v759 = vmul.f32 %v614, %v742
  %v776 = vunpack.c.l.b16 %v27
  %v777 = vunpack.c.h.b16 %v27
  %v778 = vunpack.c.l.b16 %v28
  %v779 = vunpack.c.h.b16 %v28
  %v780 = vunpack.c.l.b16 %v29
  %v781 = vunpack.c.h.b16 %v29
  %v782 = vunpack.c.l.b16 %v30
  %v783 = vunpack.c.h.b16 %v30
  %v784 = vunpack.c.l.b16 %v31
  %v785 = vunpack.c.h.b16 %v31
  %v786 = vunpack.c.l.b16 %v32
  %v787 = vunpack.c.h.b16 %v32
  %v788 = vunpack.c.l.b16 %v33
  %v789 = vunpack.c.h.b16 %v33
  %v790 = vunpack.c.l.b16 %v34
  %v791 = vunpack.c.h.b16 %v34
  %v792 = vunpack.c.l.b16 %v35
  %v793 = vunpack.c.h.b16 %v35
  %v794 = vunpack.c.l.b16 %v36
  %v795 = vunpack.c.h.b16 %v36
  %v796 = vunpack.c.l.b16 %v37
  %v797 = vunpack.c.h.b16 %v37
  %v798 = vunpack.c.l.b16 %v38
  %v799 = vunpack.c.h.b16 %v38
  %v800 = vunpack.c.l.b16 %v39
  %v801 = vunpack.c.h.b16 %v39
  %v802 = vunpack.c.l.b16 %v40
  %v803 = vunpack.c.h.b16 %v40
  %v804 = vunpack.c.l.b16 %v41
  %v805 = vunpack.c.h.b16 %v41
  %v806 = vunpack.c.l.b16 %v42
  %v807 = vunpack.c.h.b16 %v42
  %v808 = vpack.c.b16 %v778, %v776
  %v809 = vpack.c.b16 %v779, %v777
  %v810 = vpack.c.b16 %v782, %v780
  %v811 = vpack.c.b16 %v783, %v781
  %v812 = vpack.c.b16 %v786, %v784
  %v813 = vpack.c.b16 %v787, %v785
  %v814 = vpack.c.b16 %v790, %v788
  %v815 = vpack.c.b16 %v791, %v789
  %v816 = vpack.c.b16 %v794, %v792
  %v817 = vpack.c.b16 %v795, %v793
  %v818 = vpack.c.b16 %v798, %v796
  %v819 = vpack.c.b16 %v799, %v797
  %v820 = vpack.c.b16 %v802, %v800
  %v821 = vpack.c.b16 %v803, %v801
  %v822 = vpack.c.b16 %v806, %v804
  %v823 = vpack.c.b16 %v807, %v805
  %v860 = vunpack.c.l.b16 %v350
  %v861 = vunpack.c.l.b16 %v351
  %v862 = vunpack.c.l.b16 %v352
  %v863 = vunpack.c.l.b16 %v353
  %v864 = vunpack.c.l.b16 %v354
  %v865 = vunpack.c.l.b16 %v355
  %v866 = vunpack.c.l.b16 %v356
  %v867 = vunpack.c.l.b16 %v357
  %v868 = vunpack.c.l.b16 %v358
  %v869 = vunpack.c.l.b16 %v359
  %v870 = vunpack.c.l.b16 %v360
  %v871 = vunpack.c.l.b16 %v361
  %v872 = vunpack.c.l.b16 %v362
  %v873 = vunpack.c.l.b16 %v363
  %v874 = vunpack.c.l.b16 %v364
  %v875 = vunpack.c.l.b16 %v365
  %v876 = vunpack.c.l.b16 %v366
  %v877 = vunpack.c.l.b16 %v367
  %v878 = vunpack.c.l.b16 %v368
  %v879 = vunpack.c.l.b16 %v369
  %v880 = vunpack.c.l.b16 %v370
  %v881 = vunpack.c.l.b16 %v371
  %v882 = vunpack.c.l.b16 %v372
  %v883 = vunpack.c.l.b16 %v373
  %v884 = vunpack.c.l.b16 %v374
  %v885 = vunpack.c.l.b16 %v375
  %v886 = vunpack.c.l.b16 %v376
  %v887 = vunpack.c.l.b16 %v377
  %v888 = vpack.c.b16 %v861, %v860
  %v889 = vpack.c.b16 %v863, %v862
  %v890 = vpack.c.b16 %v865, %v864
  %v891 = vpack.c.b16 %v867, %v866
  %v892 = vpack.c.b16 %v869, %v868
  %v893 = vpack.c.b16 %v871, %v870
  %v894 = vpack.c.b16 %v873, %v872
  %v895 = vpack.c.b16 %v875, %v874
  %v896 = vpack.c.b16 %v877, %v876
  %v897 = vpack.c.b16 %v879, %v878
  %v898 = vpack.c.b16 %v881, %v880
  %v899 = vpack.c.b16 %v883, %v882
  %v900 = vpack.c.b16 %v885, %v884
  %v901 = vpack.c.b16 %v887, %v886
  %v916 = vsel %vm489, %v809, 0
  %v919 = vsel %vm489, %v811, 0
  %v922 = vsel %vm489, %v813, 0
  %v925 = vsel %vm489, %v815, 0
  %v928 = vsel %vm489, %v817, 0
  %v931 = vsel %vm489, %v819, 0
  %v934 = vsel %vm489, %v821, 0
  %v937 = vsel %vm489, %v823, 0
  %v940 = vsel %vm514, %v901, 0
  %942 = vmatpush.bf16.msra.mxu0 %v895
  %943 = vmatpush.bf16.msra.mxu0 %v894
  %944 = vmatpush.bf16.msra.mxu0 %v893
  %945 = vmatpush.bf16.msra.mxu0 %v892
  %946 = vmatpush.bf16.msra.mxu0 %v891
  %947 = vmatpush.bf16.msra.mxu0 %v890
  %948 = vmatpush.bf16.msra.mxu0 %v889
  %949 = vmatpush.bf16.msra.mxu0 %v888
  %950 = vmatmul.bf16.gmra.mxu0 %v808
  %v951 = vpop.f32.mrf.mxu0
  %v952 = vadd.f32 %v744, %v951
  %v953 = vpop.f32.mrf.mxu0
  %v954 = vadd.f32 %v745, %v953
  %955 = vmatmul.bf16.gmra.mxu0 %v810
  %v956 = vpop.f32.mrf.mxu0
  %v957 = vadd.f32 %v746, %v956
  %v958 = vpop.f32.mrf.mxu0
  %v959 = vadd.f32 %v747, %v958
  %960 = vmatmul.bf16.gmra.mxu0 %v812
  %v961 = vpop.f32.mrf.mxu0
  %v962 = vadd.f32 %v748, %v961
  %v963 = vpop.f32.mrf.mxu0
  %v964 = vadd.f32 %v749, %v963
  %965 = vmatmul.bf16.gmra.mxu0 %v814
  %v966 = vpop.f32.mrf.mxu0
  %v967 = vadd.f32 %v750, %v966
  %v968 = vpop.f32.mrf.mxu0
  %v969 = vadd.f32 %v751, %v968
  %970 = vmatmul.bf16.gmra.mxu0 %v816
  %v971 = vpop.f32.mrf.mxu0
  %v972 = vadd.f32 %v752, %v971
  %v973 = vpop.f32.mrf.mxu0
  %v974 = vadd.f32 %v753, %v973
  %975 = vmatmul.bf16.gmra.mxu0 %v818
  %v976 = vpop.f32.mrf.mxu0
  %v977 = vadd.f32 %v754, %v976
  %v978 = vpop.f32.mrf.mxu0
  %v979 = vadd.f32 %v755, %v978
  %980 = vmatmul.bf16.gmra.mxu0 %v820
  %v981 = vpop.f32.mrf.mxu0
  %v982 = vadd.f32 %v756, %v981
  %v983 = vpop.f32.mrf.mxu0
  %v984 = vadd.f32 %v757, %v983
  %985 = vmatmul.bf16.gmra.mxu0 %v822
  %v986 = vpop.f32.mrf.mxu0
  %v987 = vadd.f32 %v758, %v986
  %v988 = vpop.f32.mrf.mxu0
  %v989 = vadd.f32 %v759, %v988
  %990 = vdwg.mxu0
  %991 = vmatpush.bf16.msra.mxu0 0
  %992 = vmatpush.bf16.msra.mxu0 0
  %993 = vmatpush.bf16.msra.mxu0 %v940
  %994 = vmatpush.bf16.msra.mxu0 %v900
  %995 = vmatpush.bf16.msra.mxu0 %v899
  %996 = vmatpush.bf16.msra.mxu0 %v898
  %997 = vmatpush.bf16.msra.mxu0 %v897
  %998 = vmatpush.bf16.msra.mxu0 %v896
  %999 = vmatmul.bf16.gmra.mxu0 %v916
  %v1000 = vpop.f32.mrf.mxu0
  %v1001 = vadd.f32 %v952, %v1000
  %v1002 = vpop.f32.mrf.mxu0
  %v1003 = vadd.f32 %v954, %v1002
  %1004 = vmatmul.bf16.gmra.mxu0 %v919
  %v1005 = vpop.f32.mrf.mxu0
  %v1006 = vadd.f32 %v957, %v1005
  %v1007 = vpop.f32.mrf.mxu0
  %v1008 = vadd.f32 %v959, %v1007
  %1009 = vmatmul.bf16.gmra.mxu0 %v922
  %v1010 = vpop.f32.mrf.mxu0
  %v1011 = vadd.f32 %v962, %v1010
  %v1012 = vpop.f32.mrf.mxu0
  %v1013 = vadd.f32 %v964, %v1012
  %1014 = vmatmul.bf16.gmra.mxu0 %v925
  %v1015 = vpop.f32.mrf.mxu0
  %v1016 = vadd.f32 %v967, %v1015
  %v1017 = vpop.f32.mrf.mxu0
  %v1018 = vadd.f32 %v969, %v1017
  %1019 = vmatmul.bf16.gmra.mxu0 %v928
  %v1020 = vpop.f32.mrf.mxu0
  %v1021 = vadd.f32 %v972, %v1020
  %v1022 = vpop.f32.mrf.mxu0
  %v1023 = vadd.f32 %v974, %v1022
  %1024 = vmatmul.bf16.gmra.mxu0 %v931
  %v1025 = vpop.f32.mrf.mxu0
  %v1026 = vadd.f32 %v977, %v1025
  %v1027 = vpop.f32.mrf.mxu0
  %v1028 = vadd.f32 %v979, %v1027
  %1029 = vmatmul.bf16.gmra.mxu0 %v934
  %v1030 = vpop.f32.mrf.mxu0
  %v1031 = vadd.f32 %v982, %v1030
  %v1032 = vpop.f32.mrf.mxu0
  %v1033 = vadd.f32 %v984, %v1032
  %1034 = vmatmul.bf16.gmra.mxu0 %v937
  %v1035 = vpop.f32.mrf.mxu0
  %v1036 = vadd.f32 %v987, %v1035
  %v1037 = vpop.f32.mrf.mxu0
  %v1038 = vadd.f32 %v989, %v1037
  %1039 = vdwg.mxu0
  %v1040 = vld [vmem:[%s6] sm:$0x1]
  %v1042 = vperm.slane %v1040, 0
  %v1044 = vadd.f32 %v1001, %v1042
  %v1045 = vadd.f32 %v1003, %v1042
  %v1046 = vadd.f32 %v1006, %v1042
  %v1047 = vadd.f32 %v1008, %v1042
  %v1048 = vadd.f32 %v1011, %v1042
  %v1049 = vadd.f32 %v1013, %v1042
  %v1050 = vadd.f32 %v1016, %v1042
  %v1051 = vadd.f32 %v1018, %v1042
  %v1052 = vadd.f32 %v1021, %v1042
  %v1053 = vadd.f32 %v1023, %v1042
  %v1054 = vadd.f32 %v1026, %v1042
  %v1055 = vadd.f32 %v1028, %v1042
  %v1056 = vadd.f32 %v1031, %v1042
  %v1057 = vadd.f32 %v1033, %v1042
  %v1058 = vadd.f32 %v1036, %v1042
  %v1059 = vadd.f32 %v1038, %v1042
  %v1060 = vmax.f32 %v1044, 0.0
  %v1061 = vmax.f32 %v1045, 0.0
  %v1062 = vmax.f32 %v1046, 0.0
  %v1063 = vmax.f32 %v1047, 0.0
  %v1064 = vmax.f32 %v1048, 0.0
  %v1065 = vmax.f32 %v1049, 0.0
  %v1066 = vmax.f32 %v1050, 0.0
  %v1067 = vmax.f32 %v1051, 0.0
  %v1068 = vmax.f32 %v1052, 0.0
  %v1069 = vmax.f32 %v1053, 0.0
  %v1070 = vmax.f32 %v1054, 0.0
  %v1071 = vmax.f32 %v1055, 0.0
  %v1072 = vmax.f32 %v1056, 0.0
  %v1073 = vmax.f32 %v1057, 0.0
  %v1074 = vmax.f32 %v1058, 0.0
  %v1075 = vmax.f32 %v1059, 0.0
  %v1076 = vpack.c.bf16 %v1060, %v1060
  %v1077 = vpack.c.bf16 %v1061, %v1061
  %v1078 = vpack.c.bf16 %v1062, %v1062
  %v1079 = vpack.c.bf16 %v1063, %v1063
  %v1080 = vpack.c.bf16 %v1064, %v1064
  %v1081 = vpack.c.bf16 %v1065, %v1065
  %v1082 = vpack.c.bf16 %v1066, %v1066
  %v1083 = vpack.c.bf16 %v1067, %v1067
  %v1084 = vpack.c.bf16 %v1068, %v1068
  %v1085 = vpack.c.bf16 %v1069, %v1069
  %v1086 = vpack.c.bf16 %v1070, %v1070
  %v1087 = vpack.c.bf16 %v1071, %v1071
  %v1088 = vpack.c.bf16 %v1072, %v1072
  %v1089 = vpack.c.bf16 %v1073, %v1073
  %v1090 = vpack.c.bf16 %v1074, %v1074
  %v1091 = vpack.c.bf16 %v1075, %v1075
  %1092 = vst [vmem:[%s7] sm:$0xf] %v1076
  %1093 = vst [vmem:[%s7 + $0x4] sm:$0xf] %v1077
  %1094 = vst [vmem:[%s7 + $0x8] sm:$0xf] %v1078
  %1095 = vst [vmem:[%s7 + $0xc] sm:$0xf] %v1079
  %1096 = vst [vmem:[%s7 + $0x10] sm:$0xf] %v1080
  %1097 = vst [vmem:[%s7 + $0x14] sm:$0xf] %v1081
  %1098 = vst [vmem:[%s7 + $0x18] sm:$0xf] %v1082
  %1099 = vst [vmem:[%s7 + $0x1c] sm:$0xf] %v1083
  %1100 = vst [vmem:[%s7 + $0x20] sm:$0xf] %v1084
  %1101 = vst [vmem:[%s7 + $0x24] sm:$0xf] %v1085
  %1102 = vst [vmem:[%s7 + $0x28] sm:$0xf] %v1086
  %1103 = vst [vmem:[%s7 + $0x2c] sm:$0xf] %v1087
  %1104 = vst [vmem:[%s7 + $0x30] sm:$0xf] %v1088
  %1105 = vst [vmem:[%s7 + $0x34] sm:$0xf] %v1089
  %1106 = vst [vmem:[%s7 + $0x38] sm:$0xf] %v1090
  %1107 = vst [vmem:[%s7 + $0x3c] sm:$0xf] %v1091
  // Predicated region
  $region30: #{forward.4} parent=0 // pred_check
    _
  $region31: #{forward.4} parent=0 // pred_check_branch
    %1109 = sbr.rel (0) target = $region33
  $region32: #{forward.4} parent=0 // pred_region
    _
  $region33: #{forward.4} parent=0 // pred_fallthru
    _
  // Predicated region
  $region34: #{forward.4} parent=0 // pred_check
    _
  $region35: #{forward.4} parent=0 // pred_check_branch
    %1111 = sbr.rel (0) target = $region37
  $region36: #{forward.4} parent=0 // pred_region
    _
  $region37: #{forward.4} parent=0 // pred_fallthru
    _

// kernel: forward.5
$region0: #{forward.5}
  #allocation0 [shape = 'u32[]', space=smem, size = 0x4, offset = 0x4, fixed_abs, tag = 'smem constant byte address 0x4 - core index']
  #allocation1 [shape = 'u32[72,128]{1,0:T(1,128)}', space=vmem, size = 0x9000, scoped, tag = 'internal scratch']
  %s0 = inlined_call_operand.vmem [shape: bf16[128,1760], index: 0, kind: input, shape index: {}]
  %s1 = inlined_call_operand.vmem [shape: bf16[1760,128], index: 1, kind: input, shape index: {}]
  %s2 = inlined_call_operand.vmem [shape: f32[1,128], index: 2, kind: input, shape index: {}]
  %s3 = inlined_call_operand.vmem [shape: bf16[128,128], index: 3, kind: output, shape index: {}]
  %s4 = sld [smem:[#allocation0]]
  $region22: #{forward.5} parent=0
    _
  %s6 = ssub.s32 1, %s4
  %s7 = scalar_select 0, %s6, %s4
  // Predicated region
  $region2: #{forward.5} parent=0 // pred_check
    _
  $region3: #{forward.5} parent=0 // pred_check_branch
    %9 = sbr.rel (0) target = $region5
  $region4: #{forward.5} parent=0 // pred_region
    _
  $region5: #{forward.5} parent=0 // pred_fallthru
    _
  // Predicated region
  $region6: #{forward.5} parent=0 // pred_check
    _
  $region7: #{forward.5} parent=0 // pred_check_branch
    %11 = sbr.rel (0) target = $region9
  $region8: #{forward.5} parent=0 // pred_region
    _
  $region9: #{forward.5} parent=0 // pred_fallthru
    _
  // Predicated region
  $region10: #{forward.5} parent=0 // pred_check
    _
  $region11: #{forward.5} parent=0 // pred_check_branch
    %13 = sbr.rel (0) target = $region13
  $region12: #{forward.5} parent=0 // pred_region
    _
  $region13: #{forward.5} parent=0 // pred_fallthru
    _
  %v15 = vld [vmem:[%s0] sm:$0xff]
  %v16 = vld [vmem:[%s0 + $0x8] sm:$0xff]
  %v17 = vld [vmem:[%s0 + $0x10] sm:$0xff]
  %v18 = vld [vmem:[%s0 + $0x18] sm:$0xff]
  %v19 = vld [vmem:[%s0 + $0x20] sm:$0xff]
  %v20 = vld [vmem:[%s0 + $0x28] sm:$0xff]
  %v21 = vld [vmem:[%s0 + $0x30] sm:$0xff]
  %v22 = vld [vmem:[%s0 + $0x38] sm:$0xff]
  %v23 = vld [vmem:[%s0 + $0x40] sm:$0xff]
  %v24 = vld [vmem:[%s0 + $0x48] sm:$0xff]
  %v25 = vld [vmem:[%s0 + $0x50] sm:$0xff]
  %v26 = vld [vmem:[%s0 + $0x58] sm:$0xff]
  %v27 = vld [vmem:[%s0 + $0x60] sm:$0xff]
  %v28 = vld [vmem:[%s0 + $0x68] sm:$0xff]
  %v29 = vld [vmem:[%s0 + $0x70] sm:$0xff]
  %v30 = vld [vmem:[%s0 + $0x78] sm:$0xff]
  %v31 = vld [vmem:[%s0 + $0x80] sm:$0xff]
  %v32 = vld [vmem:[%s0 + $0x88] sm:$0xff]
  %v33 = vld [vmem:[%s0 + $0x90] sm:$0xff]
  %v34 = vld [vmem:[%s0 + $0x98] sm:$0xff]
  %v35 = vld [vmem:[%s0 + $0xa0] sm:$0xff]
  %v36 = vld [vmem:[%s0 + $0xa8] sm:$0xff]
  %v37 = vld [vmem:[%s0 + $0xb0] sm:$0xff]
  %v38 = vld [vmem:[%s0 + $0xb8] sm:$0xff]
  %v39 = vld [vmem:[%s0 + $0xc0] sm:$0xff]
  %v40 = vld [vmem:[%s0 + $0xc8] sm:$0xff]
  %v41 = vld [vmem:[%s0 + $0xd0] sm:$0xff]
  %v42 = vld [vmem:[%s0 + $0xd8] sm:$0xff]
  %v43 = vld [vmem:[%s0 + $0xe0] sm:$0xff]
  %v44 = vld [vmem:[%s0 + $0xe8] sm:$0xff]
  %v45 = vld [vmem:[%s0 + $0xf0] sm:$0xff]
  %v46 = vld [vmem:[%s0 + $0xf8] sm:$0xff]
  %v47 = vld [vmem:[%s0 + $0x100] sm:$0xff]
  %v48 = vld [vmem:[%s0 + $0x108] sm:$0xff]
  %v49 = vld [vmem:[%s0 + $0x110] sm:$0xff]
  %v50 = vld [vmem:[%s0 + $0x118] sm:$0xff]
  %v51 = vld [vmem:[%s0 + $0x120] sm:$0xff]
  %v52 = vld [vmem:[%s0 + $0x128] sm:$0xff]
  %v53 = vld [vmem:[%s0 + $0x130] sm:$0xff]
  %v54 = vld [vmem:[%s0 + $0x138] sm:$0xff]
  %v55 = vld [vmem:[%s0 + $0x140] sm:$0xff]
  %v56 = vld [vmem:[%s0 + $0x148] sm:$0xff]
  %v57 = vld [vmem:[%s0 + $0x150] sm:$0xff]
  %v58 = vld [vmem:[%s0 + $0x158] sm:$0xff]
  %v59 = vld [vmem:[%s0 + $0x160] sm:$0xff]
  %v60 = vld [vmem:[%s0 + $0x168] sm:$0xff]
  %v61 = vld [vmem:[%s0 + $0x170] sm:$0xff]
  %v62 = vld [vmem:[%s0 + $0x178] sm:$0xff]
  %v63 = vld [vmem:[%s0 + $0x180] sm:$0xff]
  %v64 = vld [vmem:[%s0 + $0x188] sm:$0xff]
  %v65 = vld [vmem:[%s0 + $0x190] sm:$0xff]
  %v66 = vld [vmem:[%s0 + $0x198] sm:$0xff]
  %v67 = vld [vmem:[%s0 + $0x1a0] sm:$0xff]
  %v68 = vld [vmem:[%s0 + $0x1a8] sm:$0xff]
  %v69 = vld [vmem:[%s0 + $0x1b0] sm:$0xff]
  %v70 = vld [vmem:[%s0 + $0x1b8] sm:$0xff]
  %v71 = vld [vmem:[%s0 + $0x1c0] sm:$0xff]
  %v72 = vld [vmem:[%s0 + $0x1c8] sm:$0xff]
  %v73 = vld [vmem:[%s0 + $0x1d0] sm:$0xff]
  %v74 = vld [vmem:[%s0 + $0x1d8] sm:$0xff]
  %v75 = vld [vmem:[%s0 + $0x1e0] sm:$0xff]
  %v76 = vld [vmem:[%s0 + $0x1e8] sm:$0xff]
  %v77 = vld [vmem:[%s0 + $0x1f0] sm:$0xff]
  %v78 = vld [vmem:[%s0 + $0x1f8] sm:$0xff]
  %v79 = vld [vmem:[%s0 + $0x200] sm:$0xff]
  %v80 = vld [vmem:[%s0 + $0x208] sm:$0xff]
  %v81 = vld [vmem:[%s0 + $0x210] sm:$0xff]
  %v82 = vld [vmem:[%s0 + $0x218] sm:$0xff]
  %v83 = vld [vmem:[%s0 + $0x220] sm:$0xff]
  %v84 = vld [vmem:[%s0 + $0x228] sm:$0xff]
  %v85 = vld [vmem:[%s0 + $0x230] sm:$0xff]
  %v86 = vld [vmem:[%s0 + $0x238] sm:$0xff]
  %v87 = vld [vmem:[%s0 + $0x240] sm:$0xff]
  %v88 = vld [vmem:[%s0 + $0x248] sm:$0xff]
  %v89 = vld [vmem:[%s0 + $0x250] sm:$0xff]
  %v90 = vld [vmem:[%s0 + $0x258] sm:$0xff]
  %v91 = vld [vmem:[%s0 + $0x260] sm:$0xff]
  %v92 = vld [vmem:[%s0 + $0x268] sm:$0xff]
  %v93 = vld [vmem:[%s0 + $0x270] sm:$0xff]
  %v94 = vld [vmem:[%s0 + $0x278] sm:$0xff]
  %v95 = vld [vmem:[%s0 + $0x280] sm:$0xff]
  %v96 = vld [vmem:[%s0 + $0x288] sm:$0xff]
  %v97 = vld [vmem:[%s0 + $0x290] sm:$0xff]
  %v98 = vld [vmem:[%s0 + $0x298] sm:$0xff]
  %v99 = vld [vmem:[%s0 + $0x2a0] sm:$0xff]
  %v100 = vld [vmem:[%s0 + $0x2a8] sm:$0xff]
  %v101 = vld [vmem:[%s0 + $0x2b0] sm:$0xff]
  %v102 = vld [vmem:[%s0 + $0x2b8] sm:$0xff]
  %v103 = vld [vmem:[%s0 + $0x2c0] sm:$0xff]
  %v104 = vld [vmem:[%s0 + $0x2c8] sm:$0xff]
  %v105 = vld [vmem:[%s0 + $0x2d0] sm:$0xff]
  %v106 = vld [vmem:[%s0 + $0x2d8] sm:$0xff]
  %v107 = vld [vmem:[%s0 + $0x2e0] sm:$0xff]
  %v108 = vld [vmem:[%s0 + $0x2e8] sm:$0xff]
  %v109 = vld [vmem:[%s0 + $0x2f0] sm:$0xff]
  %v110 = vld [vmem:[%s0 + $0x2f8] sm:$0xff]
  %v111 = vld [vmem:[%s0 + $0x300] sm:$0xff]
  %v112 = vld [vmem:[%s0 + $0x308] sm:$0xff]
  %v113 = vld [vmem:[%s0 + $0x310] sm:$0xff]
  %v114 = vld [vmem:[%s0 + $0x318] sm:$0xff]
  %v115 = vld [vmem:[%s0 + $0x320] sm:$0xff]
  %v116 = vld [vmem:[%s0 + $0x328] sm:$0xff]
  %v117 = vld [vmem:[%s0 + $0x330] sm:$0xff]
  %v118 = vld [vmem:[%s0 + $0x338] sm:$0xff]
  %v119 = vld [vmem:[%s0 + $0x340] sm:$0xff]
  %v120 = vld [vmem:[%s0 + $0x348] sm:$0xff]
  %v121 = vld [vmem:[%s0 + $0x350] sm:$0xff]
  %v122 = vld [vmem:[%s0 + $0x358] sm:$0xff]
  %v123 = vld [vmem:[%s0 + $0x360] sm:$0xff]
  %v124 = vld [vmem:[%s0 + $0x368] sm:$0xff]
  %v125 = vld [vmem:[%s0 + $0x370] sm:$0xff]
  %v126 = vld [vmem:[%s0 + $0x378] sm:$0xff]
  %v127 = vld [vmem:[%s1] sm:$0xf]
  %v128 = vld [vmem:[%s1 + $0x4] sm:$0xf]
  %v129 = vld [vmem:[%s1 + $0x8] sm:$0xf]
  %v130 = vld [vmem:[%s1 + $0xc] sm:$0xf]
  %v131 = vld [vmem:[%s1 + $0x10] sm:$0xf]
  %v132 = vld [vmem:[%s1 + $0x14] sm:$0xf]
  %v133 = vld [vmem:[%s1 + $0x18] sm:$0xf]
  %v134 = vld [vmem:[%s1 + $0x1c] sm:$0xf]
  %v135 = vld [vmem:[%s1 + $0x20] sm:$0xf]
  %v136 = vld [vmem:[%s1 + $0x24] sm:$0xf]
  %v137 = vld [vmem:[%s1 + $0x28] sm:$0xf]
  %v138 = vld [vmem:[%s1 + $0x2c] sm:$0xf]
  %v139 = vld [vmem:[%s1 + $0x30] sm:$0xf]
  %v140 = vld [vmem:[%s1 + $0x34] sm:$0xf]
  %v141 = vld [vmem:[%s1 + $0x38] sm:$0xf]
  %v142 = vld [vmem:[%s1 + $0x3c] sm:$0xf]
  %v143 = vld [vmem:[%s1 + $0x40] sm:$0xf]
  %v144 = vld [vmem:[%s1 + $0x44] sm:$0xf]
  %v145 = vld [vmem:[%s1 + $0x48] sm:$0xf]
  %v146 = vld [vmem:[%s1 + $0x4c] sm:$0xf]
  %v147 = vld [vmem:[%s1 + $0x50] sm:$0xf]
  %v148 = vld [vmem:[%s1 + $0x54] sm:$0xf]
  %v149 = vld [vmem:[%s1 + $0x58] sm:$0xf]
  %v150 = vld [vmem:[%s1 + $0x5c] sm:$0xf]
  %v151 = vld [vmem:[%s1 + $0x60] sm:$0xf]
  %v152 = vld [vmem:[%s1 + $0x64] sm:$0xf]
  %v153 = vld [vmem:[%s1 + $0x68] sm:$0xf]
  %v154 = vld [vmem:[%s1 + $0x6c] sm:$0xf]
  %v155 = vld [vmem:[%s1 + $0x70] sm:$0xf]
  %v156 = vld [vmem:[%s1 + $0x74] sm:$0xf]
  %v157 = vld [vmem:[%s1 + $0x78] sm:$0xf]
  %v158 = vld [vmem:[%s1 + $0x7c] sm:$0xf]
  %v159 = vld [vmem:[%s1 + $0x80] sm:$0xf]
  %v160 = vld [vmem:[%s1 + $0x84] sm:$0xf]
  %v161 = vld [vmem:[%s1 + $0x88] sm:$0xf]
  %v162 = vld [vmem:[%s1 + $0x8c] sm:$0xf]
  %v163 = vld [vmem:[%s1 + $0x90] sm:$0xf]
  %v164 = vld [vmem:[%s1 + $0x94] sm:$0xf]
  %v165 = vld [vmem:[%s1 + $0x98] sm:$0xf]
  %v166 = vld [vmem:[%s1 + $0x9c] sm:$0xf]
  %v167 = vld [vmem:[%s1 + $0xa0] sm:$0xf]
  %v168 = vld [vmem:[%s1 + $0xa4] sm:$0xf]
  %v169 = vld [vmem:[%s1 + $0xa8] sm:$0xf]
  %v170 = vld [vmem:[%s1 + $0xac] sm:$0xf]
  %v171 = vld [vmem:[%s1 + $0xb0] sm:$0xf]
  %v172 = vld [vmem:[%s1 + $0xb4] sm:$0xf]
  %v173 = vld [vmem:[%s1 + $0xb8] sm:$0xf]
  %v174 = vld [vmem:[%s1 + $0xbc] sm:$0xf]
  %v175 = vld [vmem:[%s1 + $0xc0] sm:$0xf]
  %v176 = vld [vmem:[%s1 + $0xc4] sm:$0xf]
  %v177 = vld [vmem:[%s1 + $0xc8] sm:$0xf]
  %v178 = vld [vmem:[%s1 + $0xcc] sm:$0xf]
  %v179 = vld [vmem:[%s1 + $0xd0] sm:$0xf]
  %v180 = vld [vmem:[%s1 + $0xd4] sm:$0xf]
  %v181 = vld [vmem:[%s1 + $0xd8] sm:$0xf]
  %v182 = vld [vmem:[%s1 + $0xdc] sm:$0xf]
  %v183 = vld [vmem:[%s1 + $0xe0] sm:$0xf]
  %v184 = vld [vmem:[%s1 + $0xe4] sm:$0xf]
  %v185 = vld [vmem:[%s1 + $0xe8] sm:$0xf]
  %v186 = vld [vmem:[%s1 + $0xec] sm:$0xf]
  %v187 = vld [vmem:[%s1 + $0xf0] sm:$0xf]
  %v188 = vld [vmem:[%s1 + $0xf4] sm:$0xf]
  %v189 = vld [vmem:[%s1 + $0xf8] sm:$0xf]
  %v190 = vld [vmem:[%s1 + $0xfc] sm:$0xf]
  %v191 = vld [vmem:[%s1 + $0x100] sm:$0xf]
  %v192 = vld [vmem:[%s1 + $0x104] sm:$0xf]
  %v193 = vld [vmem:[%s1 + $0x108] sm:$0xf]
  %v194 = vld [vmem:[%s1 + $0x10c] sm:$0xf]
  %v195 = vld [vmem:[%s1 + $0x110] sm:$0xf]
  %v196 = vld [vmem:[%s1 + $0x114] sm:$0xf]
  %v197 = vld [vmem:[%s1 + $0x118] sm:$0xf]
  %v198 = vld [vmem:[%s1 + $0x11c] sm:$0xf]
  %v199 = vld [vmem:[%s1 + $0x120] sm:$0xf]
  %v200 = vld [vmem:[%s1 + $0x124] sm:$0xf]
  %v201 = vld [vmem:[%s1 + $0x128] sm:$0xf]
  %v202 = vld [vmem:[%s1 + $0x12c] sm:$0xf]
  %v203 = vld [vmem:[%s1 + $0x130] sm:$0xf]
  %v204 = vld [vmem:[%s1 + $0x134] sm:$0xf]
  %v205 = vld [vmem:[%s1 + $0x138] sm:$0xf]
  %v206 = vld [vmem:[%s1 + $0x13c] sm:$0xf]
  %v207 = vld [vmem:[%s1 + $0x140] sm:$0xf]
  %v208 = vld [vmem:[%s1 + $0x144] sm:$0xf]
  %v209 = vld [vmem:[%s1 + $0x148] sm:$0xf]
  %v210 = vld [vmem:[%s1 + $0x14c] sm:$0xf]
  %v211 = vld [vmem:[%s1 + $0x150] sm:$0xf]
  %v212 = vld [vmem:[%s1 + $0x154] sm:$0xf]
  %v213 = vld [vmem:[%s1 + $0x158] sm:$0xf]
  %v214 = vld [vmem:[%s1 + $0x15c] sm:$0xf]
  %v215 = vld [vmem:[%s1 + $0x160] sm:$0xf]
  %v216 = vld [vmem:[%s1 + $0x164] sm:$0xf]
  %v217 = vld [vmem:[%s1 + $0x168] sm:$0xf]
  %v218 = vld [vmem:[%s1 + $0x16c] sm:$0xf]
  %v219 = vld [vmem:[%s1 + $0x170] sm:$0xf]
  %v220 = vld [vmem:[%s1 + $0x174] sm:$0xf]
  %v221 = vld [vmem:[%s1 + $0x178] sm:$0xf]
  %v222 = vld [vmem:[%s1 + $0x17c] sm:$0xf]
  %v223 = vld [vmem:[%s1 + $0x180] sm:$0xf]
  %v224 = vld [vmem:[%s1 + $0x184] sm:$0xf]
  %v225 = vld [vmem:[%s1 + $0x188] sm:$0xf]
  %v226 = vld [vmem:[%s1 + $0x18c] sm:$0xf]
  %v227 = vld [vmem:[%s1 + $0x190] sm:$0xf]
  %v228 = vld [vmem:[%s1 + $0x194] sm:$0xf]
  %v229 = vld [vmem:[%s1 + $0x198] sm:$0xf]
  %v230 = vld [vmem:[%s1 + $0x19c] sm:$0xf]
  %v231 = vld [vmem:[%s1 + $0x1a0] sm:$0xf]
  %v232 = vld [vmem:[%s1 + $0x1a4] sm:$0xf]
  %v233 = vld [vmem:[%s1 + $0x1a8] sm:$0xf]
  %v234 = vld [vmem:[%s1 + $0x1ac] sm:$0xf]
  %v235 = vld [vmem:[%s1 + $0x1b0] sm:$0xf]
  %v236 = vld [vmem:[%s1 + $0x1b4] sm:$0xf]
  %v237 = vld [vmem:[%s1 + $0x1b8] sm:$0xf]
  %v238 = vld [vmem:[%s1 + $0x1bc] sm:$0xf]
  %v239 = vld [vmem:[%s1 + $0x1c0] sm:$0xf]
  %v240 = vld [vmem:[%s1 + $0x1c4] sm:$0xf]
  %v241 = vld [vmem:[%s1 + $0x1c8] sm:$0xf]
  %v242 = vld [vmem:[%s1 + $0x1cc] sm:$0xf]
  %v243 = vld [vmem:[%s1 + $0x1d0] sm:$0xf]
  %v244 = vld [vmem:[%s1 + $0x1d4] sm:$0xf]
  %v245 = vld [vmem:[%s1 + $0x1d8] sm:$0xf]
  %v246 = vld [vmem:[%s1 + $0x1dc] sm:$0xf]
  %v247 = vld [vmem:[%s1 + $0x1e0] sm:$0xf]
  %v248 = vld [vmem:[%s1 + $0x1e4] sm:$0xf]
  %v249 = vld [vmem:[%s1 + $0x1e8] sm:$0xf]
  %v250 = vld [vmem:[%s1 + $0x1ec] sm:$0xf]
  %v251 = vld [vmem:[%s1 + $0x1f0] sm:$0xf]
  %v252 = vld [vmem:[%s1 + $0x1f4] sm:$0xf]
  %v253 = vld [vmem:[%s1 + $0x1f8] sm:$0xf]
  %v254 = vld [vmem:[%s1 + $0x1fc] sm:$0xf]
  %v255 = vld [vmem:[%s1 + $0x200] sm:$0xf]
  %v256 = vld [vmem:[%s1 + $0x204] sm:$0xf]
  %v257 = vld [vmem:[%s1 + $0x208] sm:$0xf]
  %v258 = vld [vmem:[%s1 + $0x20c] sm:$0xf]
  %v259 = vld [vmem:[%s1 + $0x210] sm:$0xf]
  %v260 = vld [vmem:[%s1 + $0x214] sm:$0xf]
  %v261 = vld [vmem:[%s1 + $0x218] sm:$0xf]
  %v262 = vld [vmem:[%s1 + $0x21c] sm:$0xf]
  %v263 = vld [vmem:[%s1 + $0x220] sm:$0xf]
  %v264 = vld [vmem:[%s1 + $0x224] sm:$0xf]
  %v265 = vld [vmem:[%s1 + $0x228] sm:$0xf]
  %v266 = vld [vmem:[%s1 + $0x22c] sm:$0xf]
  %v267 = vld [vmem:[%s1 + $0x230] sm:$0xf]
  %v268 = vld [vmem:[%s1 + $0x234] sm:$0xf]
  %v269 = vld [vmem:[%s1 + $0x238] sm:$0xf]
  %v270 = vld [vmem:[%s1 + $0x23c] sm:$0xf]
  %v271 = vld [vmem:[%s1 + $0x240] sm:$0xf]
  %v272 = vld [vmem:[%s1 + $0x244] sm:$0xf]
  %v273 = vld [vmem:[%s1 + $0x248] sm:$0xf]
  %v274 = vld [vmem:[%s1 + $0x24c] sm:$0xf]
  %v275 = vld [vmem:[%s1 + $0x250] sm:$0xf]
  %v276 = vld [vmem:[%s1 + $0x254] sm:$0xf]
  %v277 = vld [vmem:[%s1 + $0x258] sm:$0xf]
  %v278 = vld [vmem:[%s1 + $0x25c] sm:$0xf]
  %v279 = vld [vmem:[%s1 + $0x260] sm:$0xf]
  %v280 = vld [vmem:[%s1 + $0x264] sm:$0xf]
  %v281 = vld [vmem:[%s1 + $0x268] sm:$0xf]
  %v282 = vld [vmem:[%s1 + $0x26c] sm:$0xf]
  %v283 = vld [vmem:[%s1 + $0x270] sm:$0xf]
  %v284 = vld [vmem:[%s1 + $0x274] sm:$0xf]
  %v285 = vld [vmem:[%s1 + $0x278] sm:$0xf]
  %v286 = vld [vmem:[%s1 + $0x27c] sm:$0xf]
  %v287 = vld [vmem:[%s1 + $0x280] sm:$0xf]
  %v288 = vld [vmem:[%s1 + $0x284] sm:$0xf]
  %v289 = vld [vmem:[%s1 + $0x288] sm:$0xf]
  %v290 = vld [vmem:[%s1 + $0x28c] sm:$0xf]
  %v291 = vld [vmem:[%s1 + $0x290] sm:$0xf]
  %v292 = vld [vmem:[%s1 + $0x294] sm:$0xf]
  %v293 = vld [vmem:[%s1 + $0x298] sm:$0xf]
  %v294 = vld [vmem:[%s1 + $0x29c] sm:$0xf]
  %v295 = vld [vmem:[%s1 + $0x2a0] sm:$0xf]
  %v296 = vld [vmem:[%s1 + $0x2a4] sm:$0xf]
  %v297 = vld [vmem:[%s1 + $0x2a8] sm:$0xf]
  %v298 = vld [vmem:[%s1 + $0x2ac] sm:$0xf]
  %v299 = vld [vmem:[%s1 + $0x2b0] sm:$0xf]
  %v300 = vld [vmem:[%s1 + $0x2b4] sm:$0xf]
  %v301 = vld [vmem:[%s1 + $0x2b8] sm:$0xf]
  %v302 = vld [vmem:[%s1 + $0x2bc] sm:$0xf]
  %v303 = vld [vmem:[%s1 + $0x2c0] sm:$0xf]
  %v304 = vld [vmem:[%s1 + $0x2c4] sm:$0xf]
  %v305 = vld [vmem:[%s1 + $0x2c8] sm:$0xf]
  %v306 = vld [vmem:[%s1 + $0x2cc] sm:$0xf]
  %v307 = vld [vmem:[%s1 + $0x2d0] sm:$0xf]
  %v308 = vld [vmem:[%s1 + $0x2d4] sm:$0xf]
  %v309 = vld [vmem:[%s1 + $0x2d8] sm:$0xf]
  %v310 = vld [vmem:[%s1 + $0x2dc] sm:$0xf]
  %v311 = vld [vmem:[%s1 + $0x2e0] sm:$0xf]
  %v312 = vld [vmem:[%s1 + $0x2e4] sm:$0xf]
  %v313 = vld [vmem:[%s1 + $0x2e8] sm:$0xf]
  %v314 = vld [vmem:[%s1 + $0x2ec] sm:$0xf]
  %v315 = vld [vmem:[%s1 + $0x2f0] sm:$0xf]
  %v316 = vld [vmem:[%s1 + $0x2f4] sm:$0xf]
  %v317 = vld [vmem:[%s1 + $0x2f8] sm:$0xf]
  %v318 = vld [vmem:[%s1 + $0x2fc] sm:$0xf]
  %v319 = vld [vmem:[%s1 + $0x300] sm:$0xf]
  %v320 = vld [vmem:[%s1 + $0x304] sm:$0xf]
  %v321 = vld [vmem:[%s1 + $0x308] sm:$0xf]
  %v322 = vld [vmem:[%s1 + $0x30c] sm:$0xf]
  %v323 = vld [vmem:[%s1 + $0x310] sm:$0xf]
  %v324 = vld [vmem:[%s1 + $0x314] sm:$0xf]
  %v325 = vld [vmem:[%s1 + $0x318] sm:$0xf]
  %v326 = vld [vmem:[%s1 + $0x31c] sm:$0xf]
  %v327 = vld [vmem:[%s1 + $0x320] sm:$0xf]
  %v328 = vld [vmem:[%s1 + $0x324] sm:$0xf]
  %v329 = vld [vmem:[%s1 + $0x328] sm:$0xf]
  %v330 = vld [vmem:[%s1 + $0x32c] sm:$0xf]
  %v331 = vld [vmem:[%s1 + $0x330] sm:$0xf]
  %v332 = vld [vmem:[%s1 + $0x334] sm:$0xf]
  %v333 = vld [vmem:[%s1 + $0x338] sm:$0xf]
  %v334 = vld [vmem:[%s1 + $0x33c] sm:$0xf]
  %v335 = vld [vmem:[%s1 + $0x340] sm:$0xf]
  %v336 = vld [vmem:[%s1 + $0x344] sm:$0xf]
  %v337 = vld [vmem:[%s1 + $0x348] sm:$0xf]
  %v338 = vld [vmem:[%s1 + $0x34c] sm:$0xf]
  %v339 = vld [vmem:[%s1 + $0x350] sm:$0xf]
  %v340 = vld [vmem:[%s1 + $0x354] sm:$0xf]
  %v341 = vld [vmem:[%s1 + $0x358] sm:$0xf]
  %v342 = vld [vmem:[%s1 + $0x35c] sm:$0xf]
  %v343 = vld [vmem:[%s1 + $0x360] sm:$0xf]
  %v344 = vld [vmem:[%s1 + $0x364] sm:$0xf]
  %v345 = vld [vmem:[%s1 + $0x368] sm:$0xf]
  %v346 = vld [vmem:[%s1 + $0x36c] sm:$0xf]
  %v347 = vld [vmem:[%s2] sm:$0x1]
  %v349 = vperm.slane %v347, 0
  %v463 = vunpack.c.l.b16 %v15
  %v464 = vunpack.c.h.b16 %v15
  %v465 = vunpack.c.l.b16 %v16
  %v466 = vunpack.c.h.b16 %v16
  %v467 = vunpack.c.l.b16 %v17
  %v468 = vunpack.c.h.b16 %v17
  %v469 = vunpack.c.l.b16 %v18
  %v470 = vunpack.c.h.b16 %v18
  %v471 = vunpack.c.l.b16 %v19
  %v472 = vunpack.c.h.b16 %v19
  %v473 = vunpack.c.l.b16 %v20
  %v474 = vunpack.c.h.b16 %v20
  %v475 = vunpack.c.l.b16 %v21
  %v476 = vunpack.c.h.b16 %v21
  %v477 = vunpack.c.l.b16 %v22
  %v478 = vunpack.c.h.b16 %v22
  %v479 = vunpack.c.l.b16 %v23
  %v480 = vunpack.c.h.b16 %v23
  %v481 = vunpack.c.l.b16 %v24
  %v482 = vunpack.c.h.b16 %v24
  %v483 = vunpack.c.l.b16 %v25
  %v484 = vunpack.c.h.b16 %v25
  %v485 = vunpack.c.l.b16 %v26
  %v486 = vunpack.c.h.b16 %v26
  %v487 = vunpack.c.l.b16 %v27
  %v488 = vunpack.c.h.b16 %v27
  %v489 = vunpack.c.l.b16 %v28
  %v490 = vunpack.c.h.b16 %v28
  %v491 = vunpack.c.l.b16 %v29
  %v492 = vunpack.c.h.b16 %v29
  %v493 = vunpack.c.l.b16 %v30
  %v494 = vunpack.c.h.b16 %v30
  %v495 = vunpack.c.l.b16 %v31
  %v496 = vunpack.c.h.b16 %v31
  %v497 = vunpack.c.l.b16 %v32
  %v498 = vunpack.c.h.b16 %v32
  %v499 = vunpack.c.l.b16 %v33
  %v500 = vunpack.c.h.b16 %v33
  %v501 = vunpack.c.l.b16 %v34
  %v502 = vunpack.c.h.b16 %v34
  %v503 = vunpack.c.l.b16 %v35
  %v504 = vunpack.c.h.b16 %v35
  %v505 = vunpack.c.l.b16 %v36
  %v506 = vunpack.c.h.b16 %v36
  %v507 = vunpack.c.l.b16 %v37
  %v508 = vunpack.c.h.b16 %v37
  %v509 = vunpack.c.l.b16 %v38
  %v510 = vunpack.c.h.b16 %v38
  %v511 = vunpack.c.l.b16 %v39
  %v512 = vunpack.c.h.b16 %v39
  %v513 = vunpack.c.l.b16 %v40
  %v514 = vunpack.c.h.b16 %v40
  %v515 = vunpack.c.l.b16 %v41
  %v516 = vunpack.c.h.b16 %v41
  %v517 = vunpack.c.l.b16 %v42
  %v518 = vunpack.c.h.b16 %v42
  %v519 = vunpack.c.l.b16 %v43
  %v520 = vunpack.c.h.b16 %v43
  %v521 = vunpack.c.l.b16 %v44
  %v522 = vunpack.c.h.b16 %v44
  %v523 = vunpack.c.l.b16 %v45
  %v524 = vunpack.c.h.b16 %v45
  %v525 = vunpack.c.l.b16 %v46
  %v526 = vunpack.c.h.b16 %v46
  %v527 = vunpack.c.l.b16 %v47
  %v528 = vunpack.c.h.b16 %v47
  %v529 = vunpack.c.l.b16 %v48
  %v530 = vunpack.c.h.b16 %v48
  %v531 = vunpack.c.l.b16 %v49
  %v532 = vunpack.c.h.b16 %v49
  %v533 = vunpack.c.l.b16 %v50
  %v534 = vunpack.c.h.b16 %v50
  %v535 = vunpack.c.l.b16 %v51
  %v536 = vunpack.c.h.b16 %v51
  %v537 = vunpack.c.l.b16 %v52
  %v538 = vunpack.c.h.b16 %v52
  %v539 = vunpack.c.l.b16 %v53
  %v540 = vunpack.c.h.b16 %v53
  %v541 = vunpack.c.l.b16 %v54
  %v542 = vunpack.c.h.b16 %v54
  %v543 = vunpack.c.l.b16 %v55
  %v544 = vunpack.c.h.b16 %v55
  %v545 = vunpack.c.l.b16 %v56
  %v546 = vunpack.c.h.b16 %v56
  %v547 = vunpack.c.l.b16 %v57
  %v548 = vunpack.c.h.b16 %v57
  %v549 = vunpack.c.l.b16 %v58
  %v550 = vunpack.c.h.b16 %v58
  %v551 = vunpack.c.l.b16 %v59
  %v552 = vunpack.c.h.b16 %v59
  %v553 = vunpack.c.l.b16 %v60
  %v554 = vunpack.c.h.b16 %v60
  %v555 = vunpack.c.l.b16 %v61
  %v556 = vunpack.c.h.b16 %v61
  %v557 = vunpack.c.l.b16 %v62
  %v558 = vunpack.c.h.b16 %v62
  %v559 = vunpack.c.l.b16 %v63
  %v560 = vunpack.c.h.b16 %v63
  %v561 = vunpack.c.l.b16 %v64
  %v562 = vunpack.c.h.b16 %v64
  %v563 = vunpack.c.l.b16 %v65
  %v564 = vunpack.c.h.b16 %v65
  %v565 = vunpack.c.l.b16 %v66
  %v566 = vunpack.c.h.b16 %v66
  %v567 = vunpack.c.l.b16 %v67
  %v568 = vunpack.c.h.b16 %v67
  %v569 = vunpack.c.l.b16 %v68
  %v570 = vunpack.c.h.b16 %v68
  %v571 = vunpack.c.l.b16 %v69
  %v572 = vunpack.c.h.b16 %v69
  %v573 = vunpack.c.l.b16 %v70
  %v574 = vunpack.c.h.b16 %v70
  %v575 = vunpack.c.l.b16 %v71
  %v576 = vunpack.c.h.b16 %v71
  %v577 = vunpack.c.l.b16 %v72
  %v578 = vunpack.c.h.b16 %v72
  %v579 = vunpack.c.l.b16 %v73
  %v580 = vunpack.c.h.b16 %v73
  %v581 = vunpack.c.l.b16 %v74
  %v582 = vunpack.c.h.b16 %v74
  %v583 = vunpack.c.l.b16 %v75
  %v584 = vunpack.c.h.b16 %v75
  %v585 = vunpack.c.l.b16 %v76
  %v586 = vunpack.c.h.b16 %v76
  %v587 = vunpack.c.l.b16 %v77
  %v588 = vunpack.c.h.b16 %v77
  %v589 = vunpack.c.l.b16 %v78
  %v590 = vunpack.c.h.b16 %v78
  %v591 = vunpack.c.l.b16 %v79
  %v592 = vunpack.c.h.b16 %v79
  %v593 = vunpack.c.l.b16 %v80
  %v594 = vunpack.c.h.b16 %v80
  %v595 = vunpack.c.l.b16 %v81
  %v596 = vunpack.c.h.b16 %v81
  %v597 = vunpack.c.l.b16 %v82
  %v598 = vunpack.c.h.b16 %v82
  %v599 = vunpack.c.l.b16 %v83
  %v600 = vunpack.c.h.b16 %v83
  %v601 = vunpack.c.l.b16 %v84
  %v602 = vunpack.c.h.b16 %v84
  %v603 = vunpack.c.l.b16 %v85
  %v604 = vunpack.c.h.b16 %v85
  %v605 = vunpack.c.l.b16 %v86
  %v606 = vunpack.c.h.b16 %v86
  %v607 = vunpack.c.l.b16 %v87
  %v608 = vunpack.c.h.b16 %v87
  %v609 = vunpack.c.l.b16 %v88
  %v610 = vunpack.c.h.b16 %v88
  %v611 = vunpack.c.l.b16 %v89
  %v612 = vunpack.c.h.b16 %v89
  %v613 = vunpack.c.l.b16 %v90
  %v614 = vunpack.c.h.b16 %v90
  %v615 = vunpack.c.l.b16 %v91
  %v616 = vunpack.c.h.b16 %v91
  %v617 = vunpack.c.l.b16 %v92
  %v618 = vunpack.c.h.b16 %v92
  %v619 = vunpack.c.l.b16 %v93
  %v620 = vunpack.c.h.b16 %v93
  %v621 = vunpack.c.l.b16 %v94
  %v622 = vunpack.c.h.b16 %v94
  %v623 = vunpack.c.l.b16 %v95
  %v624 = vunpack.c.h.b16 %v95
  %v625 = vunpack.c.l.b16 %v96
  %v626 = vunpack.c.h.b16 %v96
  %v627 = vunpack.c.l.b16 %v97
  %v628 = vunpack.c.h.b16 %v97
  %v629 = vunpack.c.l.b16 %v98
  %v630 = vunpack.c.h.b16 %v98
  %v631 = vunpack.c.l.b16 %v99
  %v632 = vunpack.c.h.b16 %v99
  %v633 = vunpack.c.l.b16 %v100
  %v634 = vunpack.c.h.b16 %v100
  %v635 = vunpack.c.l.b16 %v101
  %v636 = vunpack.c.h.b16 %v101
  %v637 = vunpack.c.l.b16 %v102
  %v638 = vunpack.c.h.b16 %v102
  %v639 = vunpack.c.l.b16 %v103
  %v640 = vunpack.c.h.b16 %v103
  %v641 = vunpack.c.l.b16 %v104
  %v642 = vunpack.c.h.b16 %v104
  %v643 = vunpack.c.l.b16 %v105
  %v644 = vunpack.c.h.b16 %v105
  %v645 = vunpack.c.l.b16 %v106
  %v646 = vunpack.c.h.b16 %v106
  %v647 = vunpack.c.l.b16 %v107
  %v648 = vunpack.c.h.b16 %v107
  %v649 = vunpack.c.l.b16 %v108
  %v650 = vunpack.c.h.b16 %v108
  %v651 = vunpack.c.l.b16 %v109
  %v652 = vunpack.c.h.b16 %v109
  %v653 = vunpack.c.l.b16 %v110
  %v654 = vunpack.c.h.b16 %v110
  %v655 = vunpack.c.l.b16 %v111
  %v656 = vunpack.c.h.b16 %v111
  %v657 = vunpack.c.l.b16 %v112
  %v658 = vunpack.c.h.b16 %v112
  %v659 = vunpack.c.l.b16 %v113
  %v660 = vunpack.c.h.b16 %v113
  %v661 = vunpack.c.l.b16 %v114
  %v662 = vunpack.c.h.b16 %v114
  %v663 = vunpack.c.l.b16 %v115
  %v664 = vunpack.c.h.b16 %v115
  %v665 = vunpack.c.l.b16 %v116
  %v666 = vunpack.c.h.b16 %v116
  %v667 = vunpack.c.l.b16 %v117
  %v668 = vunpack.c.h.b16 %v117
  %v669 = vunpack.c.l.b16 %v118
  %v670 = vunpack.c.h.b16 %v118
  %v671 = vunpack.c.l.b16 %v119
  %v672 = vunpack.c.h.b16 %v119
  %v673 = vunpack.c.l.b16 %v120
  %v674 = vunpack.c.h.b16 %v120
  %v675 = vunpack.c.l.b16 %v121
  %v676 = vunpack.c.h.b16 %v121
  %v677 = vunpack.c.l.b16 %v122
  %v678 = vunpack.c.h.b16 %v122
  %v679 = vunpack.c.l.b16 %v123
  %v680 = vunpack.c.h.b16 %v123
  %v681 = vunpack.c.l.b16 %v124
  %v682 = vunpack.c.h.b16 %v124
  %v683 = vunpack.c.l.b16 %v125
  %v684 = vunpack.c.h.b16 %v125
  %v685 = vunpack.c.l.b16 %v126
  %v686 = vunpack.c.h.b16 %v126
  %v687 = vpack.c.b16 %v477, %v463
  %v688 = vpack.c.b16 %v478, %v464
  %v689 = vpack.c.b16 %v479, %v465
  %v690 = vpack.c.b16 %v480, %v466
  %v691 = vpack.c.b16 %v481, %v467
  %v692 = vpack.c.b16 %v482, %v468
  %v693 = vpack.c.b16 %v483, %v469
  %v694 = vpack.c.b16 %v484, %v470
  %v695 = vpack.c.b16 %v485, %v471
  %v696 = vpack.c.b16 %v486, %v472
  %v697 = vpack.c.b16 %v487, %v473
  %v698 = vpack.c.b16 %v488, %v474
  %v699 = vpack.c.b16 %v489, %v475
  %v700 = vpack.c.b16 %v490, %v476
  %v701 = vpack.c.b16 %v505, %v491
  %v702 = vpack.c.b16 %v506, %v492
  %v703 = vpack.c.b16 %v507, %v493
  %v704 = vpack.c.b16 %v508, %v494
  %v705 = vpack.c.b16 %v509, %v495
  %v706 = vpack.c.b16 %v510, %v496
  %v707 = vpack.c.b16 %v511, %v497
  %v708 = vpack.c.b16 %v512, %v498
  %v709 = vpack.c.b16 %v513, %v499
  %v710 = vpack.c.b16 %v514, %v500
  %v711 = vpack.c.b16 %v515, %v501
  %v712 = vpack.c.b16 %v516, %v502
  %v713 = vpack.c.b16 %v517, %v503
  %v714 = vpack.c.b16 %v518, %v504
  %v715 = vpack.c.b16 %v533, %v519
  %v716 = vpack.c.b16 %v534, %v520
  %v717 = vpack.c.b16 %v535, %v521
  %v718 = vpack.c.b16 %v536, %v522
  %v719 = vpack.c.b16 %v537, %v523
  %v720 = vpack.c.b16 %v538, %v524
  %v721 = vpack.c.b16 %v539, %v525
  %v722 = vpack.c.b16 %v540, %v526
  %v723 = vpack.c.b16 %v541, %v527
  %v724 = vpack.c.b16 %v542, %v528
  %v725 = vpack.c.b16 %v543, %v529
  %v726 = vpack.c.b16 %v544, %v530
  %v727 = vpack.c.b16 %v545, %v531
  %v728 = vpack.c.b16 %v546, %v532
  %v729 = vpack.c.b16 %v561, %v547
  %v730 = vpack.c.b16 %v562, %v548
  %v731 = vpack.c.b16 %v563, %v549
  %v732 = vpack.c.b16 %v564, %v550
  %v733 = vpack.c.b16 %v565, %v551
  %v734 = vpack.c.b16 %v566, %v552
  %v735 = vpack.c.b16 %v567, %v553
  %v736 = vpack.c.b16 %v568, %v554
  %v737 = vpack.c.b16 %v569, %v555
  %v738 = vpack.c.b16 %v570, %v556
  %v739 = vpack.c.b16 %v571, %v557
  %v740 = vpack.c.b16 %v572, %v558
  %v741 = vpack.c.b16 %v573, %v559
  %v742 = vpack.c.b16 %v574, %v560
  %v743 = vpack.c.b16 %v589, %v575
  %v744 = vpack.c.b16 %v590, %v576
  %v745 = vpack.c.b16 %v591, %v577
  %v746 = vpack.c.b16 %v592, %v578
  %v747 = vpack.c.b16 %v593, %v579
  %v748 = vpack.c.b16 %v594, %v580
  %v749 = vpack.c.b16 %v595, %v581
  %v750 = vpack.c.b16 %v596, %v582
  %v751 = vpack.c.b16 %v597, %v583
  %v752 = vpack.c.b16 %v598, %v584
  %v753 = vpack.c.b16 %v599, %v585
  %v754 = vpack.c.b16 %v600, %v586
  %v755 = vpack.c.b16 %v601, %v587
  %v756 = vpack.c.b16 %v602, %v588
  %v757 = vpack.c.b16 %v617, %v603
  %v758 = vpack.c.b16 %v618, %v604
  %v759 = vpack.c.b16 %v619, %v605
  %v760 = vpack.c.b16 %v620, %v606
  %v761 = vpack.c.b16 %v621, %v607
  %v762 = vpack.c.b16 %v622, %v608
  %v763 = vpack.c.b16 %v623, %v609
  %v764 = vpack.c.b16 %v624, %v610
  %v765 = vpack.c.b16 %v625, %v611
  %v766 = vpack.c.b16 %v626, %v612
  %v767 = vpack.c.b16 %v627, %v613
  %v768 = vpack.c.b16 %v628, %v614
  %v769 = vpack.c.b16 %v629, %v615
  %v770 = vpack.c.b16 %v630, %v616
  %v771 = vpack.c.b16 %v645, %v631
  %v772 = vpack.c.b16 %v646, %v632
  %v773 = vpack.c.b16 %v647, %v633
  %v774 = vpack.c.b16 %v648, %v634
  %v775 = vpack.c.b16 %v649, %v635
  %v776 = vpack.c.b16 %v650, %v636
  %v777 = vpack.c.b16 %v651, %v637
  %v778 = vpack.c.b16 %v652, %v638
  %v779 = vpack.c.b16 %v653, %v639
  %v780 = vpack.c.b16 %v654, %v640
  %v781 = vpack.c.b16 %v655, %v641
  %v782 = vpack.c.b16 %v656, %v642
  %v783 = vpack.c.b16 %v657, %v643
  %v784 = vpack.c.b16 %v658, %v644
  %v785 = vpack.c.b16 %v673, %v659
  %v786 = vpack.c.b16 %v674, %v660
  %v787 = vpack.c.b16 %v675, %v661
  %v788 = vpack.c.b16 %v676, %v662
  %v789 = vpack.c.b16 %v677, %v663
  %v790 = vpack.c.b16 %v678, %v664
  %v791 = vpack.c.b16 %v679, %v665
  %v792 = vpack.c.b16 %v680, %v666
  %v793 = vpack.c.b16 %v681, %v667
  %v794 = vpack.c.b16 %v682, %v668
  %v795 = vpack.c.b16 %v683, %v669
  %v796 = vpack.c.b16 %v684, %v670
  %v797 = vpack.c.b16 %v685, %v671
  %v798 = vpack.c.b16 %v686, %v672
  %v1123 = vunpack.c.l.b16 %v127
  %v1124 = vunpack.c.l.b16 %v128
  %v1125 = vunpack.c.l.b16 %v129
  %v1126 = vunpack.c.l.b16 %v130
  %v1127 = vunpack.c.l.b16 %v131
  %v1128 = vunpack.c.l.b16 %v132
  %v1129 = vunpack.c.l.b16 %v133
  %v1130 = vunpack.c.l.b16 %v134
  %v1131 = vunpack.c.l.b16 %v135
  %v1132 = vunpack.c.l.b16 %v136
  %v1133 = vunpack.c.l.b16 %v137
  %v1134 = vunpack.c.l.b16 %v138
  %v1135 = vunpack.c.l.b16 %v139
  %v1136 = vunpack.c.l.b16 %v140
  %v1137 = vunpack.c.l.b16 %v141
  %v1138 = vunpack.c.l.b16 %v142
  %v1139 = vunpack.c.l.b16 %v143
  %v1140 = vunpack.c.l.b16 %v144
  %v1141 = vunpack.c.l.b16 %v145
  %v1142 = vunpack.c.l.b16 %v146
  %v1143 = vunpack.c.l.b16 %v147
  %v1144 = vunpack.c.l.b16 %v148
  %v1145 = vunpack.c.l.b16 %v149
  %v1146 = vunpack.c.l.b16 %v150
  %v1147 = vunpack.c.l.b16 %v151
  %v1148 = vunpack.c.l.b16 %v152
  %v1149 = vunpack.c.l.b16 %v153
  %v1150 = vunpack.c.l.b16 %v154
  %v1151 = vunpack.c.l.b16 %v155
  %v1152 = vunpack.c.l.b16 %v156
  %v1153 = vunpack.c.l.b16 %v157
  %v1154 = vunpack.c.l.b16 %v158
  %v1155 = vunpack.c.l.b16 %v159
  %v1156 = vunpack.c.l.b16 %v160
  %v1157 = vunpack.c.l.b16 %v161
  %v1158 = vunpack.c.l.b16 %v162
  %v1159 = vunpack.c.l.b16 %v163
  %v1160 = vunpack.c.l.b16 %v164
  %v1161 = vunpack.c.l.b16 %v165
  %v1162 = vunpack.c.l.b16 %v166
  %v1163 = vunpack.c.l.b16 %v167
  %v1164 = vunpack.c.l.b16 %v168
  %v1165 = vunpack.c.l.b16 %v169
  %v1166 = vunpack.c.l.b16 %v170
  %v1167 = vunpack.c.l.b16 %v171
  %v1168 = vunpack.c.l.b16 %v172
  %v1169 = vunpack.c.l.b16 %v173
  %v1170 = vunpack.c.l.b16 %v174
  %v1171 = vunpack.c.l.b16 %v175
  %v1172 = vunpack.c.l.b16 %v176
  %v1173 = vunpack.c.l.b16 %v177
  %v1174 = vunpack.c.l.b16 %v178
  %v1175 = vunpack.c.l.b16 %v179
  %v1176 = vunpack.c.l.b16 %v180
  %v1177 = vunpack.c.l.b16 %v181
  %v1178 = vunpack.c.l.b16 %v182
  %v1179 = vunpack.c.l.b16 %v183
  %v1180 = vunpack.c.l.b16 %v184
  %v1181 = vunpack.c.l.b16 %v185
  %v1182 = vunpack.c.l.b16 %v186
  %v1183 = vunpack.c.l.b16 %v187
  %v1184 = vunpack.c.l.b16 %v188
  %v1185 = vunpack.c.l.b16 %v189
  %v1186 = vunpack.c.l.b16 %v190
  %v1187 = vunpack.c.l.b16 %v191
  %v1188 = vunpack.c.l.b16 %v192
  %v1189 = vunpack.c.l.b16 %v193
  %v1190 = vunpack.c.l.b16 %v194
  %v1191 = vunpack.c.l.b16 %v195
  %v1192 = vunpack.c.l.b16 %v196
  %v1193 = vunpack.c.l.b16 %v197
  %v1194 = vunpack.c.l.b16 %v198
  %v1195 = vunpack.c.l.b16 %v199
  %v1196 = vunpack.c.l.b16 %v200
  %v1197 = vunpack.c.l.b16 %v201
  %v1198 = vunpack.c.l.b16 %v202
  %v1199 = vunpack.c.l.b16 %v203
  %v1200 = vunpack.c.l.b16 %v204
  %v1201 = vunpack.c.l.b16 %v205
  %v1202 = vunpack.c.l.b16 %v206
  %v1203 = vunpack.c.l.b16 %v207
  %v1204 = vunpack.c.l.b16 %v208
  %v1205 = vunpack.c.l.b16 %v209
  %v1206 = vunpack.c.l.b16 %v210
  %v1207 = vunpack.c.l.b16 %v211
  %v1208 = vunpack.c.l.b16 %v212
  %v1209 = vunpack.c.l.b16 %v213
  %v1210 = vunpack.c.l.b16 %v214
  %v1211 = vunpack.c.l.b16 %v215
  %v1212 = vunpack.c.l.b16 %v216
  %v1213 = vunpack.c.l.b16 %v217
  %v1214 = vunpack.c.l.b16 %v218
  %v1215 = vunpack.c.l.b16 %v219
  %v1216 = vunpack.c.l.b16 %v220
  %v1217 = vunpack.c.l.b16 %v221
  %v1218 = vunpack.c.l.b16 %v222
  %v1219 = vunpack.c.l.b16 %v223
  %v1220 = vunpack.c.l.b16 %v224
  %v1221 = vunpack.c.l.b16 %v225
  %v1222 = vunpack.c.l.b16 %v226
  %v1223 = vunpack.c.l.b16 %v227
  %v1224 = vunpack.c.l.b16 %v228
  %v1225 = vunpack.c.l.b16 %v229
  %v1226 = vunpack.c.l.b16 %v230
  %v1227 = vunpack.c.l.b16 %v231
  %v1228 = vunpack.c.l.b16 %v232
  %v1229 = vunpack.c.l.b16 %v233
  %v1230 = vunpack.c.l.b16 %v234
  %v1231 = vunpack.c.l.b16 %v235
  %v1232 = vunpack.c.l.b16 %v236
  %v1233 = vunpack.c.l.b16 %v237
  %v1234 = vunpack.c.l.b16 %v238
  %v1235 = vunpack.c.l.b16 %v239
  %v1236 = vunpack.c.l.b16 %v240
  %v1237 = vunpack.c.l.b16 %v241
  %v1238 = vunpack.c.l.b16 %v242
  %v1239 = vunpack.c.l.b16 %v243
  %v1240 = vunpack.c.l.b16 %v244
  %v1241 = vunpack.c.l.b16 %v245
  %v1242 = vunpack.c.l.b16 %v246
  %v1243 = vunpack.c.l.b16 %v247
  %v1244 = vunpack.c.l.b16 %v248
  %v1245 = vunpack.c.l.b16 %v249
  %v1246 = vunpack.c.l.b16 %v250
  %v1247 = vunpack.c.l.b16 %v251
  %v1248 = vunpack.c.l.b16 %v252
  %v1249 = vunpack.c.l.b16 %v253
  %v1250 = vunpack.c.l.b16 %v254
  %v1251 = vunpack.c.l.b16 %v255
  %v1252 = vunpack.c.l.b16 %v256
  %v1253 = vunpack.c.l.b16 %v257
  %v1254 = vunpack.c.l.b16 %v258
  %v1255 = vunpack.c.l.b16 %v259
  %v1256 = vunpack.c.l.b16 %v260
  %v1257 = vunpack.c.l.b16 %v261
  %v1258 = vunpack.c.l.b16 %v262
  %v1259 = vunpack.c.l.b16 %v263
  %v1260 = vunpack.c.l.b16 %v264
  %v1261 = vunpack.c.l.b16 %v265
  %v1262 = vunpack.c.l.b16 %v266
  %v1263 = vunpack.c.l.b16 %v267
  %v1264 = vunpack.c.l.b16 %v268
  %v1265 = vunpack.c.l.b16 %v269
  %v1266 = vunpack.c.l.b16 %v270
  %v1267 = vunpack.c.l.b16 %v271
  %v1268 = vunpack.c.l.b16 %v272
  %v1269 = vunpack.c.l.b16 %v273
  %v1270 = vunpack.c.l.b16 %v274
  %v1271 = vunpack.c.l.b16 %v275
  %v1272 = vunpack.c.l.b16 %v276
  %v1273 = vunpack.c.l.b16 %v277
  %v1274 = vunpack.c.l.b16 %v278
  %v1275 = vunpack.c.l.b16 %v279
  %v1276 = vunpack.c.l.b16 %v280
  %v1277 = vunpack.c.l.b16 %v281
  %v1278 = vunpack.c.l.b16 %v282
  %v1279 = vunpack.c.l.b16 %v283
  %v1280 = vunpack.c.l.b16 %v284
  %v1281 = vunpack.c.l.b16 %v285
  %v1282 = vunpack.c.l.b16 %v286
  %v1283 = vunpack.c.l.b16 %v287
  %v1284 = vunpack.c.l.b16 %v288
  %v1285 = vunpack.c.l.b16 %v289
  %v1286 = vunpack.c.l.b16 %v290
  %v1287 = vunpack.c.l.b16 %v291
  %v1288 = vunpack.c.l.b16 %v292
  %v1289 = vunpack.c.l.b16 %v293
  %v1290 = vunpack.c.l.b16 %v294
  %v1291 = vunpack.c.l.b16 %v295
  %v1292 = vunpack.c.l.b16 %v296
  %v1293 = vunpack.c.l.b16 %v297
  %v1294 = vunpack.c.l.b16 %v298
  %v1295 = vunpack.c.l.b16 %v299
  %v1296 = vunpack.c.l.b16 %v300
  %v1297 = vunpack.c.l.b16 %v301
  %v1298 = vunpack.c.l.b16 %v302
  %v1299 = vunpack.c.l.b16 %v303
  %v1300 = vunpack.c.l.b16 %v304
  %v1301 = vunpack.c.l.b16 %v305
  %v1302 = vunpack.c.l.b16 %v306
  %v1303 = vunpack.c.l.b16 %v307
  %v1304 = vunpack.c.l.b16 %v308
  %v1305 = vunpack.c.l.b16 %v309
  %v1306 = vunpack.c.l.b16 %v310
  %v1307 = vunpack.c.l.b16 %v311
  %v1308 = vunpack.c.l.b16 %v312
  %v1309 = vunpack.c.l.b16 %v313
  %v1310 = vunpack.c.l.b16 %v314
  %v1311 = vunpack.c.l.b16 %v315
  %v1312 = vunpack.c.l.b16 %v316
  %v1313 = vunpack.c.l.b16 %v317
  %v1314 = vunpack.c.l.b16 %v318
  %v1315 = vunpack.c.l.b16 %v319
  %v1316 = vunpack.c.l.b16 %v320
  %v1317 = vunpack.c.l.b16 %v321
  %v1318 = vunpack.c.l.b16 %v322
  %v1319 = vunpack.c.l.b16 %v323
  %v1320 = vunpack.c.l.b16 %v324
  %v1321 = vunpack.c.l.b16 %v325
  %v1322 = vunpack.c.l.b16 %v326
  %v1323 = vunpack.c.l.b16 %v327
  %v1324 = vunpack.c.l.b16 %v328
  %v1325 = vunpack.c.l.b16 %v329
  %v1326 = vunpack.c.l.b16 %v330
  %v1327 = vunpack.c.l.b16 %v331
  %v1328 = vunpack.c.l.b16 %v332
  %v1329 = vunpack.c.l.b16 %v333
  %v1330 = vunpack.c.l.b16 %v334
  %v1331 = vunpack.c.l.b16 %v335
  %v1332 = vunpack.c.l.b16 %v336
  %v1333 = vunpack.c.l.b16 %v337
  %v1334 = vunpack.c.l.b16 %v338
  %v1335 = vunpack.c.l.b16 %v339
  %v1336 = vunpack.c.l.b16 %v340
  %v1337 = vunpack.c.l.b16 %v341
  %v1338 = vunpack.c.l.b16 %v342
  %v1339 = vunpack.c.l.b16 %v343
  %v1340 = vunpack.c.l.b16 %v344
  %v1341 = vunpack.c.l.b16 %v345
  %v1342 = vunpack.c.l.b16 %v346
  %v1343 = vpack.c.b16 %v1124, %v1123
  %v1344 = vpack.c.b16 %v1126, %v1125
  %v1345 = vpack.c.b16 %v1128, %v1127
  %v1346 = vpack.c.b16 %v1130, %v1129
  %v1347 = vpack.c.b16 %v1132, %v1131
  %v1348 = vpack.c.b16 %v1134, %v1133
  %v1349 = vpack.c.b16 %v1136, %v1135
  %v1350 = vpack.c.b16 %v1138, %v1137
  %v1351 = vpack.c.b16 %v1140, %v1139
  %v1352 = vpack.c.b16 %v1142, %v1141
  %v1353 = vpack.c.b16 %v1144, %v1143
  %v1354 = vpack.c.b16 %v1146, %v1145
  %v1355 = vpack.c.b16 %v1148, %v1147
  %v1356 = vpack.c.b16 %v1150, %v1149
  %v1357 = vpack.c.b16 %v1152, %v1151
  %v1358 = vpack.c.b16 %v1154, %v1153
  %v1359 = vpack.c.b16 %v1156, %v1155
  %v1360 = vpack.c.b16 %v1158, %v1157
  %v1361 = vpack.c.b16 %v1160, %v1159
  %v1362 = vpack.c.b16 %v1162, %v1161
  %v1363 = vpack.c.b16 %v1164, %v1163
  %v1364 = vpack.c.b16 %v1166, %v1165
  %v1365 = vpack.c.b16 %v1168, %v1167
  %v1366 = vpack.c.b16 %v1170, %v1169
  %v1367 = vpack.c.b16 %v1172, %v1171
  %v1368 = vpack.c.b16 %v1174, %v1173
  %v1369 = vpack.c.b16 %v1176, %v1175
  %v1370 = vpack.c.b16 %v1178, %v1177
  %v1371 = vpack.c.b16 %v1180, %v1179
  %v1372 = vpack.c.b16 %v1182, %v1181
  %v1373 = vpack.c.b16 %v1184, %v1183
  %v1374 = vpack.c.b16 %v1186, %v1185
  %v1375 = vpack.c.b16 %v1188, %v1187
  %v1376 = vpack.c.b16 %v1190, %v1189
  %v1377 = vpack.c.b16 %v1192, %v1191
  %v1378 = vpack.c.b16 %v1194, %v1193
  %v1379 = vpack.c.b16 %v1196, %v1195
  %v1380 = vpack.c.b16 %v1198, %v1197
  %v1381 = vpack.c.b16 %v1200, %v1199
  %v1382 = vpack.c.b16 %v1202, %v1201
  %v1383 = vpack.c.b16 %v1204, %v1203
  %v1384 = vpack.c.b16 %v1206, %v1205
  %v1385 = vpack.c.b16 %v1208, %v1207
  %v1386 = vpack.c.b16 %v1210, %v1209
  %v1387 = vpack.c.b16 %v1212, %v1211
  %v1388 = vpack.c.b16 %v1214, %v1213
  %v1389 = vpack.c.b16 %v1216, %v1215
  %v1390 = vpack.c.b16 %v1218, %v1217
  %v1391 = vpack.c.b16 %v1220, %v1219
  %v1392 = vpack.c.b16 %v1222, %v1221
  %v1393 = vpack.c.b16 %v1224, %v1223
  %v1394 = vpack.c.b16 %v1226, %v1225
  %v1395 = vpack.c.b16 %v1228, %v1227
  %v1396 = vpack.c.b16 %v1230, %v1229
  %v1397 = vpack.c.b16 %v1232, %v1231
  %v1398 = vpack.c.b16 %v1234, %v1233
  %v1399 = vpack.c.b16 %v1236, %v1235
  %v1400 = vpack.c.b16 %v1238, %v1237
  %v1401 = vpack.c.b16 %v1240, %v1239
  %v1402 = vpack.c.b16 %v1242, %v1241
  %v1403 = vpack.c.b16 %v1244, %v1243
  %v1404 = vpack.c.b16 %v1246, %v1245
  %v1405 = vpack.c.b16 %v1248, %v1247
  %v1406 = vpack.c.b16 %v1250, %v1249
  %v1407 = vpack.c.b16 %v1252, %v1251
  %v1408 = vpack.c.b16 %v1254, %v1253
  %v1409 = vpack.c.b16 %v1256, %v1255
  %v1410 = vpack.c.b16 %v1258, %v1257
  %v1411 = vpack.c.b16 %v1260, %v1259
  %v1412 = vpack.c.b16 %v1262, %v1261
  %v1413 = vpack.c.b16 %v1264, %v1263
  %v1414 = vpack.c.b16 %v1266, %v1265
  %v1415 = vpack.c.b16 %v1268, %v1267
  %v1416 = vpack.c.b16 %v1270, %v1269
  %v1417 = vpack.c.b16 %v1272, %v1271
  %v1418 = vpack.c.b16 %v1274, %v1273
  %v1419 = vpack.c.b16 %v1276, %v1275
  %v1420 = vpack.c.b16 %v1278, %v1277
  %v1421 = vpack.c.b16 %v1280, %v1279
  %v1422 = vpack.c.b16 %v1282, %v1281
  %v1423 = vpack.c.b16 %v1284, %v1283
  %v1424 = vpack.c.b16 %v1286, %v1285
  %v1425 = vpack.c.b16 %v1288, %v1287
  %v1426 = vpack.c.b16 %v1290, %v1289
  %v1427 = vpack.c.b16 %v1292, %v1291
  %v1428 = vpack.c.b16 %v1294, %v1293
  %v1429 = vpack.c.b16 %v1296, %v1295
  %v1430 = vpack.c.b16 %v1298, %v1297
  %v1431 = vpack.c.b16 %v1300, %v1299
  %v1432 = vpack.c.b16 %v1302, %v1301
  %v1433 = vpack.c.b16 %v1304, %v1303
  %v1434 = vpack.c.b16 %v1306, %v1305
  %v1435 = vpack.c.b16 %v1308, %v1307
  %v1436 = vpack.c.b16 %v1310, %v1309
  %v1437 = vpack.c.b16 %v1312, %v1311
  %v1438 = vpack.c.b16 %v1314, %v1313
  %v1439 = vpack.c.b16 %v1316, %v1315
  %v1440 = vpack.c.b16 %v1318, %v1317
  %v1441 = vpack.c.b16 %v1320, %v1319
  %v1442 = vpack.c.b16 %v1322, %v1321
  %v1443 = vpack.c.b16 %v1324, %v1323
  %v1444 = vpack.c.b16 %v1326, %v1325
  %v1445 = vpack.c.b16 %v1328, %v1327
  %v1446 = vpack.c.b16 %v1330, %v1329
  %v1447 = vpack.c.b16 %v1332, %v1331
  %v1448 = vpack.c.b16 %v1334, %v1333
  %v1449 = vpack.c.b16 %v1336, %v1335
  %v1450 = vpack.c.b16 %v1338, %v1337
  %v1451 = vpack.c.b16 %v1340, %v1339
  %v1452 = vpack.c.b16 %v1342, %v1341
  %vm1563 = vcmask 785408
  %v1565 = vsel %vm1563, %v700, 0
  %v1568 = vsel %vm1563, %v714, 0
  %v1571 = vsel %vm1563, %v728, 0
  %v1574 = vsel %vm1563, %v742, 0
  %v1577 = vsel %vm1563, %v756, 0
  %v1580 = vsel %vm1563, %v770, 0
  %v1583 = vsel %vm1563, %v784, 0
  %v1586 = vsel %vm1563, %v798, 0
  %1588 = vmatpush.bf16.msra.mxu0 %v1350
  %1589 = vmatpush.bf16.msra.mxu0 %v1349
  %1590 = vmatpush.bf16.msra.mxu0 %v1348
  %1591 = vmatpush.bf16.msra.mxu0 %v1347
  %1592 = vmatpush.bf16.msra.mxu0 %v1346
  %1593 = vmatpush.bf16.msra.mxu0 %v1345
  %1594 = vmatpush.bf16.msra.mxu0 %v1344
  %1595 = vmatpush.bf16.msra.mxu0 %v1343
  %1596 = vmatmul.bf16.gmra.mxu0 %v687
  %v1597 = vpop.f32.mrf.mxu0
  %v1598 = vadd.f32 %v349, %v1597
  %v1599 = vpop.f32.mrf.mxu0
  %v1600 = vadd.f32 %v349, %v1599
  %1601 = vmatmul.bf16.gmra.mxu0 %v701
  %v1602 = vpop.f32.mrf.mxu0
  %v1603 = vadd.f32 %v349, %v1602
  %v1604 = vpop.f32.mrf.mxu0
  %v1605 = vadd.f32 %v349, %v1604
  %1606 = vmatmul.bf16.gmra.mxu0 %v715
  %v1607 = vpop.f32.mrf.mxu0
  %v1608 = vadd.f32 %v349, %v1607
  %v1609 = vpop.f32.mrf.mxu0
  %v1610 = vadd.f32 %v349, %v1609
  %1611 = vmatmul.bf16.gmra.mxu0 %v729
  %v1612 = vpop.f32.mrf.mxu0
  %v1613 = vadd.f32 %v349, %v1612
  %v1614 = vpop.f32.mrf.mxu0
  %v1615 = vadd.f32 %v349, %v1614
  %1616 = vmatmul.bf16.gmra.mxu0 %v743
  %v1617 = vpop.f32.mrf.mxu0
  %v1618 = vadd.f32 %v349, %v1617
  %v1619 = vpop.f32.mrf.mxu0
  %v1620 = vadd.f32 %v349, %v1619
  %1621 = vmatmul.bf16.gmra.mxu0 %v757
  %v1622 = vpop.f32.mrf.mxu0
  %v1623 = vadd.f32 %v349, %v1622
  %v1624 = vpop.f32.mrf.mxu0
  %v1625 = vadd.f32 %v349, %v1624
  %1626 = vmatmul.bf16.gmra.mxu0 %v771
  %v1627 = vpop.f32.mrf.mxu0
  %v1628 = vadd.f32 %v349, %v1627
  %v1629 = vpop.f32.mrf.mxu0
  %v1630 = vadd.f32 %v349, %v1629
  %1631 = vmatmul.bf16.gmra.mxu0 %v785
  %v1632 = vpop.f32.mrf.mxu0
  %v1633 = vadd.f32 %v349, %v1632
  %v1634 = vpop.f32.mrf.mxu0
  %v1635 = vadd.f32 %v349, %v1634
  %1636 = vdwg.mxu0
  %1637 = vmatpush.bf16.msra.mxu0 %v1358
  %1638 = vmatpush.bf16.msra.mxu0 %v1357
  %1639 = vmatpush.bf16.msra.mxu0 %v1356
  %1640 = vmatpush.bf16.msra.mxu0 %v1355
  %1641 = vmatpush.bf16.msra.mxu0 %v1354
  %1642 = vmatpush.bf16.msra.mxu0 %v1353
  %1643 = vmatpush.bf16.msra.mxu0 %v1352
  %1644 = vmatpush.bf16.msra.mxu0 %v1351
  %1645 = vmatmul.bf16.gmra.mxu0 %v688
  %v1646 = vpop.f32.mrf.mxu0
  %v1647 = vadd.f32 %v1598, %v1646
  %v1648 = vpop.f32.mrf.mxu0
  %v1649 = vadd.f32 %v1600, %v1648
  %1650 = vmatmul.bf16.gmra.mxu0 %v702
  %v1651 = vpop.f32.mrf.mxu0
  %v1652 = vadd.f32 %v1603, %v1651
  %v1653 = vpop.f32.mrf.mxu0
  %v1654 = vadd.f32 %v1605, %v1653
  %1655 = vmatmul.bf16.gmra.mxu0 %v716
  %v1656 = vpop.f32.mrf.mxu0
  %v1657 = vadd.f32 %v1608, %v1656
  %v1658 = vpop.f32.mrf.mxu0
  %v1659 = vadd.f32 %v1610, %v1658
  %1660 = vmatmul.bf16.gmra.mxu0 %v730
  %v1661 = vpop.f32.mrf.mxu0
  %v1662 = vadd.f32 %v1613, %v1661
  %v1663 = vpop.f32.mrf.mxu0
  %v1664 = vadd.f32 %v1615, %v1663
  %1665 = vmatmul.bf16.gmra.mxu0 %v744
  %v1666 = vpop.f32.mrf.mxu0
  %v1667 = vadd.f32 %v1618, %v1666
  %v1668 = vpop.f32.mrf.mxu0
  %v1669 = vadd.f32 %v1620, %v1668
  %1670 = vmatmul.bf16.gmra.mxu0 %v758
  %v1671 = vpop.f32.mrf.mxu0
  %v1672 = vadd.f32 %v1623, %v1671
  %v1673 = vpop.f32.mrf.mxu0
  %v1674 = vadd.f32 %v1625, %v1673
  %1675 = vmatmul.bf16.gmra.mxu0 %v772
  %v1676 = vpop.f32.mrf.mxu0
  %v1677 = vadd.f32 %v1628, %v1676
  %v1678 = vpop.f32.mrf.mxu0
  %v1679 = vadd.f32 %v1630, %v1678
  %1680 = vmatmul.bf16.gmra.mxu0 %v786
  %v1681 = vpop.f32.mrf.mxu0
  %v1682 = vadd.f32 %v1633, %v1681
  %v1683 = vpop.f32.mrf.mxu0
  %v1684 = vadd.f32 %v1635, %v1683
  %1685 = vdwg.mxu0
  %1686 = vmatpush.bf16.msra.mxu0 %v1366
  %1687 = vmatpush.bf16.msra.mxu0 %v1365
  %1688 = vmatpush.bf16.msra.mxu0 %v1364
  %1689 = vmatpush.bf16.msra.mxu0 %v1363
  %1690 = vmatpush.bf16.msra.mxu0 %v1362
  %1691 = vmatpush.bf16.msra.mxu0 %v1361
  %1692 = vmatpush.bf16.msra.mxu0 %v1360
  %1693 = vmatpush.bf16.msra.mxu0 %v1359
  %1694 = vmatmul.bf16.gmra.mxu0 %v689
  %v1695 = vpop.f32.mrf.mxu0
  %v1696 = vadd.f32 %v1647, %v1695
  %v1697 = vpop.f32.mrf.mxu0
  %v1698 = vadd.f32 %v1649, %v1697
  %1699 = vmatmul.bf16.gmra.mxu0 %v703
  %v1700 = vpop.f32.mrf.mxu0
  %v1701 = vadd.f32 %v1652, %v1700
  %v1702 = vpop.f32.mrf.mxu0
  %v1703 = vadd.f32 %v1654, %v1702
  %1704 = vmatmul.bf16.gmra.mxu0 %v717
  %v1705 = vpop.f32.mrf.mxu0
  %v1706 = vadd.f32 %v1657, %v1705
  %v1707 = vpop.f32.mrf.mxu0
  %v1708 = vadd.f32 %v1659, %v1707
  %1709 = vmatmul.bf16.gmra.mxu0 %v731
  %v1710 = vpop.f32.mrf.mxu0
  %v1711 = vadd.f32 %v1662, %v1710
  %v1712 = vpop.f32.mrf.mxu0
  %v1713 = vadd.f32 %v1664, %v1712
  %1714 = vmatmul.bf16.gmra.mxu0 %v745
  %v1715 = vpop.f32.mrf.mxu0
  %v1716 = vadd.f32 %v1667, %v1715
  %v1717 = vpop.f32.mrf.mxu0
  %v1718 = vadd.f32 %v1669, %v1717
  %1719 = vmatmul.bf16.gmra.mxu0 %v759
  %v1720 = vpop.f32.mrf.mxu0
  %v1721 = vadd.f32 %v1672, %v1720
  %v1722 = vpop.f32.mrf.mxu0
  %v1723 = vadd.f32 %v1674, %v1722
  %1724 = vmatmul.bf16.gmra.mxu0 %v773
  %v1725 = vpop.f32.mrf.mxu0
  %v1726 = vadd.f32 %v1677, %v1725
  %v1727 = vpop.f32.mrf.mxu0
  %v1728 = vadd.f32 %v1679, %v1727
  %1729 = vmatmul.bf16.gmra.mxu0 %v787
  %v1730 = vpop.f32.mrf.mxu0
  %v1731 = vadd.f32 %v1682, %v1730
  %v1732 = vpop.f32.mrf.mxu0
  %v1733 = vadd.f32 %v1684, %v1732
  %1734 = vdwg.mxu0
  %1735 = vmatpush.bf16.msra.mxu0 %v1374
  %1736 = vmatpush.bf16.msra.mxu0 %v1373
  %1737 = vmatpush.bf16.msra.mxu0 %v1372
  %1738 = vmatpush.bf16.msra.mxu0 %v1371
  %1739 = vmatpush.bf16.msra.mxu0 %v1370
  %1740 = vmatpush.bf16.msra.mxu0 %v1369
  %1741 = vmatpush.bf16.msra.mxu0 %v1368
  %1742 = vmatpush.bf16.msra.mxu0 %v1367
  %1743 = vmatmul.bf16.gmra.mxu0 %v690
  %v1744 = vpop.f32.mrf.mxu0
  %v1745 = vadd.f32 %v1696, %v1744
  %v1746 = vpop.f32.mrf.mxu0
  %v1747 = vadd.f32 %v1698, %v1746
  %1748 = vmatmul.bf16.gmra.mxu0 %v704
  %v1749 = vpop.f32.mrf.mxu0
  %v1750 = vadd.f32 %v1701, %v1749
  %v1751 = vpop.f32.mrf.mxu0
  %v1752 = vadd.f32 %v1703, %v1751
  %1753 = vmatmul.bf16.gmra.mxu0 %v718
  %v1754 = vpop.f32.mrf.mxu0
  %v1755 = vadd.f32 %v1706, %v1754
  %v1756 = vpop.f32.mrf.mxu0
  %v1757 = vadd.f32 %v1708, %v1756
  %1758 = vmatmul.bf16.gmra.mxu0 %v732
  %v1759 = vpop.f32.mrf.mxu0
  %v1760 = vadd.f32 %v1711, %v1759
  %v1761 = vpop.f32.mrf.mxu0
  %v1762 = vadd.f32 %v1713, %v1761
  %1763 = vmatmul.bf16.gmra.mxu0 %v746
  %v1764 = vpop.f32.mrf.mxu0
  %v1765 = vadd.f32 %v1716, %v1764
  %v1766 = vpop.f32.mrf.mxu0
  %v1767 = vadd.f32 %v1718, %v1766
  %1768 = vmatmul.bf16.gmra.mxu0 %v760
  %v1769 = vpop.f32.mrf.mxu0
  %v1770 = vadd.f32 %v1721, %v1769
  %v1771 = vpop.f32.mrf.mxu0
  %v1772 = vadd.f32 %v1723, %v1771
  %1773 = vmatmul.bf16.gmra.mxu0 %v774
  %v1774 = vpop.f32.mrf.mxu0
  %v1775 = vadd.f32 %v1726, %v1774
  %v1776 = vpop.f32.mrf.mxu0
  %v1777 = vadd.f32 %v1728, %v1776
  %1778 = vmatmul.bf16.gmra.mxu0 %v788
  %v1779 = vpop.f32.mrf.mxu0
  %v1780 = vadd.f32 %v1731, %v1779
  %v1781 = vpop.f32.mrf.mxu0
  %v1782 = vadd.f32 %v1733, %v1781
  %1783 = vdwg.mxu0
  %1784 = vmatpush.bf16.msra.mxu0 %v1382
  %1785 = vmatpush.bf16.msra.mxu0 %v1381
  %1786 = vmatpush.bf16.msra.mxu0 %v1380
  %1787 = vmatpush.bf16.msra.mxu0 %v1379
  %1788 = vmatpush.bf16.msra.mxu0 %v1378
  %1789 = vmatpush.bf16.msra.mxu0 %v1377
  %1790 = vmatpush.bf16.msra.mxu0 %v1376
  %1791 = vmatpush.bf16.msra.mxu0 %v1375
  %1792 = vmatmul.bf16.gmra.mxu0 %v691
  %v1793 = vpop.f32.mrf.mxu0
  %v1794 = vadd.f32 %v1745, %v1793
  %v1795 = vpop.f32.mrf.mxu0
  %v1796 = vadd.f32 %v1747, %v1795
  %1797 = vmatmul.bf16.gmra.mxu0 %v705
  %v1798 = vpop.f32.mrf.mxu0
  %v1799 = vadd.f32 %v1750, %v1798
  %v1800 = vpop.f32.mrf.mxu0
  %v1801 = vadd.f32 %v1752, %v1800
  %1802 = vmatmul.bf16.gmra.mxu0 %v719
  %v1803 = vpop.f32.mrf.mxu0
  %v1804 = vadd.f32 %v1755, %v1803
  %v1805 = vpop.f32.mrf.mxu0
  %v1806 = vadd.f32 %v1757, %v1805
  %1807 = vmatmul.bf16.gmra.mxu0 %v733
  %v1808 = vpop.f32.mrf.mxu0
  %v1809 = vadd.f32 %v1760, %v1808
  %v1810 = vpop.f32.mrf.mxu0
  %v1811 = vadd.f32 %v1762, %v1810
  %1812 = vmatmul.bf16.gmra.mxu0 %v747
  %v1813 = vpop.f32.mrf.mxu0
  %v1814 = vadd.f32 %v1765, %v1813
  %v1815 = vpop.f32.mrf.mxu0
  %v1816 = vadd.f32 %v1767, %v1815
  %1817 = vmatmul.bf16.gmra.mxu0 %v761
  %v1818 = vpop.f32.mrf.mxu0
  %v1819 = vadd.f32 %v1770, %v1818
  %v1820 = vpop.f32.mrf.mxu0
  %v1821 = vadd.f32 %v1772, %v1820
  %1822 = vmatmul.bf16.gmra.mxu0 %v775
  %v1823 = vpop.f32.mrf.mxu0
  %v1824 = vadd.f32 %v1775, %v1823
  %v1825 = vpop.f32.mrf.mxu0
  %v1826 = vadd.f32 %v1777, %v1825
  %1827 = vmatmul.bf16.gmra.mxu0 %v789
  %v1828 = vpop.f32.mrf.mxu0
  %v1829 = vadd.f32 %v1780, %v1828
  %v1830 = vpop.f32.mrf.mxu0
  %v1831 = vadd.f32 %v1782, %v1830
  %1832 = vdwg.mxu0
  %1833 = vmatpush.bf16.msra.mxu0 %v1390
  %1834 = vmatpush.bf16.msra.mxu0 %v1389
  %1835 = vmatpush.bf16.msra.mxu0 %v1388
  %1836 = vmatpush.bf16.msra.mxu0 %v1387
  %1837 = vmatpush.bf16.msra.mxu0 %v1386
  %1838 = vmatpush.bf16.msra.mxu0 %v1385
  %1839 = vmatpush.bf16.msra.mxu0 %v1384
  %1840 = vmatpush.bf16.msra.mxu0 %v1383
  %1841 = vmatmul.bf16.gmra.mxu0 %v692
  %v1842 = vpop.f32.mrf.mxu0
  %v1843 = vadd.f32 %v1794, %v1842
  %v1844 = vpop.f32.mrf.mxu0
  %v1845 = vadd.f32 %v1796, %v1844
  %1846 = vmatmul.bf16.gmra.mxu0 %v706
  %v1847 = vpop.f32.mrf.mxu0
  %v1848 = vadd.f32 %v1799, %v1847
  %v1849 = vpop.f32.mrf.mxu0
  %v1850 = vadd.f32 %v1801, %v1849
  %1851 = vmatmul.bf16.gmra.mxu0 %v720
  %v1852 = vpop.f32.mrf.mxu0
  %v1853 = vadd.f32 %v1804, %v1852
  %v1854 = vpop.f32.mrf.mxu0
  %v1855 = vadd.f32 %v1806, %v1854
  %1856 = vmatmul.bf16.gmra.mxu0 %v734
  %v1857 = vpop.f32.mrf.mxu0
  %v1858 = vadd.f32 %v1809, %v1857
  %v1859 = vpop.f32.mrf.mxu0
  %v1860 = vadd.f32 %v1811, %v1859
  %1861 = vmatmul.bf16.gmra.mxu0 %v748
  %v1862 = vpop.f32.mrf.mxu0
  %v1863 = vadd.f32 %v1814, %v1862
  %v1864 = vpop.f32.mrf.mxu0
  %v1865 = vadd.f32 %v1816, %v1864
  %1866 = vmatmul.bf16.gmra.mxu0 %v762
  %v1867 = vpop.f32.mrf.mxu0
  %v1868 = vadd.f32 %v1819, %v1867
  %v1869 = vpop.f32.mrf.mxu0
  %v1870 = vadd.f32 %v1821, %v1869
  %1871 = vmatmul.bf16.gmra.mxu0 %v776
  %v1872 = vpop.f32.mrf.mxu0
  %v1873 = vadd.f32 %v1824, %v1872
  %v1874 = vpop.f32.mrf.mxu0
  %v1875 = vadd.f32 %v1826, %v1874
  %1876 = vmatmul.bf16.gmra.mxu0 %v790
  %v1877 = vpop.f32.mrf.mxu0
  %v1878 = vadd.f32 %v1829, %v1877
  %v1879 = vpop.f32.mrf.mxu0
  %v1880 = vadd.f32 %v1831, %v1879
  %1881 = vdwg.mxu0
  %1882 = vmatpush.bf16.msra.mxu0 %v1398
  %1883 = vmatpush.bf16.msra.mxu0 %v1397
  %1884 = vmatpush.bf16.msra.mxu0 %v1396
  %1885 = vmatpush.bf16.msra.mxu0 %v1395
  %1886 = vmatpush.bf16.msra.mxu0 %v1394
  %1887 = vmatpush.bf16.msra.mxu0 %v1393
  %1888 = vmatpush.bf16.msra.mxu0 %v1392
  %1889 = vmatpush.bf16.msra.mxu0 %v1391
  %1890 = vmatmul.bf16.gmra.mxu0 %v693
  %v1891 = vpop.f32.mrf.mxu0
  %v1892 = vadd.f32 %v1843, %v1891
  %v1893 = vpop.f32.mrf.mxu0
  %v1894 = vadd.f32 %v1845, %v1893
  %1895 = vmatmul.bf16.gmra.mxu0 %v707
  %v1896 = vpop.f32.mrf.mxu0
  %v1897 = vadd.f32 %v1848, %v1896
  %v1898 = vpop.f32.mrf.mxu0
  %v1899 = vadd.f32 %v1850, %v1898
  %1900 = vmatmul.bf16.gmra.mxu0 %v721
  %v1901 = vpop.f32.mrf.mxu0
  %v1902 = vadd.f32 %v1853, %v1901
  %v1903 = vpop.f32.mrf.mxu0
  %v1904 = vadd.f32 %v1855, %v1903
  %1905 = vmatmul.bf16.gmra.mxu0 %v735
  %v1906 = vpop.f32.mrf.mxu0
  %v1907 = vadd.f32 %v1858, %v1906
  %v1908 = vpop.f32.mrf.mxu0
  %v1909 = vadd.f32 %v1860, %v1908
  %1910 = vmatmul.bf16.gmra.mxu0 %v749
  %v1911 = vpop.f32.mrf.mxu0
  %v1912 = vadd.f32 %v1863, %v1911
  %v1913 = vpop.f32.mrf.mxu0
  %v1914 = vadd.f32 %v1865, %v1913
  %1915 = vmatmul.bf16.gmra.mxu0 %v763
  %v1916 = vpop.f32.mrf.mxu0
  %v1917 = vadd.f32 %v1868, %v1916
  %v1918 = vpop.f32.mrf.mxu0
  %v1919 = vadd.f32 %v1870, %v1918
  %1920 = vmatmul.bf16.gmra.mxu0 %v777
  %v1921 = vpop.f32.mrf.mxu0
  %v1922 = vadd.f32 %v1873, %v1921
  %v1923 = vpop.f32.mrf.mxu0
  %v1924 = vadd.f32 %v1875, %v1923
  %1925 = vmatmul.bf16.gmra.mxu0 %v791
  %v1926 = vpop.f32.mrf.mxu0
  %v1927 = vadd.f32 %v1878, %v1926
  %v1928 = vpop.f32.mrf.mxu0
  %v1929 = vadd.f32 %v1880, %v1928
  %1930 = vdwg.mxu0
  %1931 = vmatpush.bf16.msra.mxu0 %v1406
  %1932 = vmatpush.bf16.msra.mxu0 %v1405
  %1933 = vmatpush.bf16.msra.mxu0 %v1404
  %1934 = vmatpush.bf16.msra.mxu0 %v1403
  %1935 = vmatpush.bf16.msra.mxu0 %v1402
  %1936 = vmatpush.bf16.msra.mxu0 %v1401
  %1937 = vmatpush.bf16.msra.mxu0 %v1400
  %1938 = vmatpush.bf16.msra.mxu0 %v1399
  %1939 = vmatmul.bf16.gmra.mxu0 %v694
  %v1940 = vpop.f32.mrf.mxu0
  %v1941 = vadd.f32 %v1892, %v1940
  %v1942 = vpop.f32.mrf.mxu0
  %v1943 = vadd.f32 %v1894, %v1942
  %1944 = vmatmul.bf16.gmra.mxu0 %v708
  %v1945 = vpop.f32.mrf.mxu0
  %v1946 = vadd.f32 %v1897, %v1945
  %v1947 = vpop.f32.mrf.mxu0
  %v1948 = vadd.f32 %v1899, %v1947
  %1949 = vmatmul.bf16.gmra.mxu0 %v722
  %v1950 = vpop.f32.mrf.mxu0
  %v1951 = vadd.f32 %v1902, %v1950
  %v1952 = vpop.f32.mrf.mxu0
  %v1953 = vadd.f32 %v1904, %v1952
  %1954 = vmatmul.bf16.gmra.mxu0 %v736
  %v1955 = vpop.f32.mrf.mxu0
  %v1956 = vadd.f32 %v1907, %v1955
  %v1957 = vpop.f32.mrf.mxu0
  %v1958 = vadd.f32 %v1909, %v1957
  %1959 = vmatmul.bf16.gmra.mxu0 %v750
  %v1960 = vpop.f32.mrf.mxu0
  %v1961 = vadd.f32 %v1912, %v1960
  %v1962 = vpop.f32.mrf.mxu0
  %v1963 = vadd.f32 %v1914, %v1962
  %1964 = vmatmul.bf16.gmra.mxu0 %v764
  %v1965 = vpop.f32.mrf.mxu0
  %v1966 = vadd.f32 %v1917, %v1965
  %v1967 = vpop.f32.mrf.mxu0
  %v1968 = vadd.f32 %v1919, %v1967
  %1969 = vmatmul.bf16.gmra.mxu0 %v778
  %v1970 = vpop.f32.mrf.mxu0
  %v1971 = vadd.f32 %v1922, %v1970
  %v1972 = vpop.f32.mrf.mxu0
  %v1973 = vadd.f32 %v1924, %v1972
  %1974 = vmatmul.bf16.gmra.mxu0 %v792
  %v1975 = vpop.f32.mrf.mxu0
  %v1976 = vadd.f32 %v1927, %v1975
  %v1977 = vpop.f32.mrf.mxu0
  %v1978 = vadd.f32 %v1929, %v1977
  %1979 = vdwg.mxu0
  %1980 = vmatpush.bf16.msra.mxu0 %v1414
  %1981 = vmatpush.bf16.msra.mxu0 %v1413
  %1982 = vmatpush.bf16.msra.mxu0 %v1412
  %1983 = vmatpush.bf16.msra.mxu0 %v1411
  %1984 = vmatpush.bf16.msra.mxu0 %v1410
  %1985 = vmatpush.bf16.msra.mxu0 %v1409
  %1986 = vmatpush.bf16.msra.mxu0 %v1408
  %1987 = vmatpush.bf16.msra.mxu0 %v1407
  %1988 = vmatmul.bf16.gmra.mxu0 %v695
  %v1989 = vpop.f32.mrf.mxu0
  %v1990 = vadd.f32 %v1941, %v1989
  %v1991 = vpop.f32.mrf.mxu0
  %v1992 = vadd.f32 %v1943, %v1991
  %1993 = vmatmul.bf16.gmra.mxu0 %v709
  %v1994 = vpop.f32.mrf.mxu0
  %v1995 = vadd.f32 %v1946, %v1994
  %v1996 = vpop.f32.mrf.mxu0
  %v1997 = vadd.f32 %v1948, %v1996
  %1998 = vmatmul.bf16.gmra.mxu0 %v723
  %v1999 = vpop.f32.mrf.mxu0
  %v2000 = vadd.f32 %v1951, %v1999
  %v2001 = vpop.f32.mrf.mxu0
  %v2002 = vadd.f32 %v1953, %v2001
  %2003 = vmatmul.bf16.gmra.mxu0 %v737
  %v2004 = vpop.f32.mrf.mxu0
  %v2005 = vadd.f32 %v1956, %v2004
  %v2006 = vpop.f32.mrf.mxu0
  %v2007 = vadd.f32 %v1958, %v2006
  %2008 = vmatmul.bf16.gmra.mxu0 %v751
  %v2009 = vpop.f32.mrf.mxu0
  %v2010 = vadd.f32 %v1961, %v2009
  %v2011 = vpop.f32.mrf.mxu0
  %v2012 = vadd.f32 %v1963, %v2011
  %2013 = vmatmul.bf16.gmra.mxu0 %v765
  %v2014 = vpop.f32.mrf.mxu0
  %v2015 = vadd.f32 %v1966, %v2014
  %v2016 = vpop.f32.mrf.mxu0
  %v2017 = vadd.f32 %v1968, %v2016
  %2018 = vmatmul.bf16.gmra.mxu0 %v779
  %v2019 = vpop.f32.mrf.mxu0
  %v2020 = vadd.f32 %v1971, %v2019
  %v2021 = vpop.f32.mrf.mxu0
  %v2022 = vadd.f32 %v1973, %v2021
  %2023 = vmatmul.bf16.gmra.mxu0 %v793
  %v2024 = vpop.f32.mrf.mxu0
  %v2025 = vadd.f32 %v1976, %v2024
  %v2026 = vpop.f32.mrf.mxu0
  %v2027 = vadd.f32 %v1978, %v2026
  %2028 = vdwg.mxu0
  %2029 = vmatpush.bf16.msra.mxu0 %v1422
  %2030 = vmatpush.bf16.msra.mxu0 %v1421
  %2031 = vmatpush.bf16.msra.mxu0 %v1420
  %2032 = vmatpush.bf16.msra.mxu0 %v1419
  %2033 = vmatpush.bf16.msra.mxu0 %v1418
  %2034 = vmatpush.bf16.msra.mxu0 %v1417
  %2035 = vmatpush.bf16.msra.mxu0 %v1416
  %2036 = vmatpush.bf16.msra.mxu0 %v1415
  %2037 = vmatmul.bf16.gmra.mxu0 %v696
  %v2038 = vpop.f32.mrf.mxu0
  %v2039 = vadd.f32 %v1990, %v2038
  %v2040 = vpop.f32.mrf.mxu0
  %v2041 = vadd.f32 %v1992, %v2040
  %2042 = vmatmul.bf16.gmra.mxu0 %v710
  %v2043 = vpop.f32.mrf.mxu0
  %v2044 = vadd.f32 %v1995, %v2043
  %v2045 = vpop.f32.mrf.mxu0
  %v2046 = vadd.f32 %v1997, %v2045
  %2047 = vmatmul.bf16.gmra.mxu0 %v724
  %v2048 = vpop.f32.mrf.mxu0
  %v2049 = vadd.f32 %v2000, %v2048
  %v2050 = vpop.f32.mrf.mxu0
  %v2051 = vadd.f32 %v2002, %v2050
  %2052 = vmatmul.bf16.gmra.mxu0 %v738
  %v2053 = vpop.f32.mrf.mxu0
  %v2054 = vadd.f32 %v2005, %v2053
  %v2055 = vpop.f32.mrf.mxu0
  %v2056 = vadd.f32 %v2007, %v2055
  %2057 = vmatmul.bf16.gmra.mxu0 %v752
  %v2058 = vpop.f32.mrf.mxu0
  %v2059 = vadd.f32 %v2010, %v2058
  %v2060 = vpop.f32.mrf.mxu0
  %v2061 = vadd.f32 %v2012, %v2060
  %2062 = vmatmul.bf16.gmra.mxu0 %v766
  %v2063 = vpop.f32.mrf.mxu0
  %v2064 = vadd.f32 %v2015, %v2063
  %v2065 = vpop.f32.mrf.mxu0
  %v2066 = vadd.f32 %v2017, %v2065
  %2067 = vmatmul.bf16.gmra.mxu0 %v780
  %v2068 = vpop.f32.mrf.mxu0
  %v2069 = vadd.f32 %v2020, %v2068
  %v2070 = vpop.f32.mrf.mxu0
  %v2071 = vadd.f32 %v2022, %v2070
  %2072 = vmatmul.bf16.gmra.mxu0 %v794
  %v2073 = vpop.f32.mrf.mxu0
  %v2074 = vadd.f32 %v2025, %v2073
  %v2075 = vpop.f32.mrf.mxu0
  %v2076 = vadd.f32 %v2027, %v2075
  %2077 = vdwg.mxu0
  %2078 = vmatpush.bf16.msra.mxu0 %v1430
  %2079 = vmatpush.bf16.msra.mxu0 %v1429
  %2080 = vmatpush.bf16.msra.mxu0 %v1428
  %2081 = vmatpush.bf16.msra.mxu0 %v1427
  %2082 = vmatpush.bf16.msra.mxu0 %v1426
  %2083 = vmatpush.bf16.msra.mxu0 %v1425
  %2084 = vmatpush.bf16.msra.mxu0 %v1424
  %2085 = vmatpush.bf16.msra.mxu0 %v1423
  %2086 = vmatmul.bf16.gmra.mxu0 %v697
  %v2087 = vpop.f32.mrf.mxu0
  %v2088 = vadd.f32 %v2039, %v2087
  %v2089 = vpop.f32.mrf.mxu0
  %v2090 = vadd.f32 %v2041, %v2089
  %2091 = vmatmul.bf16.gmra.mxu0 %v711
  %v2092 = vpop.f32.mrf.mxu0
  %v2093 = vadd.f32 %v2044, %v2092
  %v2094 = vpop.f32.mrf.mxu0
  %v2095 = vadd.f32 %v2046, %v2094
  %2096 = vmatmul.bf16.gmra.mxu0 %v725
  %v2097 = vpop.f32.mrf.mxu0
  %v2098 = vadd.f32 %v2049, %v2097
  %v2099 = vpop.f32.mrf.mxu0
  %v2100 = vadd.f32 %v2051, %v2099
  %2101 = vmatmul.bf16.gmra.mxu0 %v739
  %v2102 = vpop.f32.mrf.mxu0
  %v2103 = vadd.f32 %v2054, %v2102
  %v2104 = vpop.f32.mrf.mxu0
  %v2105 = vadd.f32 %v2056, %v2104
  %2106 = vmatmul.bf16.gmra.mxu0 %v753
  %v2107 = vpop.f32.mrf.mxu0
  %v2108 = vadd.f32 %v2059, %v2107
  %v2109 = vpop.f32.mrf.mxu0
  %v2110 = vadd.f32 %v2061, %v2109
  %2111 = vmatmul.bf16.gmra.mxu0 %v767
  %v2112 = vpop.f32.mrf.mxu0
  %v2113 = vadd.f32 %v2064, %v2112
  %v2114 = vpop.f32.mrf.mxu0
  %v2115 = vadd.f32 %v2066, %v2114
  %2116 = vmatmul.bf16.gmra.mxu0 %v781
  %v2117 = vpop.f32.mrf.mxu0
  %v2118 = vadd.f32 %v2069, %v2117
  %v2119 = vpop.f32.mrf.mxu0
  %v2120 = vadd.f32 %v2071, %v2119
  %2121 = vmatmul.bf16.gmra.mxu0 %v795
  %v2122 = vpop.f32.mrf.mxu0
  %v2123 = vadd.f32 %v2074, %v2122
  %v2124 = vpop.f32.mrf.mxu0
  %v2125 = vadd.f32 %v2076, %v2124
  %2126 = vdwg.mxu0
  %2127 = vmatpush.bf16.msra.mxu0 %v1438
  %2128 = vmatpush.bf16.msra.mxu0 %v1437
  %2129 = vmatpush.bf16.msra.mxu0 %v1436
  %2130 = vmatpush.bf16.msra.mxu0 %v1435
  %2131 = vmatpush.bf16.msra.mxu0 %v1434
  %2132 = vmatpush.bf16.msra.mxu0 %v1433
  %2133 = vmatpush.bf16.msra.mxu0 %v1432
  %2134 = vmatpush.bf16.msra.mxu0 %v1431
  %2135 = vmatmul.bf16.gmra.mxu0 %v698
  %v2136 = vpop.f32.mrf.mxu0
  %v2137 = vadd.f32 %v2088, %v2136
  %v2138 = vpop.f32.mrf.mxu0
  %v2139 = vadd.f32 %v2090, %v2138
  %2140 = vmatmul.bf16.gmra.mxu0 %v712
  %v2141 = vpop.f32.mrf.mxu0
  %v2142 = vadd.f32 %v2093, %v2141
  %v2143 = vpop.f32.mrf.mxu0
  %v2144 = vadd.f32 %v2095, %v2143
  %2145 = vmatmul.bf16.gmra.mxu0 %v726
  %v2146 = vpop.f32.mrf.mxu0
  %v2147 = vadd.f32 %v2098, %v2146
  %v2148 = vpop.f32.mrf.mxu0
  %v2149 = vadd.f32 %v2100, %v2148
  %2150 = vmatmul.bf16.gmra.mxu0 %v740
  %v2151 = vpop.f32.mrf.mxu0
  %v2152 = vadd.f32 %v2103, %v2151
  %v2153 = vpop.f32.mrf.mxu0
  %v2154 = vadd.f32 %v2105, %v2153
  %2155 = vmatmul.bf16.gmra.mxu0 %v754
  %v2156 = vpop.f32.mrf.mxu0
  %v2157 = vadd.f32 %v2108, %v2156
  %v2158 = vpop.f32.mrf.mxu0
  %v2159 = vadd.f32 %v2110, %v2158
  %2160 = vmatmul.bf16.gmra.mxu0 %v768
  %v2161 = vpop.f32.mrf.mxu0
  %v2162 = vadd.f32 %v2113, %v2161
  %v2163 = vpop.f32.mrf.mxu0
  %v2164 = vadd.f32 %v2115, %v2163
  %2165 = vmatmul.bf16.gmra.mxu0 %v782
  %v2166 = vpop.f32.mrf.mxu0
  %v2167 = vadd.f32 %v2118, %v2166
  %v2168 = vpop.f32.mrf.mxu0
  %v2169 = vadd.f32 %v2120, %v2168
  %2170 = vmatmul.bf16.gmra.mxu0 %v796
  %v2171 = vpop.f32.mrf.mxu0
  %v2172 = vadd.f32 %v2123, %v2171
  %v2173 = vpop.f32.mrf.mxu0
  %v2174 = vadd.f32 %v2125, %v2173
  %2175 = vdwg.mxu0
  %2176 = vmatpush.bf16.msra.mxu0 %v1446
  %2177 = vmatpush.bf16.msra.mxu0 %v1445
  %2178 = vmatpush.bf16.msra.mxu0 %v1444
  %2179 = vmatpush.bf16.msra.mxu0 %v1443
  %2180 = vmatpush.bf16.msra.mxu0 %v1442
  %2181 = vmatpush.bf16.msra.mxu0 %v1441
  %2182 = vmatpush.bf16.msra.mxu0 %v1440
  %2183 = vmatpush.bf16.msra.mxu0 %v1439
  %2184 = vmatmul.bf16.gmra.mxu0 %v699
  %v2185 = vpop.f32.mrf.mxu0
  %v2186 = vadd.f32 %v2137, %v2185
  %v2187 = vpop.f32.mrf.mxu0
  %v2188 = vadd.f32 %v2139, %v2187
  %2189 = vmatmul.bf16.gmra.mxu0 %v713
  %v2190 = vpop.f32.mrf.mxu0
  %v2191 = vadd.f32 %v2142, %v2190
  %v2192 = vpop.f32.mrf.mxu0
  %v2193 = vadd.f32 %v2144, %v2192
  %2194 = vmatmul.bf16.gmra.mxu0 %v727
  %v2195 = vpop.f32.mrf.mxu0
  %v2196 = vadd.f32 %v2147, %v2195
  %v2197 = vpop.f32.mrf.mxu0
  %v2198 = vadd.f32 %v2149, %v2197
  %2199 = vmatmul.bf16.gmra.mxu0 %v741
  %v2200 = vpop.f32.mrf.mxu0
  %v2201 = vadd.f32 %v2152, %v2200
  %v2202 = vpop.f32.mrf.mxu0
  %v2203 = vadd.f32 %v2154, %v2202
  %2204 = vmatmul.bf16.gmra.mxu0 %v755
  %v2205 = vpop.f32.mrf.mxu0
  %v2206 = vadd.f32 %v2157, %v2205
  %v2207 = vpop.f32.mrf.mxu0
  %v2208 = vadd.f32 %v2159, %v2207
  %2209 = vmatmul.bf16.gmra.mxu0 %v769
  %v2210 = vpop.f32.mrf.mxu0
  %v2211 = vadd.f32 %v2162, %v2210
  %v2212 = vpop.f32.mrf.mxu0
  %v2213 = vadd.f32 %v2164, %v2212
  %2214 = vmatmul.bf16.gmra.mxu0 %v783
  %v2215 = vpop.f32.mrf.mxu0
  %v2216 = vadd.f32 %v2167, %v2215
  %v2217 = vpop.f32.mrf.mxu0
  %v2218 = vadd.f32 %v2169, %v2217
  %2219 = vmatmul.bf16.gmra.mxu0 %v797
  %v2220 = vpop.f32.mrf.mxu0
  %v2221 = vadd.f32 %v2172, %v2220
  %v2222 = vpop.f32.mrf.mxu0
  %v2223 = vadd.f32 %v2174, %v2222
  %2224 = vdwg.mxu0
  %2225 = vmatpush.bf16.msra.mxu0 0
  %2226 = vmatpush.bf16.msra.mxu0 0
  %2227 = vmatpush.bf16.msra.mxu0 %v1452
  %2228 = vmatpush.bf16.msra.mxu0 %v1451
  %2229 = vmatpush.bf16.msra.mxu0 %v1450
  %2230 = vmatpush.bf16.msra.mxu0 %v1449
  %2231 = vmatpush.bf16.msra.mxu0 %v1448
  %2232 = vmatpush.bf16.msra.mxu0 %v1447
  %2233 = vmatmul.bf16.gmra.mxu0 %v1565
  %v2234 = vpop.f32.mrf.mxu0
  %v2235 = vadd.f32 %v2186, %v2234
  %v2236 = vpop.f32.mrf.mxu0
  %v2237 = vadd.f32 %v2188, %v2236
  %2238 = vmatmul.bf16.gmra.mxu0 %v1568
  %v2239 = vpop.f32.mrf.mxu0
  %v2240 = vadd.f32 %v2191, %v2239
  %v2241 = vpop.f32.mrf.mxu0
  %v2242 = vadd.f32 %v2193, %v2241
  %2243 = vmatmul.bf16.gmra.mxu0 %v1571
  %v2244 = vpop.f32.mrf.mxu0
  %v2245 = vadd.f32 %v2196, %v2244
  %v2246 = vpop.f32.mrf.mxu0
  %v2247 = vadd.f32 %v2198, %v2246
  %2248 = vmatmul.bf16.gmra.mxu0 %v1574
  %v2249 = vpop.f32.mrf.mxu0
  %v2250 = vadd.f32 %v2201, %v2249
  %v2251 = vpop.f32.mrf.mxu0
  %v2252 = vadd.f32 %v2203, %v2251
  %2253 = vmatmul.bf16.gmra.mxu0 %v1577
  %v2254 = vpop.f32.mrf.mxu0
  %v2255 = vadd.f32 %v2206, %v2254
  %v2256 = vpop.f32.mrf.mxu0
  %v2257 = vadd.f32 %v2208, %v2256
  %2258 = vmatmul.bf16.gmra.mxu0 %v1580
  %v2259 = vpop.f32.mrf.mxu0
  %v2260 = vadd.f32 %v2211, %v2259
  %v2261 = vpop.f32.mrf.mxu0
  %v2262 = vadd.f32 %v2213, %v2261
  %2263 = vmatmul.bf16.gmra.mxu0 %v1583
  %v2264 = vpop.f32.mrf.mxu0
  %v2265 = vadd.f32 %v2216, %v2264
  %v2266 = vpop.f32.mrf.mxu0
  %v2267 = vadd.f32 %v2218, %v2266
  %2268 = vmatmul.bf16.gmra.mxu0 %v1586
  %v2269 = vpop.f32.mrf.mxu0
  %v2270 = vadd.f32 %v2221, %v2269
  %v2271 = vpop.f32.mrf.mxu0
  %v2272 = vadd.f32 %v2223, %v2271
  %2273 = vdwg.mxu0
  %v2274 = vmax.f32 %v2235, 0.0
  %v2275 = vmax.f32 %v2237, 0.0
  %v2276 = vmax.f32 %v2240, 0.0
  %v2277 = vmax.f32 %v2242, 0.0
  %v2278 = vmax.f32 %v2245, 0.0
  %v2279 = vmax.f32 %v2247, 0.0
  %v2280 = vmax.f32 %v2250, 0.0
  %v2281 = vmax.f32 %v2252, 0.0
  %v2282 = vmax.f32 %v2255, 0.0
  %v2283 = vmax.f32 %v2257, 0.0
  %v2284 = vmax.f32 %v2260, 0.0
  %v2285 = vmax.f32 %v2262, 0.0
  %v2286 = vmax.f32 %v2265, 0.0
  %v2287 = vmax.f32 %v2267, 0.0
  %v2288 = vmax.f32 %v2270, 0.0
  %v2289 = vmax.f32 %v2272, 0.0
  %v2290 = vpack.c.bf16 %v2274, %v2274
  %v2291 = vpack.c.bf16 %v2275, %v2275
  %v2292 = vpack.c.bf16 %v2276, %v2276
  %v2293 = vpack.c.bf16 %v2277, %v2277
  %v2294 = vpack.c.bf16 %v2278, %v2278
  %v2295 = vpack.c.bf16 %v2279, %v2279
  %v2296 = vpack.c.bf16 %v2280, %v2280
  %v2297 = vpack.c.bf16 %v2281, %v2281
  %v2298 = vpack.c.bf16 %v2282, %v2282
  %v2299 = vpack.c.bf16 %v2283, %v2283
  %v2300 = vpack.c.bf16 %v2284, %v2284
  %v2301 = vpack.c.bf16 %v2285, %v2285
  %v2302 = vpack.c.bf16 %v2286, %v2286
  %v2303 = vpack.c.bf16 %v2287, %v2287
  %v2304 = vpack.c.bf16 %v2288, %v2288
  %v2305 = vpack.c.bf16 %v2289, %v2289
  %2306 = vst [vmem:[%s3] sm:$0xf] %v2290
  %2307 = vst [vmem:[%s3 + $0x4] sm:$0xf] %v2291
  %2308 = vst [vmem:[%s3 + $0x8] sm:$0xf] %v2292
  %2309 = vst [vmem:[%s3 + $0xc] sm:$0xf] %v2293
  %2310 = vst [vmem:[%s3 + $0x10] sm:$0xf] %v2294
  %2311 = vst [vmem:[%s3 + $0x14] sm:$0xf] %v2295
  %2312 = vst [vmem:[%s3 + $0x18] sm:$0xf] %v2296
  %2313 = vst [vmem:[%s3 + $0x1c] sm:$0xf] %v2297
  %2314 = vst [vmem:[%s3 + $0x20] sm:$0xf] %v2298
  %2315 = vst [vmem:[%s3 + $0x24] sm:$0xf] %v2299
  %2316 = vst [vmem:[%s3 + $0x28] sm:$0xf] %v2300
  %2317 = vst [vmem:[%s3 + $0x2c] sm:$0xf] %v2301
  %2318 = vst [vmem:[%s3 + $0x30] sm:$0xf] %v2302
  %2319 = vst [vmem:[%s3 + $0x34] sm:$0xf] %v2303
  %2320 = vst [vmem:[%s3 + $0x38] sm:$0xf] %v2304
  %2321 = vst [vmem:[%s3 + $0x3c] sm:$0xf] %v2305
  // Predicated region
  $region14: #{forward.5} parent=0 // pred_check
    _
  $region15: #{forward.5} parent=0 // pred_check_branch
    %2323 = sbr.rel (0) target = $region17
  $region16: #{forward.5} parent=0 // pred_region
    _
  $region17: #{forward.5} parent=0 // pred_fallthru
    _
  // Predicated region
  $region18: #{forward.5} parent=0 // pred_check
    _
  $region19: #{forward.5} parent=0 // pred_check_branch
    %2325 = sbr.rel (0) target = $region21
  $region20: #{forward.5} parent=0 // pred_region
    _
  $region21: #{forward.5} parent=0 // pred_fallthru
    _

// kernel: forward.7
$region0: #{forward.7}
  #allocation0 [shape = 'u32[]', space=smem, size = 0x4, offset = 0x4, fixed_abs, tag = 'smem constant byte address 0x4 - core index']
  #allocation1 [shape = 'u32[72,128]{1,0:T(1,128)}', space=vmem, size = 0x9000, scoped, tag = 'internal scratch']
  %s0 = inlined_call_operand.vmem [shape: bf16[128,1760], index: 0, kind: input, shape index: {}]
  %s1 = inlined_call_operand.vmem [shape: bf16[1760,128], index: 1, kind: input, shape index: {}]
  %s2 = inlined_call_operand.vmem [shape: f32[1,128], index: 2, kind: input, shape index: {}]
  %s3 = inlined_call_operand.vmem [shape: f32[128,128], index: 3, kind: output, shape index: {}]
  %s4 = sld [smem:[#allocation0]]
  $region22: #{forward.7} parent=0
    _
  %s6 = ssub.s32 1, %s4
  %s7 = scalar_select 0, %s6, %s4
  // Predicated region
  $region2: #{forward.7} parent=0 // pred_check
    _
  $region3: #{forward.7} parent=0 // pred_check_branch
    %9 = sbr.rel (0) target = $region5
  $region4: #{forward.7} parent=0 // pred_region
    _
  $region5: #{forward.7} parent=0 // pred_fallthru
    _
  // Predicated region
  $region6: #{forward.7} parent=0 // pred_check
    _
  $region7: #{forward.7} parent=0 // pred_check_branch
    %11 = sbr.rel (0) target = $region9
  $region8: #{forward.7} parent=0 // pred_region
    _
  $region9: #{forward.7} parent=0 // pred_fallthru
    _
  // Predicated region
  $region10: #{forward.7} parent=0 // pred_check
    _
  $region11: #{forward.7} parent=0 // pred_check_branch
    %13 = sbr.rel (0) target = $region13
  $region12: #{forward.7} parent=0 // pred_region
    _
  $region13: #{forward.7} parent=0 // pred_fallthru
    _
  %v15 = vld [vmem:[%s0] sm:$0xff]
  %v16 = vld [vmem:[%s0 + $0x8] sm:$0xff]
  %v17 = vld [vmem:[%s0 + $0x10] sm:$0xff]
  %v18 = vld [vmem:[%s0 + $0x18] sm:$0xff]
  %v19 = vld [vmem:[%s0 + $0x20] sm:$0xff]
  %v20 = vld [vmem:[%s0 + $0x28] sm:$0xff]
  %v21 = vld [vmem:[%s0 + $0x30] sm:$0xff]
  %v22 = vld [vmem:[%s0 + $0x38] sm:$0xff]
  %v23 = vld [vmem:[%s0 + $0x40] sm:$0xff]
  %v24 = vld [vmem:[%s0 + $0x48] sm:$0xff]
  %v25 = vld [vmem:[%s0 + $0x50] sm:$0xff]
  %v26 = vld [vmem:[%s0 + $0x58] sm:$0xff]
  %v27 = vld [vmem:[%s0 + $0x60] sm:$0xff]
  %v28 = vld [vmem:[%s0 + $0x68] sm:$0xff]
  %v29 = vld [vmem:[%s0 + $0x70] sm:$0xff]
  %v30 = vld [vmem:[%s0 + $0x78] sm:$0xff]
  %v31 = vld [vmem:[%s0 + $0x80] sm:$0xff]
  %v32 = vld [vmem:[%s0 + $0x88] sm:$0xff]
  %v33 = vld [vmem:[%s0 + $0x90] sm:$0xff]
  %v34 = vld [vmem:[%s0 + $0x98] sm:$0xff]
  %v35 = vld [vmem:[%s0 + $0xa0] sm:$0xff]
  %v36 = vld [vmem:[%s0 + $0xa8] sm:$0xff]
  %v37 = vld [vmem:[%s0 + $0xb0] sm:$0xff]
  %v38 = vld [vmem:[%s0 + $0xb8] sm:$0xff]
  %v39 = vld [vmem:[%s0 + $0xc0] sm:$0xff]
  %v40 = vld [vmem:[%s0 + $0xc8] sm:$0xff]
  %v41 = vld [vmem:[%s0 + $0xd0] sm:$0xff]
  %v42 = vld [vmem:[%s0 + $0xd8] sm:$0xff]
  %v43 = vld [vmem:[%s0 + $0xe0] sm:$0xff]
  %v44 = vld [vmem:[%s0 + $0xe8] sm:$0xff]
  %v45 = vld [vmem:[%s0 + $0xf0] sm:$0xff]
  %v46 = vld [vmem:[%s0 + $0xf8] sm:$0xff]
  %v47 = vld [vmem:[%s0 + $0x100] sm:$0xff]
  %v48 = vld [vmem:[%s0 + $0x108] sm:$0xff]
  %v49 = vld [vmem:[%s0 + $0x110] sm:$0xff]
  %v50 = vld [vmem:[%s0 + $0x118] sm:$0xff]
  %v51 = vld [vmem:[%s0 + $0x120] sm:$0xff]
  %v52 = vld [vmem:[%s0 + $0x128] sm:$0xff]
  %v53 = vld [vmem:[%s0 + $0x130] sm:$0xff]
  %v54 = vld [vmem:[%s0 + $0x138] sm:$0xff]
  %v55 = vld [vmem:[%s0 + $0x140] sm:$0xff]
  %v56 = vld [vmem:[%s0 + $0x148] sm:$0xff]
  %v57 = vld [vmem:[%s0 + $0x150] sm:$0xff]
  %v58 = vld [vmem:[%s0 + $0x158] sm:$0xff]
  %v59 = vld [vmem:[%s0 + $0x160] sm:$0xff]
  %v60 = vld [vmem:[%s0 + $0x168] sm:$0xff]
  %v61 = vld [vmem:[%s0 + $0x170] sm:$0xff]
  %v62 = vld [vmem:[%s0 + $0x178] sm:$0xff]
  %v63 = vld [vmem:[%s0 + $0x180] sm:$0xff]
  %v64 = vld [vmem:[%s0 + $0x188] sm:$0xff]
  %v65 = vld [vmem:[%s0 + $0x190] sm:$0xff]
  %v66 = vld [vmem:[%s0 + $0x198] sm:$0xff]
  %v67 = vld [vmem:[%s0 + $0x1a0] sm:$0xff]
  %v68 = vld [vmem:[%s0 + $0x1a8] sm:$0xff]
  %v69 = vld [vmem:[%s0 + $0x1b0] sm:$0xff]
  %v70 = vld [vmem:[%s0 + $0x1b8] sm:$0xff]
  %v71 = vld [vmem:[%s0 + $0x1c0] sm:$0xff]
  %v72 = vld [vmem:[%s0 + $0x1c8] sm:$0xff]
  %v73 = vld [vmem:[%s0 + $0x1d0] sm:$0xff]
  %v74 = vld [vmem:[%s0 + $0x1d8] sm:$0xff]
  %v75 = vld [vmem:[%s0 + $0x1e0] sm:$0xff]
  %v76 = vld [vmem:[%s0 + $0x1e8] sm:$0xff]
  %v77 = vld [vmem:[%s0 + $0x1f0] sm:$0xff]
  %v78 = vld [vmem:[%s0 + $0x1f8] sm:$0xff]
  %v79 = vld [vmem:[%s0 + $0x200] sm:$0xff]
  %v80 = vld [vmem:[%s0 + $0x208] sm:$0xff]
  %v81 = vld [vmem:[%s0 + $0x210] sm:$0xff]
  %v82 = vld [vmem:[%s0 + $0x218] sm:$0xff]
  %v83 = vld [vmem:[%s0 + $0x220] sm:$0xff]
  %v84 = vld [vmem:[%s0 + $0x228] sm:$0xff]
  %v85 = vld [vmem:[%s0 + $0x230] sm:$0xff]
  %v86 = vld [vmem:[%s0 + $0x238] sm:$0xff]
  %v87 = vld [vmem:[%s0 + $0x240] sm:$0xff]
  %v88 = vld [vmem:[%s0 + $0x248] sm:$0xff]
  %v89 = vld [vmem:[%s0 + $0x250] sm:$0xff]
  %v90 = vld [vmem:[%s0 + $0x258] sm:$0xff]
  %v91 = vld [vmem:[%s0 + $0x260] sm:$0xff]
  %v92 = vld [vmem:[%s0 + $0x268] sm:$0xff]
  %v93 = vld [vmem:[%s0 + $0x270] sm:$0xff]
  %v94 = vld [vmem:[%s0 + $0x278] sm:$0xff]
  %v95 = vld [vmem:[%s0 + $0x280] sm:$0xff]
  %v96 = vld [vmem:[%s0 + $0x288] sm:$0xff]
  %v97 = vld [vmem:[%s0 + $0x290] sm:$0xff]
  %v98 = vld [vmem:[%s0 + $0x298] sm:$0xff]
  %v99 = vld [vmem:[%s0 + $0x2a0] sm:$0xff]
  %v100 = vld [vmem:[%s0 + $0x2a8] sm:$0xff]
  %v101 = vld [vmem:[%s0 + $0x2b0] sm:$0xff]
  %v102 = vld [vmem:[%s0 + $0x2b8] sm:$0xff]
  %v103 = vld [vmem:[%s0 + $0x2c0] sm:$0xff]
  %v104 = vld [vmem:[%s0 + $0x2c8] sm:$0xff]
  %v105 = vld [vmem:[%s0 + $0x2d0] sm:$0xff]
  %v106 = vld [vmem:[%s0 + $0x2d8] sm:$0xff]
  %v107 = vld [vmem:[%s0 + $0x2e0] sm:$0xff]
  %v108 = vld [vmem:[%s0 + $0x2e8] sm:$0xff]
  %v109 = vld [vmem:[%s0 + $0x2f0] sm:$0xff]
  %v110 = vld [vmem:[%s0 + $0x2f8] sm:$0xff]
  %v111 = vld [vmem:[%s0 + $0x300] sm:$0xff]
  %v112 = vld [vmem:[%s0 + $0x308] sm:$0xff]
  %v113 = vld [vmem:[%s0 + $0x310] sm:$0xff]
  %v114 = vld [vmem:[%s0 + $0x318] sm:$0xff]
  %v115 = vld [vmem:[%s0 + $0x320] sm:$0xff]
  %v116 = vld [vmem:[%s0 + $0x328] sm:$0xff]
  %v117 = vld [vmem:[%s0 + $0x330] sm:$0xff]
  %v118 = vld [vmem:[%s0 + $0x338] sm:$0xff]
  %v119 = vld [vmem:[%s0 + $0x340] sm:$0xff]
  %v120 = vld [vmem:[%s0 + $0x348] sm:$0xff]
  %v121 = vld [vmem:[%s0 + $0x350] sm:$0xff]
  %v122 = vld [vmem:[%s0 + $0x358] sm:$0xff]
  %v123 = vld [vmem:[%s0 + $0x360] sm:$0xff]
  %v124 = vld [vmem:[%s0 + $0x368] sm:$0xff]
  %v125 = vld [vmem:[%s0 + $0x370] sm:$0xff]
  %v126 = vld [vmem:[%s0 + $0x378] sm:$0xff]
  %v127 = vld [vmem:[%s1] sm:$0xf]
  %v128 = vld [vmem:[%s1 + $0x4] sm:$0xf]
  %v129 = vld [vmem:[%s1 + $0x8] sm:$0xf]
  %v130 = vld [vmem:[%s1 + $0xc] sm:$0xf]
  %v131 = vld [vmem:[%s1 + $0x10] sm:$0xf]
  %v132 = vld [vmem:[%s1 + $0x14] sm:$0xf]
  %v133 = vld [vmem:[%s1 + $0x18] sm:$0xf]
  %v134 = vld [vmem:[%s1 + $0x1c] sm:$0xf]
  %v135 = vld [vmem:[%s1 + $0x20] sm:$0xf]
  %v136 = vld [vmem:[%s1 + $0x24] sm:$0xf]
  %v137 = vld [vmem:[%s1 + $0x28] sm:$0xf]
  %v138 = vld [vmem:[%s1 + $0x2c] sm:$0xf]
  %v139 = vld [vmem:[%s1 + $0x30] sm:$0xf]
  %v140 = vld [vmem:[%s1 + $0x34] sm:$0xf]
  %v141 = vld [vmem:[%s1 + $0x38] sm:$0xf]
  %v142 = vld [vmem:[%s1 + $0x3c] sm:$0xf]
  %v143 = vld [vmem:[%s1 + $0x40] sm:$0xf]
  %v144 = vld [vmem:[%s1 + $0x44] sm:$0xf]
  %v145 = vld [vmem:[%s1 + $0x48] sm:$0xf]
  %v146 = vld [vmem:[%s1 + $0x4c] sm:$0xf]
  %v147 = vld [vmem:[%s1 + $0x50] sm:$0xf]
  %v148 = vld [vmem:[%s1 + $0x54] sm:$0xf]
  %v149 = vld [vmem:[%s1 + $0x58] sm:$0xf]
  %v150 = vld [vmem:[%s1 + $0x5c] sm:$0xf]
  %v151 = vld [vmem:[%s1 + $0x60] sm:$0xf]
  %v152 = vld [vmem:[%s1 + $0x64] sm:$0xf]
  %v153 = vld [vmem:[%s1 + $0x68] sm:$0xf]
  %v154 = vld [vmem:[%s1 + $0x6c] sm:$0xf]
  %v155 = vld [vmem:[%s1 + $0x70] sm:$0xf]
  %v156 = vld [vmem:[%s1 + $0x74] sm:$0xf]
  %v157 = vld [vmem:[%s1 + $0x78] sm:$0xf]
  %v158 = vld [vmem:[%s1 + $0x7c] sm:$0xf]
  %v159 = vld [vmem:[%s1 + $0x80] sm:$0xf]
  %v160 = vld [vmem:[%s1 + $0x84] sm:$0xf]
  %v161 = vld [vmem:[%s1 + $0x88] sm:$0xf]
  %v162 = vld [vmem:[%s1 + $0x8c] sm:$0xf]
  %v163 = vld [vmem:[%s1 + $0x90] sm:$0xf]
  %v164 = vld [vmem:[%s1 + $0x94] sm:$0xf]
  %v165 = vld [vmem:[%s1 + $0x98] sm:$0xf]
  %v166 = vld [vmem:[%s1 + $0x9c] sm:$0xf]
  %v167 = vld [vmem:[%s1 + $0xa0] sm:$0xf]
  %v168 = vld [vmem:[%s1 + $0xa4] sm:$0xf]
  %v169 = vld [vmem:[%s1 + $0xa8] sm:$0xf]
  %v170 = vld [vmem:[%s1 + $0xac] sm:$0xf]
  %v171 = vld [vmem:[%s1 + $0xb0] sm:$0xf]
  %v172 = vld [vmem:[%s1 + $0xb4] sm:$0xf]
  %v173 = vld [vmem:[%s1 + $0xb8] sm:$0xf]
  %v174 = vld [vmem:[%s1 + $0xbc] sm:$0xf]
  %v175 = vld [vmem:[%s1 + $0xc0] sm:$0xf]
  %v176 = vld [vmem:[%s1 + $0xc4] sm:$0xf]
  %v177 = vld [vmem:[%s1 + $0xc8] sm:$0xf]
  %v178 = vld [vmem:[%s1 + $0xcc] sm:$0xf]
  %v179 = vld [vmem:[%s1 + $0xd0] sm:$0xf]
  %v180 = vld [vmem:[%s1 + $0xd4] sm:$0xf]
  %v181 = vld [vmem:[%s1 + $0xd8] sm:$0xf]
  %v182 = vld [vmem:[%s1 + $0xdc] sm:$0xf]
  %v183 = vld [vmem:[%s1 + $0xe0] sm:$0xf]
  %v184 = vld [vmem:[%s1 + $0xe4] sm:$0xf]
  %v185 = vld [vmem:[%s1 + $0xe8] sm:$0xf]
  %v186 = vld [vmem:[%s1 + $0xec] sm:$0xf]
  %v187 = vld [vmem:[%s1 + $0xf0] sm:$0xf]
  %v188 = vld [vmem:[%s1 + $0xf4] sm:$0xf]
  %v189 = vld [vmem:[%s1 + $0xf8] sm:$0xf]
  %v190 = vld [vmem:[%s1 + $0xfc] sm:$0xf]
  %v191 = vld [vmem:[%s1 + $0x100] sm:$0xf]
  %v192 = vld [vmem:[%s1 + $0x104] sm:$0xf]
  %v193 = vld [vmem:[%s1 + $0x108] sm:$0xf]
  %v194 = vld [vmem:[%s1 + $0x10c] sm:$0xf]
  %v195 = vld [vmem:[%s1 + $0x110] sm:$0xf]
  %v196 = vld [vmem:[%s1 + $0x114] sm:$0xf]
  %v197 = vld [vmem:[%s1 + $0x118] sm:$0xf]
  %v198 = vld [vmem:[%s1 + $0x11c] sm:$0xf]
  %v199 = vld [vmem:[%s1 + $0x120] sm:$0xf]
  %v200 = vld [vmem:[%s1 + $0x124] sm:$0xf]
  %v201 = vld [vmem:[%s1 + $0x128] sm:$0xf]
  %v202 = vld [vmem:[%s1 + $0x12c] sm:$0xf]
  %v203 = vld [vmem:[%s1 + $0x130] sm:$0xf]
  %v204 = vld [vmem:[%s1 + $0x134] sm:$0xf]
  %v205 = vld [vmem:[%s1 + $0x138] sm:$0xf]
  %v206 = vld [vmem:[%s1 + $0x13c] sm:$0xf]
  %v207 = vld [vmem:[%s1 + $0x140] sm:$0xf]
  %v208 = vld [vmem:[%s1 + $0x144] sm:$0xf]
  %v209 = vld [vmem:[%s1 + $0x148] sm:$0xf]
  %v210 = vld [vmem:[%s1 + $0x14c] sm:$0xf]
  %v211 = vld [vmem:[%s1 + $0x150] sm:$0xf]
  %v212 = vld [vmem:[%s1 + $0x154] sm:$0xf]
  %v213 = vld [vmem:[%s1 + $0x158] sm:$0xf]
  %v214 = vld [vmem:[%s1 + $0x15c] sm:$0xf]
  %v215 = vld [vmem:[%s1 + $0x160] sm:$0xf]
  %v216 = vld [vmem:[%s1 + $0x164] sm:$0xf]
  %v217 = vld [vmem:[%s1 + $0x168] sm:$0xf]
  %v218 = vld [vmem:[%s1 + $0x16c] sm:$0xf]
  %v219 = vld [vmem:[%s1 + $0x170] sm:$0xf]
  %v220 = vld [vmem:[%s1 + $0x174] sm:$0xf]
  %v221 = vld [vmem:[%s1 + $0x178] sm:$0xf]
  %v222 = vld [vmem:[%s1 + $0x17c] sm:$0xf]
  %v223 = vld [vmem:[%s1 + $0x180] sm:$0xf]
  %v224 = vld [vmem:[%s1 + $0x184] sm:$0xf]
  %v225 = vld [vmem:[%s1 + $0x188] sm:$0xf]
  %v226 = vld [vmem:[%s1 + $0x18c] sm:$0xf]
  %v227 = vld [vmem:[%s1 + $0x190] sm:$0xf]
  %v228 = vld [vmem:[%s1 + $0x194] sm:$0xf]
  %v229 = vld [vmem:[%s1 + $0x198] sm:$0xf]
  %v230 = vld [vmem:[%s1 + $0x19c] sm:$0xf]
  %v231 = vld [vmem:[%s1 + $0x1a0] sm:$0xf]
  %v232 = vld [vmem:[%s1 + $0x1a4] sm:$0xf]
  %v233 = vld [vmem:[%s1 + $0x1a8] sm:$0xf]
  %v234 = vld [vmem:[%s1 + $0x1ac] sm:$0xf]
  %v235 = vld [vmem:[%s1 + $0x1b0] sm:$0xf]
  %v236 = vld [vmem:[%s1 + $0x1b4] sm:$0xf]
  %v237 = vld [vmem:[%s1 + $0x1b8] sm:$0xf]
  %v238 = vld [vmem:[%s1 + $0x1bc] sm:$0xf]
  %v239 = vld [vmem:[%s1 + $0x1c0] sm:$0xf]
  %v240 = vld [vmem:[%s1 + $0x1c4] sm:$0xf]
  %v241 = vld [vmem:[%s1 + $0x1c8] sm:$0xf]
  %v242 = vld [vmem:[%s1 + $0x1cc] sm:$0xf]
  %v243 = vld [vmem:[%s1 + $0x1d0] sm:$0xf]
  %v244 = vld [vmem:[%s1 + $0x1d4] sm:$0xf]
  %v245 = vld [vmem:[%s1 + $0x1d8] sm:$0xf]
  %v246 = vld [vmem:[%s1 + $0x1dc] sm:$0xf]
  %v247 = vld [vmem:[%s1 + $0x1e0] sm:$0xf]
  %v248 = vld [vmem:[%s1 + $0x1e4] sm:$0xf]
  %v249 = vld [vmem:[%s1 + $0x1e8] sm:$0xf]
  %v250 = vld [vmem:[%s1 + $0x1ec] sm:$0xf]
  %v251 = vld [vmem:[%s1 + $0x1f0] sm:$0xf]
  %v252 = vld [vmem:[%s1 + $0x1f4] sm:$0xf]
  %v253 = vld [vmem:[%s1 + $0x1f8] sm:$0xf]
  %v254 = vld [vmem:[%s1 + $0x1fc] sm:$0xf]
  %v255 = vld [vmem:[%s1 + $0x200] sm:$0xf]
  %v256 = vld [vmem:[%s1 + $0x204] sm:$0xf]
  %v257 = vld [vmem:[%s1 + $0x208] sm:$0xf]
  %v258 = vld [vmem:[%s1 + $0x20c] sm:$0xf]
  %v259 = vld [vmem:[%s1 + $0x210] sm:$0xf]
  %v260 = vld [vmem:[%s1 + $0x214] sm:$0xf]
  %v261 = vld [vmem:[%s1 + $0x218] sm:$0xf]
  %v262 = vld [vmem:[%s1 + $0x21c] sm:$0xf]
  %v263 = vld [vmem:[%s1 + $0x220] sm:$0xf]
  %v264 = vld [vmem:[%s1 + $0x224] sm:$0xf]
  %v265 = vld [vmem:[%s1 + $0x228] sm:$0xf]
  %v266 = vld [vmem:[%s1 + $0x22c] sm:$0xf]
  %v267 = vld [vmem:[%s1 + $0x230] sm:$0xf]
  %v268 = vld [vmem:[%s1 + $0x234] sm:$0xf]
  %v269 = vld [vmem:[%s1 + $0x238] sm:$0xf]
  %v270 = vld [vmem:[%s1 + $0x23c] sm:$0xf]
  %v271 = vld [vmem:[%s1 + $0x240] sm:$0xf]
  %v272 = vld [vmem:[%s1 + $0x244] sm:$0xf]
  %v273 = vld [vmem:[%s1 + $0x248] sm:$0xf]
  %v274 = vld [vmem:[%s1 + $0x24c] sm:$0xf]
  %v275 = vld [vmem:[%s1 + $0x250] sm:$0xf]
  %v276 = vld [vmem:[%s1 + $0x254] sm:$0xf]
  %v277 = vld [vmem:[%s1 + $0x258] sm:$0xf]
  %v278 = vld [vmem:[%s1 + $0x25c] sm:$0xf]
  %v279 = vld [vmem:[%s1 + $0x260] sm:$0xf]
  %v280 = vld [vmem:[%s1 + $0x264] sm:$0xf]
  %v281 = vld [vmem:[%s1 + $0x268] sm:$0xf]
  %v282 = vld [vmem:[%s1 + $0x26c] sm:$0xf]
  %v283 = vld [vmem:[%s1 + $0x270] sm:$0xf]
  %v284 = vld [vmem:[%s1 + $0x274] sm:$0xf]
  %v285 = vld [vmem:[%s1 + $0x278] sm:$0xf]
  %v286 = vld [vmem:[%s1 + $0x27c] sm:$0xf]
  %v287 = vld [vmem:[%s1 + $0x280] sm:$0xf]
  %v288 = vld [vmem:[%s1 + $0x284] sm:$0xf]
  %v289 = vld [vmem:[%s1 + $0x288] sm:$0xf]
  %v290 = vld [vmem:[%s1 + $0x28c] sm:$0xf]
  %v291 = vld [vmem:[%s1 + $0x290] sm:$0xf]
  %v292 = vld [vmem:[%s1 + $0x294] sm:$0xf]
  %v293 = vld [vmem:[%s1 + $0x298] sm:$0xf]
  %v294 = vld [vmem:[%s1 + $0x29c] sm:$0xf]
  %v295 = vld [vmem:[%s1 + $0x2a0] sm:$0xf]
  %v296 = vld [vmem:[%s1 + $0x2a4] sm:$0xf]
  %v297 = vld [vmem:[%s1 + $0x2a8] sm:$0xf]
  %v298 = vld [vmem:[%s1 + $0x2ac] sm:$0xf]
  %v299 = vld [vmem:[%s1 + $0x2b0] sm:$0xf]
  %v300 = vld [vmem:[%s1 + $0x2b4] sm:$0xf]
  %v301 = vld [vmem:[%s1 + $0x2b8] sm:$0xf]
  %v302 = vld [vmem:[%s1 + $0x2bc] sm:$0xf]
  %v303 = vld [vmem:[%s1 + $0x2c0] sm:$0xf]
  %v304 = vld [vmem:[%s1 + $0x2c4] sm:$0xf]
  %v305 = vld [vmem:[%s1 + $0x2c8] sm:$0xf]
  %v306 = vld [vmem:[%s1 + $0x2cc] sm:$0xf]
  %v307 = vld [vmem:[%s1 + $0x2d0] sm:$0xf]
  %v308 = vld [vmem:[%s1 + $0x2d4] sm:$0xf]
  %v309 = vld [vmem:[%s1 + $0x2d8] sm:$0xf]
  %v310 = vld [vmem:[%s1 + $0x2dc] sm:$0xf]
  %v311 = vld [vmem:[%s1 + $0x2e0] sm:$0xf]
  %v312 = vld [vmem:[%s1 + $0x2e4] sm:$0xf]
  %v313 = vld [vmem:[%s1 + $0x2e8] sm:$0xf]
  %v314 = vld [vmem:[%s1 + $0x2ec] sm:$0xf]
  %v315 = vld [vmem:[%s1 + $0x2f0] sm:$0xf]
  %v316 = vld [vmem:[%s1 + $0x2f4] sm:$0xf]
  %v317 = vld [vmem:[%s1 + $0x2f8] sm:$0xf]
  %v318 = vld [vmem:[%s1 + $0x2fc] sm:$0xf]
  %v319 = vld [vmem:[%s1 + $0x300] sm:$0xf]
  %v320 = vld [vmem:[%s1 + $0x304] sm:$0xf]
  %v321 = vld [vmem:[%s1 + $0x308] sm:$0xf]
  %v322 = vld [vmem:[%s1 + $0x30c] sm:$0xf]
  %v323 = vld [vmem:[%s1 + $0x310] sm:$0xf]
  %v324 = vld [vmem:[%s1 + $0x314] sm:$0xf]
  %v325 = vld [vmem:[%s1 + $0x318] sm:$0xf]
  %v326 = vld [vmem:[%s1 + $0x31c] sm:$0xf]
  %v327 = vld [vmem:[%s1 + $0x320] sm:$0xf]
  %v328 = vld [vmem:[%s1 + $0x324] sm:$0xf]
  %v329 = vld [vmem:[%s1 + $0x328] sm:$0xf]
  %v330 = vld [vmem:[%s1 + $0x32c] sm:$0xf]
  %v331 = vld [vmem:[%s1 + $0x330] sm:$0xf]
  %v332 = vld [vmem:[%s1 + $0x334] sm:$0xf]
  %v333 = vld [vmem:[%s1 + $0x338] sm:$0xf]
  %v334 = vld [vmem:[%s1 + $0x33c] sm:$0xf]
  %v335 = vld [vmem:[%s1 + $0x340] sm:$0xf]
  %v336 = vld [vmem:[%s1 + $0x344] sm:$0xf]
  %v337 = vld [vmem:[%s1 + $0x348] sm:$0xf]
  %v338 = vld [vmem:[%s1 + $0x34c] sm:$0xf]
  %v339 = vld [vmem:[%s1 + $0x350] sm:$0xf]
  %v340 = vld [vmem:[%s1 + $0x354] sm:$0xf]
  %v341 = vld [vmem:[%s1 + $0x358] sm:$0xf]
  %v342 = vld [vmem:[%s1 + $0x35c] sm:$0xf]
  %v343 = vld [vmem:[%s1 + $0x360] sm:$0xf]
  %v344 = vld [vmem:[%s1 + $0x364] sm:$0xf]
  %v345 = vld [vmem:[%s1 + $0x368] sm:$0xf]
  %v346 = vld [vmem:[%s1 + $0x36c] sm:$0xf]
  %v347 = vld [vmem:[%s2] sm:$0x1]
  %v349 = vperm.slane %v347, 0
  %v463 = vunpack.c.l.b16 %v15
  %v464 = vunpack.c.h.b16 %v15
  %v465 = vunpack.c.l.b16 %v16
  %v466 = vunpack.c.h.b16 %v16
  %v467 = vunpack.c.l.b16 %v17
  %v468 = vunpack.c.h.b16 %v17
  %v469 = vunpack.c.l.b16 %v18
  %v470 = vunpack.c.h.b16 %v18
  %v471 = vunpack.c.l.b16 %v19
  %v472 = vunpack.c.h.b16 %v19
  %v473 = vunpack.c.l.b16 %v20
  %v474 = vunpack.c.h.b16 %v20
  %v475 = vunpack.c.l.b16 %v21
  %v476 = vunpack.c.h.b16 %v21
  %v477 = vunpack.c.l.b16 %v22
  %v478 = vunpack.c.h.b16 %v22
  %v479 = vunpack.c.l.b16 %v23
  %v480 = vunpack.c.h.b16 %v23
  %v481 = vunpack.c.l.b16 %v24
  %v482 = vunpack.c.h.b16 %v24
  %v483 = vunpack.c.l.b16 %v25
  %v484 = vunpack.c.h.b16 %v25
  %v485 = vunpack.c.l.b16 %v26
  %v486 = vunpack.c.h.b16 %v26
  %v487 = vunpack.c.l.b16 %v27
  %v488 = vunpack.c.h.b16 %v27
  %v489 = vunpack.c.l.b16 %v28
  %v490 = vunpack.c.h.b16 %v28
  %v491 = vunpack.c.l.b16 %v29
  %v492 = vunpack.c.h.b16 %v29
  %v493 = vunpack.c.l.b16 %v30
  %v494 = vunpack.c.h.b16 %v30
  %v495 = vunpack.c.l.b16 %v31
  %v496 = vunpack.c.h.b16 %v31
  %v497 = vunpack.c.l.b16 %v32
  %v498 = vunpack.c.h.b16 %v32
  %v499 = vunpack.c.l.b16 %v33
  %v500 = vunpack.c.h.b16 %v33
  %v501 = vunpack.c.l.b16 %v34
  %v502 = vunpack.c.h.b16 %v34
  %v503 = vunpack.c.l.b16 %v35
  %v504 = vunpack.c.h.b16 %v35
  %v505 = vunpack.c.l.b16 %v36
  %v506 = vunpack.c.h.b16 %v36
  %v507 = vunpack.c.l.b16 %v37
  %v508 = vunpack.c.h.b16 %v37
  %v509 = vunpack.c.l.b16 %v38
  %v510 = vunpack.c.h.b16 %v38
  %v511 = vunpack.c.l.b16 %v39
  %v512 = vunpack.c.h.b16 %v39
  %v513 = vunpack.c.l.b16 %v40
  %v514 = vunpack.c.h.b16 %v40
  %v515 = vunpack.c.l.b16 %v41
  %v516 = vunpack.c.h.b16 %v41
  %v517 = vunpack.c.l.b16 %v42
  %v518 = vunpack.c.h.b16 %v42
  %v519 = vunpack.c.l.b16 %v43
  %v520 = vunpack.c.h.b16 %v43
  %v521 = vunpack.c.l.b16 %v44
  %v522 = vunpack.c.h.b16 %v44
  %v523 = vunpack.c.l.b16 %v45
  %v524 = vunpack.c.h.b16 %v45
  %v525 = vunpack.c.l.b16 %v46
  %v526 = vunpack.c.h.b16 %v46
  %v527 = vunpack.c.l.b16 %v47
  %v528 = vunpack.c.h.b16 %v47
  %v529 = vunpack.c.l.b16 %v48
  %v530 = vunpack.c.h.b16 %v48
  %v531 = vunpack.c.l.b16 %v49
  %v532 = vunpack.c.h.b16 %v49
  %v533 = vunpack.c.l.b16 %v50
  %v534 = vunpack.c.h.b16 %v50
  %v535 = vunpack.c.l.b16 %v51
  %v536 = vunpack.c.h.b16 %v51
  %v537 = vunpack.c.l.b16 %v52
  %v538 = vunpack.c.h.b16 %v52
  %v539 = vunpack.c.l.b16 %v53
  %v540 = vunpack.c.h.b16 %v53
  %v541 = vunpack.c.l.b16 %v54
  %v542 = vunpack.c.h.b16 %v54
  %v543 = vunpack.c.l.b16 %v55
  %v544 = vunpack.c.h.b16 %v55
  %v545 = vunpack.c.l.b16 %v56
  %v546 = vunpack.c.h.b16 %v56
  %v547 = vunpack.c.l.b16 %v57
  %v548 = vunpack.c.h.b16 %v57
  %v549 = vunpack.c.l.b16 %v58
  %v550 = vunpack.c.h.b16 %v58
  %v551 = vunpack.c.l.b16 %v59
  %v552 = vunpack.c.h.b16 %v59
  %v553 = vunpack.c.l.b16 %v60
  %v554 = vunpack.c.h.b16 %v60
  %v555 = vunpack.c.l.b16 %v61
  %v556 = vunpack.c.h.b16 %v61
  %v557 = vunpack.c.l.b16 %v62
  %v558 = vunpack.c.h.b16 %v62
  %v559 = vunpack.c.l.b16 %v63
  %v560 = vunpack.c.h.b16 %v63
  %v561 = vunpack.c.l.b16 %v64
  %v562 = vunpack.c.h.b16 %v64
  %v563 = vunpack.c.l.b16 %v65
  %v564 = vunpack.c.h.b16 %v65
  %v565 = vunpack.c.l.b16 %v66
  %v566 = vunpack.c.h.b16 %v66
  %v567 = vunpack.c.l.b16 %v67
  %v568 = vunpack.c.h.b16 %v67
  %v569 = vunpack.c.l.b16 %v68
  %v570 = vunpack.c.h.b16 %v68
  %v571 = vunpack.c.l.b16 %v69
  %v572 = vunpack.c.h.b16 %v69
  %v573 = vunpack.c.l.b16 %v70
  %v574 = vunpack.c.h.b16 %v70
  %v575 = vunpack.c.l.b16 %v71
  %v576 = vunpack.c.h.b16 %v71
  %v577 = vunpack.c.l.b16 %v72
  %v578 = vunpack.c.h.b16 %v72
  %v579 = vunpack.c.l.b16 %v73
  %v580 = vunpack.c.h.b16 %v73
  %v581 = vunpack.c.l.b16 %v74
  %v582 = vunpack.c.h.b16 %v74
  %v583 = vunpack.c.l.b16 %v75
  %v584 = vunpack.c.h.b16 %v75
  %v585 = vunpack.c.l.b16 %v76
  %v586 = vunpack.c.h.b16 %v76
  %v587 = vunpack.c.l.b16 %v77
  %v588 = vunpack.c.h.b16 %v77
  %v589 = vunpack.c.l.b16 %v78
  %v590 = vunpack.c.h.b16 %v78
  %v591 = vunpack.c.l.b16 %v79
  %v592 = vunpack.c.h.b16 %v79
  %v593 = vunpack.c.l.b16 %v80
  %v594 = vunpack.c.h.b16 %v80
  %v595 = vunpack.c.l.b16 %v81
  %v596 = vunpack.c.h.b16 %v81
  %v597 = vunpack.c.l.b16 %v82
  %v598 = vunpack.c.h.b16 %v82
  %v599 = vunpack.c.l.b16 %v83
  %v600 = vunpack.c.h.b16 %v83
  %v601 = vunpack.c.l.b16 %v84
  %v602 = vunpack.c.h.b16 %v84
  %v603 = vunpack.c.l.b16 %v85
  %v604 = vunpack.c.h.b16 %v85
  %v605 = vunpack.c.l.b16 %v86
  %v606 = vunpack.c.h.b16 %v86
  %v607 = vunpack.c.l.b16 %v87
  %v608 = vunpack.c.h.b16 %v87
  %v609 = vunpack.c.l.b16 %v88
  %v610 = vunpack.c.h.b16 %v88
  %v611 = vunpack.c.l.b16 %v89
  %v612 = vunpack.c.h.b16 %v89
  %v613 = vunpack.c.l.b16 %v90
  %v614 = vunpack.c.h.b16 %v90
  %v615 = vunpack.c.l.b16 %v91
  %v616 = vunpack.c.h.b16 %v91
  %v617 = vunpack.c.l.b16 %v92
  %v618 = vunpack.c.h.b16 %v92
  %v619 = vunpack.c.l.b16 %v93
  %v620 = vunpack.c.h.b16 %v93
  %v621 = vunpack.c.l.b16 %v94
  %v622 = vunpack.c.h.b16 %v94
  %v623 = vunpack.c.l.b16 %v95
  %v624 = vunpack.c.h.b16 %v95
  %v625 = vunpack.c.l.b16 %v96
  %v626 = vunpack.c.h.b16 %v96
  %v627 = vunpack.c.l.b16 %v97
  %v628 = vunpack.c.h.b16 %v97
  %v629 = vunpack.c.l.b16 %v98
  %v630 = vunpack.c.h.b16 %v98
  %v631 = vunpack.c.l.b16 %v99
  %v632 = vunpack.c.h.b16 %v99
  %v633 = vunpack.c.l.b16 %v100
  %v634 = vunpack.c.h.b16 %v100
  %v635 = vunpack.c.l.b16 %v101
  %v636 = vunpack.c.h.b16 %v101
  %v637 = vunpack.c.l.b16 %v102
  %v638 = vunpack.c.h.b16 %v102
  %v639 = vunpack.c.l.b16 %v103
  %v640 = vunpack.c.h.b16 %v103
  %v641 = vunpack.c.l.b16 %v104
  %v642 = vunpack.c.h.b16 %v104
  %v643 = vunpack.c.l.b16 %v105
  %v644 = vunpack.c.h.b16 %v105
  %v645 = vunpack.c.l.b16 %v106
  %v646 = vunpack.c.h.b16 %v106
  %v647 = vunpack.c.l.b16 %v107
  %v648 = vunpack.c.h.b16 %v107
  %v649 = vunpack.c.l.b16 %v108
  %v650 = vunpack.c.h.b16 %v108
  %v651 = vunpack.c.l.b16 %v109
  %v652 = vunpack.c.h.b16 %v109
  %v653 = vunpack.c.l.b16 %v110
  %v654 = vunpack.c.h.b16 %v110
  %v655 = vunpack.c.l.b16 %v111
  %v656 = vunpack.c.h.b16 %v111
  %v657 = vunpack.c.l.b16 %v112
  %v658 = vunpack.c.h.b16 %v112
  %v659 = vunpack.c.l.b16 %v113
  %v660 = vunpack.c.h.b16 %v113
  %v661 = vunpack.c.l.b16 %v114
  %v662 = vunpack.c.h.b16 %v114
  %v663 = vunpack.c.l.b16 %v115
  %v664 = vunpack.c.h.b16 %v115
  %v665 = vunpack.c.l.b16 %v116
  %v666 = vunpack.c.h.b16 %v116
  %v667 = vunpack.c.l.b16 %v117
  %v668 = vunpack.c.h.b16 %v117
  %v669 = vunpack.c.l.b16 %v118
  %v670 = vunpack.c.h.b16 %v118
  %v671 = vunpack.c.l.b16 %v119
  %v672 = vunpack.c.h.b16 %v119
  %v673 = vunpack.c.l.b16 %v120
  %v674 = vunpack.c.h.b16 %v120
  %v675 = vunpack.c.l.b16 %v121
  %v676 = vunpack.c.h.b16 %v121
  %v677 = vunpack.c.l.b16 %v122
  %v678 = vunpack.c.h.b16 %v122
  %v679 = vunpack.c.l.b16 %v123
  %v680 = vunpack.c.h.b16 %v123
  %v681 = vunpack.c.l.b16 %v124
  %v682 = vunpack.c.h.b16 %v124
  %v683 = vunpack.c.l.b16 %v125
  %v684 = vunpack.c.h.b16 %v125
  %v685 = vunpack.c.l.b16 %v126
  %v686 = vunpack.c.h.b16 %v126
  %v687 = vpack.c.b16 %v477, %v463
  %v688 = vpack.c.b16 %v478, %v464
  %v689 = vpack.c.b16 %v479, %v465
  %v690 = vpack.c.b16 %v480, %v466
  %v691 = vpack.c.b16 %v481, %v467
  %v692 = vpack.c.b16 %v482, %v468
  %v693 = vpack.c.b16 %v483, %v469
  %v694 = vpack.c.b16 %v484, %v470
  %v695 = vpack.c.b16 %v485, %v471
  %v696 = vpack.c.b16 %v486, %v472
  %v697 = vpack.c.b16 %v487, %v473
  %v698 = vpack.c.b16 %v488, %v474
  %v699 = vpack.c.b16 %v489, %v475
  %v700 = vpack.c.b16 %v490, %v476
  %v701 = vpack.c.b16 %v505, %v491
  %v702 = vpack.c.b16 %v506, %v492
  %v703 = vpack.c.b16 %v507, %v493
  %v704 = vpack.c.b16 %v508, %v494
  %v705 = vpack.c.b16 %v509, %v495
  %v706 = vpack.c.b16 %v510, %v496
  %v707 = vpack.c.b16 %v511, %v497
  %v708 = vpack.c.b16 %v512, %v498
  %v709 = vpack.c.b16 %v513, %v499
  %v710 = vpack.c.b16 %v514, %v500
  %v711 = vpack.c.b16 %v515, %v501
  %v712 = vpack.c.b16 %v516, %v502
  %v713 = vpack.c.b16 %v517, %v503
  %v714 = vpack.c.b16 %v518, %v504
  %v715 = vpack.c.b16 %v533, %v519
  %v716 = vpack.c.b16 %v534, %v520
  %v717 = vpack.c.b16 %v535, %v521
  %v718 = vpack.c.b16 %v536, %v522
  %v719 = vpack.c.b16 %v537, %v523
  %v720 = vpack.c.b16 %v538, %v524
  %v721 = vpack.c.b16 %v539, %v525
  %v722 = vpack.c.b16 %v540, %v526
  %v723 = vpack.c.b16 %v541, %v527
  %v724 = vpack.c.b16 %v542, %v528
  %v725 = vpack.c.b16 %v543, %v529
  %v726 = vpack.c.b16 %v544, %v530
  %v727 = vpack.c.b16 %v545, %v531
  %v728 = vpack.c.b16 %v546, %v532
  %v729 = vpack.c.b16 %v561, %v547
  %v730 = vpack.c.b16 %v562, %v548
  %v731 = vpack.c.b16 %v563, %v549
  %v732 = vpack.c.b16 %v564, %v550
  %v733 = vpack.c.b16 %v565, %v551
  %v734 = vpack.c.b16 %v566, %v552
  %v735 = vpack.c.b16 %v567, %v553
  %v736 = vpack.c.b16 %v568, %v554
  %v737 = vpack.c.b16 %v569, %v555
  %v738 = vpack.c.b16 %v570, %v556
  %v739 = vpack.c.b16 %v571, %v557
  %v740 = vpack.c.b16 %v572, %v558
  %v741 = vpack.c.b16 %v573, %v559
  %v742 = vpack.c.b16 %v574, %v560
  %v743 = vpack.c.b16 %v589, %v575
  %v744 = vpack.c.b16 %v590, %v576
  %v745 = vpack.c.b16 %v591, %v577
  %v746 = vpack.c.b16 %v592, %v578
  %v747 = vpack.c.b16 %v593, %v579
  %v748 = vpack.c.b16 %v594, %v580
  %v749 = vpack.c.b16 %v595, %v581
  %v750 = vpack.c.b16 %v596, %v582
  %v751 = vpack.c.b16 %v597, %v583
  %v752 = vpack.c.b16 %v598, %v584
  %v753 = vpack.c.b16 %v599, %v585
  %v754 = vpack.c.b16 %v600, %v586
  %v755 = vpack.c.b16 %v601, %v587
  %v756 = vpack.c.b16 %v602, %v588
  %v757 = vpack.c.b16 %v617, %v603
  %v758 = vpack.c.b16 %v618, %v604
  %v759 = vpack.c.b16 %v619, %v605
  %v760 = vpack.c.b16 %v620, %v606
  %v761 = vpack.c.b16 %v621, %v607
  %v762 = vpack.c.b16 %v622, %v608
  %v763 = vpack.c.b16 %v623, %v609
  %v764 = vpack.c.b16 %v624, %v610
  %v765 = vpack.c.b16 %v625, %v611
  %v766 = vpack.c.b16 %v626, %v612
  %v767 = vpack.c.b16 %v627, %v613
  %v768 = vpack.c.b16 %v628, %v614
  %v769 = vpack.c.b16 %v629, %v615
  %v770 = vpack.c.b16 %v630, %v616
  %v771 = vpack.c.b16 %v645, %v631
  %v772 = vpack.c.b16 %v646, %v632
  %v773 = vpack.c.b16 %v647, %v633
  %v774 = vpack.c.b16 %v648, %v634
  %v775 = vpack.c.b16 %v649, %v635
  %v776 = vpack.c.b16 %v650, %v636
  %v777 = vpack.c.b16 %v651, %v637
  %v778 = vpack.c.b16 %v652, %v638
  %v779 = vpack.c.b16 %v653, %v639
  %v780 = vpack.c.b16 %v654, %v640
  %v781 = vpack.c.b16 %v655, %v641
  %v782 = vpack.c.b16 %v656, %v642
  %v783 = vpack.c.b16 %v657, %v643
  %v784 = vpack.c.b16 %v658, %v644
  %v785 = vpack.c.b16 %v673, %v659
  %v786 = vpack.c.b16 %v674, %v660
  %v787 = vpack.c.b16 %v675, %v661
  %v788 = vpack.c.b16 %v676, %v662
  %v789 = vpack.c.b16 %v677, %v663
  %v790 = vpack.c.b16 %v678, %v664
  %v791 = vpack.c.b16 %v679, %v665
  %v792 = vpack.c.b16 %v680, %v666
  %v793 = vpack.c.b16 %v681, %v667
  %v794 = vpack.c.b16 %v682, %v668
  %v795 = vpack.c.b16 %v683, %v669
  %v796 = vpack.c.b16 %v684, %v670
  %v797 = vpack.c.b16 %v685, %v671
  %v798 = vpack.c.b16 %v686, %v672
  %v1123 = vunpack.c.l.b16 %v127
  %v1124 = vunpack.c.l.b16 %v128
  %v1125 = vunpack.c.l.b16 %v129
  %v1126 = vunpack.c.l.b16 %v130
  %v1127 = vunpack.c.l.b16 %v131
  %v1128 = vunpack.c.l.b16 %v132
  %v1129 = vunpack.c.l.b16 %v133
  %v1130 = vunpack.c.l.b16 %v134
  %v1131 = vunpack.c.l.b16 %v135
  %v1132 = vunpack.c.l.b16 %v136
  %v1133 = vunpack.c.l.b16 %v137
  %v1134 = vunpack.c.l.b16 %v138
  %v1135 = vunpack.c.l.b16 %v139
  %v1136 = vunpack.c.l.b16 %v140
  %v1137 = vunpack.c.l.b16 %v141
  %v1138 = vunpack.c.l.b16 %v142
  %v1139 = vunpack.c.l.b16 %v143
  %v1140 = vunpack.c.l.b16 %v144
  %v1141 = vunpack.c.l.b16 %v145
  %v1142 = vunpack.c.l.b16 %v146
  %v1143 = vunpack.c.l.b16 %v147
  %v1144 = vunpack.c.l.b16 %v148
  %v1145 = vunpack.c.l.b16 %v149
  %v1146 = vunpack.c.l.b16 %v150
  %v1147 = vunpack.c.l.b16 %v151
  %v1148 = vunpack.c.l.b16 %v152
  %v1149 = vunpack.c.l.b16 %v153
  %v1150 = vunpack.c.l.b16 %v154
  %v1151 = vunpack.c.l.b16 %v155
  %v1152 = vunpack.c.l.b16 %v156
  %v1153 = vunpack.c.l.b16 %v157
  %v1154 = vunpack.c.l.b16 %v158
  %v1155 = vunpack.c.l.b16 %v159
  %v1156 = vunpack.c.l.b16 %v160
  %v1157 = vunpack.c.l.b16 %v161
  %v1158 = vunpack.c.l.b16 %v162
  %v1159 = vunpack.c.l.b16 %v163
  %v1160 = vunpack.c.l.b16 %v164
  %v1161 = vunpack.c.l.b16 %v165
  %v1162 = vunpack.c.l.b16 %v166
  %v1163 = vunpack.c.l.b16 %v167
  %v1164 = vunpack.c.l.b16 %v168
  %v1165 = vunpack.c.l.b16 %v169
  %v1166 = vunpack.c.l.b16 %v170
  %v1167 = vunpack.c.l.b16 %v171
  %v1168 = vunpack.c.l.b16 %v172
  %v1169 = vunpack.c.l.b16 %v173
  %v1170 = vunpack.c.l.b16 %v174
  %v1171 = vunpack.c.l.b16 %v175
  %v1172 = vunpack.c.l.b16 %v176
  %v1173 = vunpack.c.l.b16 %v177
  %v1174 = vunpack.c.l.b16 %v178
  %v1175 = vunpack.c.l.b16 %v179
  %v1176 = vunpack.c.l.b16 %v180
  %v1177 = vunpack.c.l.b16 %v181
  %v1178 = vunpack.c.l.b16 %v182
  %v1179 = vunpack.c.l.b16 %v183
  %v1180 = vunpack.c.l.b16 %v184
  %v1181 = vunpack.c.l.b16 %v185
  %v1182 = vunpack.c.l.b16 %v186
  %v1183 = vunpack.c.l.b16 %v187
  %v1184 = vunpack.c.l.b16 %v188
  %v1185 = vunpack.c.l.b16 %v189
  %v1186 = vunpack.c.l.b16 %v190
  %v1187 = vunpack.c.l.b16 %v191
  %v1188 = vunpack.c.l.b16 %v192
  %v1189 = vunpack.c.l.b16 %v193
  %v1190 = vunpack.c.l.b16 %v194
  %v1191 = vunpack.c.l.b16 %v195
  %v1192 = vunpack.c.l.b16 %v196
  %v1193 = vunpack.c.l.b16 %v197
  %v1194 = vunpack.c.l.b16 %v198
  %v1195 = vunpack.c.l.b16 %v199
  %v1196 = vunpack.c.l.b16 %v200
  %v1197 = vunpack.c.l.b16 %v201
  %v1198 = vunpack.c.l.b16 %v202
  %v1199 = vunpack.c.l.b16 %v203
  %v1200 = vunpack.c.l.b16 %v204
  %v1201 = vunpack.c.l.b16 %v205
  %v1202 = vunpack.c.l.b16 %v206
  %v1203 = vunpack.c.l.b16 %v207
  %v1204 = vunpack.c.l.b16 %v208
  %v1205 = vunpack.c.l.b16 %v209
  %v1206 = vunpack.c.l.b16 %v210
  %v1207 = vunpack.c.l.b16 %v211
  %v1208 = vunpack.c.l.b16 %v212
  %v1209 = vunpack.c.l.b16 %v213
  %v1210 = vunpack.c.l.b16 %v214
  %v1211 = vunpack.c.l.b16 %v215
  %v1212 = vunpack.c.l.b16 %v216
  %v1213 = vunpack.c.l.b16 %v217
  %v1214 = vunpack.c.l.b16 %v218
  %v1215 = vunpack.c.l.b16 %v219
  %v1216 = vunpack.c.l.b16 %v220
  %v1217 = vunpack.c.l.b16 %v221
  %v1218 = vunpack.c.l.b16 %v222
  %v1219 = vunpack.c.l.b16 %v223
  %v1220 = vunpack.c.l.b16 %v224
  %v1221 = vunpack.c.l.b16 %v225
  %v1222 = vunpack.c.l.b16 %v226
  %v1223 = vunpack.c.l.b16 %v227
  %v1224 = vunpack.c.l.b16 %v228
  %v1225 = vunpack.c.l.b16 %v229
  %v1226 = vunpack.c.l.b16 %v230
  %v1227 = vunpack.c.l.b16 %v231
  %v1228 = vunpack.c.l.b16 %v232
  %v1229 = vunpack.c.l.b16 %v233
  %v1230 = vunpack.c.l.b16 %v234
  %v1231 = vunpack.c.l.b16 %v235
  %v1232 = vunpack.c.l.b16 %v236
  %v1233 = vunpack.c.l.b16 %v237
  %v1234 = vunpack.c.l.b16 %v238
  %v1235 = vunpack.c.l.b16 %v239
  %v1236 = vunpack.c.l.b16 %v240
  %v1237 = vunpack.c.l.b16 %v241
  %v1238 = vunpack.c.l.b16 %v242
  %v1239 = vunpack.c.l.b16 %v243
  %v1240 = vunpack.c.l.b16 %v244
  %v1241 = vunpack.c.l.b16 %v245
  %v1242 = vunpack.c.l.b16 %v246
  %v1243 = vunpack.c.l.b16 %v247
  %v1244 = vunpack.c.l.b16 %v248
  %v1245 = vunpack.c.l.b16 %v249
  %v1246 = vunpack.c.l.b16 %v250
  %v1247 = vunpack.c.l.b16 %v251
  %v1248 = vunpack.c.l.b16 %v252
  %v1249 = vunpack.c.l.b16 %v253
  %v1250 = vunpack.c.l.b16 %v254
  %v1251 = vunpack.c.l.b16 %v255
  %v1252 = vunpack.c.l.b16 %v256
  %v1253 = vunpack.c.l.b16 %v257
  %v1254 = vunpack.c.l.b16 %v258
  %v1255 = vunpack.c.l.b16 %v259
  %v1256 = vunpack.c.l.b16 %v260
  %v1257 = vunpack.c.l.b16 %v261
  %v1258 = vunpack.c.l.b16 %v262
  %v1259 = vunpack.c.l.b16 %v263
  %v1260 = vunpack.c.l.b16 %v264
  %v1261 = vunpack.c.l.b16 %v265
  %v1262 = vunpack.c.l.b16 %v266
  %v1263 = vunpack.c.l.b16 %v267
  %v1264 = vunpack.c.l.b16 %v268
  %v1265 = vunpack.c.l.b16 %v269
  %v1266 = vunpack.c.l.b16 %v270
  %v1267 = vunpack.c.l.b16 %v271
  %v1268 = vunpack.c.l.b16 %v272
  %v1269 = vunpack.c.l.b16 %v273
  %v1270 = vunpack.c.l.b16 %v274
  %v1271 = vunpack.c.l.b16 %v275
  %v1272 = vunpack.c.l.b16 %v276
  %v1273 = vunpack.c.l.b16 %v277
  %v1274 = vunpack.c.l.b16 %v278
  %v1275 = vunpack.c.l.b16 %v279
  %v1276 = vunpack.c.l.b16 %v280
  %v1277 = vunpack.c.l.b16 %v281
  %v1278 = vunpack.c.l.b16 %v282
  %v1279 = vunpack.c.l.b16 %v283
  %v1280 = vunpack.c.l.b16 %v284
  %v1281 = vunpack.c.l.b16 %v285
  %v1282 = vunpack.c.l.b16 %v286
  %v1283 = vunpack.c.l.b16 %v287
  %v1284 = vunpack.c.l.b16 %v288
  %v1285 = vunpack.c.l.b16 %v289
  %v1286 = vunpack.c.l.b16 %v290
  %v1287 = vunpack.c.l.b16 %v291
  %v1288 = vunpack.c.l.b16 %v292
  %v1289 = vunpack.c.l.b16 %v293
  %v1290 = vunpack.c.l.b16 %v294
  %v1291 = vunpack.c.l.b16 %v295
  %v1292 = vunpack.c.l.b16 %v296
  %v1293 = vunpack.c.l.b16 %v297
  %v1294 = vunpack.c.l.b16 %v298
  %v1295 = vunpack.c.l.b16 %v299
  %v1296 = vunpack.c.l.b16 %v300
  %v1297 = vunpack.c.l.b16 %v301
  %v1298 = vunpack.c.l.b16 %v302
  %v1299 = vunpack.c.l.b16 %v303
  %v1300 = vunpack.c.l.b16 %v304
  %v1301 = vunpack.c.l.b16 %v305
  %v1302 = vunpack.c.l.b16 %v306
  %v1303 = vunpack.c.l.b16 %v307
  %v1304 = vunpack.c.l.b16 %v308
  %v1305 = vunpack.c.l.b16 %v309
  %v1306 = vunpack.c.l.b16 %v310
  %v1307 = vunpack.c.l.b16 %v311
  %v1308 = vunpack.c.l.b16 %v312
  %v1309 = vunpack.c.l.b16 %v313
  %v1310 = vunpack.c.l.b16 %v314
  %v1311 = vunpack.c.l.b16 %v315
  %v1312 = vunpack.c.l.b16 %v316
  %v1313 = vunpack.c.l.b16 %v317
  %v1314 = vunpack.c.l.b16 %v318
  %v1315 = vunpack.c.l.b16 %v319
  %v1316 = vunpack.c.l.b16 %v320
  %v1317 = vunpack.c.l.b16 %v321
  %v1318 = vunpack.c.l.b16 %v322
  %v1319 = vunpack.c.l.b16 %v323
  %v1320 = vunpack.c.l.b16 %v324
  %v1321 = vunpack.c.l.b16 %v325
  %v1322 = vunpack.c.l.b16 %v326
  %v1323 = vunpack.c.l.b16 %v327
  %v1324 = vunpack.c.l.b16 %v328
  %v1325 = vunpack.c.l.b16 %v329
  %v1326 = vunpack.c.l.b16 %v330
  %v1327 = vunpack.c.l.b16 %v331
  %v1328 = vunpack.c.l.b16 %v332
  %v1329 = vunpack.c.l.b16 %v333
  %v1330 = vunpack.c.l.b16 %v334
  %v1331 = vunpack.c.l.b16 %v335
  %v1332 = vunpack.c.l.b16 %v336
  %v1333 = vunpack.c.l.b16 %v337
  %v1334 = vunpack.c.l.b16 %v338
  %v1335 = vunpack.c.l.b16 %v339
  %v1336 = vunpack.c.l.b16 %v340
  %v1337 = vunpack.c.l.b16 %v341
  %v1338 = vunpack.c.l.b16 %v342
  %v1339 = vunpack.c.l.b16 %v343
  %v1340 = vunpack.c.l.b16 %v344
  %v1341 = vunpack.c.l.b16 %v345
  %v1342 = vunpack.c.l.b16 %v346
  %v1343 = vpack.c.b16 %v1124, %v1123
  %v1344 = vpack.c.b16 %v1126, %v1125
  %v1345 = vpack.c.b16 %v1128, %v1127
  %v1346 = vpack.c.b16 %v1130, %v1129
  %v1347 = vpack.c.b16 %v1132, %v1131
  %v1348 = vpack.c.b16 %v1134, %v1133
  %v1349 = vpack.c.b16 %v1136, %v1135
  %v1350 = vpack.c.b16 %v1138, %v1137
  %v1351 = vpack.c.b16 %v1140, %v1139
  %v1352 = vpack.c.b16 %v1142, %v1141
  %v1353 = vpack.c.b16 %v1144, %v1143
  %v1354 = vpack.c.b16 %v1146, %v1145
  %v1355 = vpack.c.b16 %v1148, %v1147
  %v1356 = vpack.c.b16 %v1150, %v1149
  %v1357 = vpack.c.b16 %v1152, %v1151
  %v1358 = vpack.c.b16 %v1154, %v1153
  %v1359 = vpack.c.b16 %v1156, %v1155
  %v1360 = vpack.c.b16 %v1158, %v1157
  %v1361 = vpack.c.b16 %v1160, %v1159
  %v1362 = vpack.c.b16 %v1162, %v1161
  %v1363 = vpack.c.b16 %v1164, %v1163
  %v1364 = vpack.c.b16 %v1166, %v1165
  %v1365 = vpack.c.b16 %v1168, %v1167
  %v1366 = vpack.c.b16 %v1170, %v1169
  %v1367 = vpack.c.b16 %v1172, %v1171
  %v1368 = vpack.c.b16 %v1174, %v1173
  %v1369 = vpack.c.b16 %v1176, %v1175
  %v1370 = vpack.c.b16 %v1178, %v1177
  %v1371 = vpack.c.b16 %v1180, %v1179
  %v1372 = vpack.c.b16 %v1182, %v1181
  %v1373 = vpack.c.b16 %v1184, %v1183
  %v1374 = vpack.c.b16 %v1186, %v1185
  %v1375 = vpack.c.b16 %v1188, %v1187
  %v1376 = vpack.c.b16 %v1190, %v1189
  %v1377 = vpack.c.b16 %v1192, %v1191
  %v1378 = vpack.c.b16 %v1194, %v1193
  %v1379 = vpack.c.b16 %v1196, %v1195
  %v1380 = vpack.c.b16 %v1198, %v1197
  %v1381 = vpack.c.b16 %v1200, %v1199
  %v1382 = vpack.c.b16 %v1202, %v1201
  %v1383 = vpack.c.b16 %v1204, %v1203
  %v1384 = vpack.c.b16 %v1206, %v1205
  %v1385 = vpack.c.b16 %v1208, %v1207
  %v1386 = vpack.c.b16 %v1210, %v1209
  %v1387 = vpack.c.b16 %v1212, %v1211
  %v1388 = vpack.c.b16 %v1214, %v1213
  %v1389 = vpack.c.b16 %v1216, %v1215
  %v1390 = vpack.c.b16 %v1218, %v1217
  %v1391 = vpack.c.b16 %v1220, %v1219
  %v1392 = vpack.c.b16 %v1222, %v1221
  %v1393 = vpack.c.b16 %v1224, %v1223
  %v1394 = vpack.c.b16 %v1226, %v1225
  %v1395 = vpack.c.b16 %v1228, %v1227
  %v1396 = vpack.c.b16 %v1230, %v1229
  %v1397 = vpack.c.b16 %v1232, %v1231
  %v1398 = vpack.c.b16 %v1234, %v1233
  %v1399 = vpack.c.b16 %v1236, %v1235
  %v1400 = vpack.c.b16 %v1238, %v1237
  %v1401 = vpack.c.b16 %v1240, %v1239
  %v1402 = vpack.c.b16 %v1242, %v1241
  %v1403 = vpack.c.b16 %v1244, %v1243
  %v1404 = vpack.c.b16 %v1246, %v1245
  %v1405 = vpack.c.b16 %v1248, %v1247
  %v1406 = vpack.c.b16 %v1250, %v1249
  %v1407 = vpack.c.b16 %v1252, %v1251
  %v1408 = vpack.c.b16 %v1254, %v1253
  %v1409 = vpack.c.b16 %v1256, %v1255
  %v1410 = vpack.c.b16 %v1258, %v1257
  %v1411 = vpack.c.b16 %v1260, %v1259
  %v1412 = vpack.c.b16 %v1262, %v1261
  %v1413 = vpack.c.b16 %v1264, %v1263
  %v1414 = vpack.c.b16 %v1266, %v1265
  %v1415 = vpack.c.b16 %v1268, %v1267
  %v1416 = vpack.c.b16 %v1270, %v1269
  %v1417 = vpack.c.b16 %v1272, %v1271
  %v1418 = vpack.c.b16 %v1274, %v1273
  %v1419 = vpack.c.b16 %v1276, %v1275
  %v1420 = vpack.c.b16 %v1278, %v1277
  %v1421 = vpack.c.b16 %v1280, %v1279
  %v1422 = vpack.c.b16 %v1282, %v1281
  %v1423 = vpack.c.b16 %v1284, %v1283
  %v1424 = vpack.c.b16 %v1286, %v1285
  %v1425 = vpack.c.b16 %v1288, %v1287
  %v1426 = vpack.c.b16 %v1290, %v1289
  %v1427 = vpack.c.b16 %v1292, %v1291
  %v1428 = vpack.c.b16 %v1294, %v1293
  %v1429 = vpack.c.b16 %v1296, %v1295
  %v1430 = vpack.c.b16 %v1298, %v1297
  %v1431 = vpack.c.b16 %v1300, %v1299
  %v1432 = vpack.c.b16 %v1302, %v1301
  %v1433 = vpack.c.b16 %v1304, %v1303
  %v1434 = vpack.c.b16 %v1306, %v1305
  %v1435 = vpack.c.b16 %v1308, %v1307
  %v1436 = vpack.c.b16 %v1310, %v1309
  %v1437 = vpack.c.b16 %v1312, %v1311
  %v1438 = vpack.c.b16 %v1314, %v1313
  %v1439 = vpack.c.b16 %v1316, %v1315
  %v1440 = vpack.c.b16 %v1318, %v1317
  %v1441 = vpack.c.b16 %v1320, %v1319
  %v1442 = vpack.c.b16 %v1322, %v1321
  %v1443 = vpack.c.b16 %v1324, %v1323
  %v1444 = vpack.c.b16 %v1326, %v1325
  %v1445 = vpack.c.b16 %v1328, %v1327
  %v1446 = vpack.c.b16 %v1330, %v1329
  %v1447 = vpack.c.b16 %v1332, %v1331
  %v1448 = vpack.c.b16 %v1334, %v1333
  %v1449 = vpack.c.b16 %v1336, %v1335
  %v1450 = vpack.c.b16 %v1338, %v1337
  %v1451 = vpack.c.b16 %v1340, %v1339
  %v1452 = vpack.c.b16 %v1342, %v1341
  %vm1563 = vcmask 785408
  %v1565 = vsel %vm1563, %v700, 0
  %v1568 = vsel %vm1563, %v714, 0
  %v1571 = vsel %vm1563, %v728, 0
  %v1574 = vsel %vm1563, %v742, 0
  %v1577 = vsel %vm1563, %v756, 0
  %v1580 = vsel %vm1563, %v770, 0
  %v1583 = vsel %vm1563, %v784, 0
  %v1586 = vsel %vm1563, %v798, 0
  %1588 = vmatpush.bf16.msra.mxu0 %v1350
  %1589 = vmatpush.bf16.msra.mxu0 %v1349
  %1590 = vmatpush.bf16.msra.mxu0 %v1348
  %1591 = vmatpush.bf16.msra.mxu0 %v1347
  %1592 = vmatpush.bf16.msra.mxu0 %v1346
  %1593 = vmatpush.bf16.msra.mxu0 %v1345
  %1594 = vmatpush.bf16.msra.mxu0 %v1344
  %1595 = vmatpush.bf16.msra.mxu0 %v1343
  %1596 = vmatmul.bf16.gmra.mxu0 %v687
  %v1597 = vpop.f32.mrf.mxu0
  %v1598 = vadd.f32 %v349, %v1597
  %v1599 = vpop.f32.mrf.mxu0
  %v1600 = vadd.f32 %v349, %v1599
  %1601 = vmatmul.bf16.gmra.mxu0 %v701
  %v1602 = vpop.f32.mrf.mxu0
  %v1603 = vadd.f32 %v349, %v1602
  %v1604 = vpop.f32.mrf.mxu0
  %v1605 = vadd.f32 %v349, %v1604
  %1606 = vmatmul.bf16.gmra.mxu0 %v715
  %v1607 = vpop.f32.mrf.mxu0
  %v1608 = vadd.f32 %v349, %v1607
  %v1609 = vpop.f32.mrf.mxu0
  %v1610 = vadd.f32 %v349, %v1609
  %1611 = vmatmul.bf16.gmra.mxu0 %v729
  %v1612 = vpop.f32.mrf.mxu0
  %v1613 = vadd.f32 %v349, %v1612
  %v1614 = vpop.f32.mrf.mxu0
  %v1615 = vadd.f32 %v349, %v1614
  %1616 = vmatmul.bf16.gmra.mxu0 %v743
  %v1617 = vpop.f32.mrf.mxu0
  %v1618 = vadd.f32 %v349, %v1617
  %v1619 = vpop.f32.mrf.mxu0
  %v1620 = vadd.f32 %v349, %v1619
  %1621 = vmatmul.bf16.gmra.mxu0 %v757
  %v1622 = vpop.f32.mrf.mxu0
  %v1623 = vadd.f32 %v349, %v1622
  %v1624 = vpop.f32.mrf.mxu0
  %v1625 = vadd.f32 %v349, %v1624
  %1626 = vmatmul.bf16.gmra.mxu0 %v771
  %v1627 = vpop.f32.mrf.mxu0
  %v1628 = vadd.f32 %v349, %v1627
  %v1629 = vpop.f32.mrf.mxu0
  %v1630 = vadd.f32 %v349, %v1629
  %1631 = vmatmul.bf16.gmra.mxu0 %v785
  %v1632 = vpop.f32.mrf.mxu0
  %v1633 = vadd.f32 %v349, %v1632
  %v1634 = vpop.f32.mrf.mxu0
  %v1635 = vadd.f32 %v349, %v1634
  %1636 = vdwg.mxu0
  %1637 = vmatpush.bf16.msra.mxu0 %v1358
  %1638 = vmatpush.bf16.msra.mxu0 %v1357
  %1639 = vmatpush.bf16.msra.mxu0 %v1356
  %1640 = vmatpush.bf16.msra.mxu0 %v1355
  %1641 = vmatpush.bf16.msra.mxu0 %v1354
  %1642 = vmatpush.bf16.msra.mxu0 %v1353
  %1643 = vmatpush.bf16.msra.mxu0 %v1352
  %1644 = vmatpush.bf16.msra.mxu0 %v1351
  %1645 = vmatmul.bf16.gmra.mxu0 %v688
  %v1646 = vpop.f32.mrf.mxu0
  %v1647 = vadd.f32 %v1598, %v1646
  %v1648 = vpop.f32.mrf.mxu0
  %v1649 = vadd.f32 %v1600, %v1648
  %1650 = vmatmul.bf16.gmra.mxu0 %v702
  %v1651 = vpop.f32.mrf.mxu0
  %v1652 = vadd.f32 %v1603, %v1651
  %v1653 = vpop.f32.mrf.mxu0
  %v1654 = vadd.f32 %v1605, %v1653
  %1655 = vmatmul.bf16.gmra.mxu0 %v716
  %v1656 = vpop.f32.mrf.mxu0
  %v1657 = vadd.f32 %v1608, %v1656
  %v1658 = vpop.f32.mrf.mxu0
  %v1659 = vadd.f32 %v1610, %v1658
  %1660 = vmatmul.bf16.gmra.mxu0 %v730
  %v1661 = vpop.f32.mrf.mxu0
  %v1662 = vadd.f32 %v1613, %v1661
  %v1663 = vpop.f32.mrf.mxu0
  %v1664 = vadd.f32 %v1615, %v1663
  %1665 = vmatmul.bf16.gmra.mxu0 %v744
  %v1666 = vpop.f32.mrf.mxu0
  %v1667 = vadd.f32 %v1618, %v1666
  %v1668 = vpop.f32.mrf.mxu0
  %v1669 = vadd.f32 %v1620, %v1668
  %1670 = vmatmul.bf16.gmra.mxu0 %v758
  %v1671 = vpop.f32.mrf.mxu0
  %v1672 = vadd.f32 %v1623, %v1671
  %v1673 = vpop.f32.mrf.mxu0
  %v1674 = vadd.f32 %v1625, %v1673
  %1675 = vmatmul.bf16.gmra.mxu0 %v772
  %v1676 = vpop.f32.mrf.mxu0
  %v1677 = vadd.f32 %v1628, %v1676
  %v1678 = vpop.f32.mrf.mxu0
  %v1679 = vadd.f32 %v1630, %v1678
  %1680 = vmatmul.bf16.gmra.mxu0 %v786
  %v1681 = vpop.f32.mrf.mxu0
  %v1682 = vadd.f32 %v1633, %v1681
  %v1683 = vpop.f32.mrf.mxu0
  %v1684 = vadd.f32 %v1635, %v1683
  %1685 = vdwg.mxu0
  %1686 = vmatpush.bf16.msra.mxu0 %v1366
  %1687 = vmatpush.bf16.msra.mxu0 %v1365
  %1688 = vmatpush.bf16.msra.mxu0 %v1364
  %1689 = vmatpush.bf16.msra.mxu0 %v1363
  %1690 = vmatpush.bf16.msra.mxu0 %v1362
  %1691 = vmatpush.bf16.msra.mxu0 %v1361
  %1692 = vmatpush.bf16.msra.mxu0 %v1360
  %1693 = vmatpush.bf16.msra.mxu0 %v1359
  %1694 = vmatmul.bf16.gmra.mxu0 %v689
  %v1695 = vpop.f32.mrf.mxu0
  %v1696 = vadd.f32 %v1647, %v1695
  %v1697 = vpop.f32.mrf.mxu0
  %v1698 = vadd.f32 %v1649, %v1697
  %1699 = vmatmul.bf16.gmra.mxu0 %v703
  %v1700 = vpop.f32.mrf.mxu0
  %v1701 = vadd.f32 %v1652, %v1700
  %v1702 = vpop.f32.mrf.mxu0
  %v1703 = vadd.f32 %v1654, %v1702
  %1704 = vmatmul.bf16.gmra.mxu0 %v717
  %v1705 = vpop.f32.mrf.mxu0
  %v1706 = vadd.f32 %v1657, %v1705
  %v1707 = vpop.f32.mrf.mxu0
  %v1708 = vadd.f32 %v1659, %v1707
  %1709 = vmatmul.bf16.gmra.mxu0 %v731
  %v1710 = vpop.f32.mrf.mxu0
  %v1711 = vadd.f32 %v1662, %v1710
  %v1712 = vpop.f32.mrf.mxu0
  %v1713 = vadd.f32 %v1664, %v1712
  %1714 = vmatmul.bf16.gmra.mxu0 %v745
  %v1715 = vpop.f32.mrf.mxu0
  %v1716 = vadd.f32 %v1667, %v1715
  %v1717 = vpop.f32.mrf.mxu0
  %v1718 = vadd.f32 %v1669, %v1717
  %1719 = vmatmul.bf16.gmra.mxu0 %v759
  %v1720 = vpop.f32.mrf.mxu0
  %v1721 = vadd.f32 %v1672, %v1720
  %v1722 = vpop.f32.mrf.mxu0
  %v1723 = vadd.f32 %v1674, %v1722
  %1724 = vmatmul.bf16.gmra.mxu0 %v773
  %v1725 = vpop.f32.mrf.mxu0
  %v1726 = vadd.f32 %v1677, %v1725
  %v1727 = vpop.f32.mrf.mxu0
  %v1728 = vadd.f32 %v1679, %v1727
  %1729 = vmatmul.bf16.gmra.mxu0 %v787
  %v1730 = vpop.f32.mrf.mxu0
  %v1731 = vadd.f32 %v1682, %v1730
  %v1732 = vpop.f32.mrf.mxu0
  %v1733 = vadd.f32 %v1684, %v1732
  %1734 = vdwg.mxu0
  %1735 = vmatpush.bf16.msra.mxu0 %v1374
  %1736 = vmatpush.bf16.msra.mxu0 %v1373
  %1737 = vmatpush.bf16.msra.mxu0 %v1372
  %1738 = vmatpush.bf16.msra.mxu0 %v1371
  %1739 = vmatpush.bf16.msra.mxu0 %v1370
  %1740 = vmatpush.bf16.msra.mxu0 %v1369
  %1741 = vmatpush.bf16.msra.mxu0 %v1368
  %1742 = vmatpush.bf16.msra.mxu0 %v1367
  %1743 = vmatmul.bf16.gmra.mxu0 %v690
  %v1744 = vpop.f32.mrf.mxu0
  %v1745 = vadd.f32 %v1696, %v1744
  %v1746 = vpop.f32.mrf.mxu0
  %v1747 = vadd.f32 %v1698, %v1746
  %1748 = vmatmul.bf16.gmra.mxu0 %v704
  %v1749 = vpop.f32.mrf.mxu0
  %v1750 = vadd.f32 %v1701, %v1749
  %v1751 = vpop.f32.mrf.mxu0
  %v1752 = vadd.f32 %v1703, %v1751
  %1753 = vmatmul.bf16.gmra.mxu0 %v718
  %v1754 = vpop.f32.mrf.mxu0
  %v1755 = vadd.f32 %v1706, %v1754
  %v1756 = vpop.f32.mrf.mxu0
  %v1757 = vadd.f32 %v1708, %v1756
  %1758 = vmatmul.bf16.gmra.mxu0 %v732
  %v1759 = vpop.f32.mrf.mxu0
  %v1760 = vadd.f32 %v1711, %v1759
  %v1761 = vpop.f32.mrf.mxu0
  %v1762 = vadd.f32 %v1713, %v1761
  %1763 = vmatmul.bf16.gmra.mxu0 %v746
  %v1764 = vpop.f32.mrf.mxu0
  %v1765 = vadd.f32 %v1716, %v1764
  %v1766 = vpop.f32.mrf.mxu0
  %v1767 = vadd.f32 %v1718, %v1766
  %1768 = vmatmul.bf16.gmra.mxu0 %v760
  %v1769 = vpop.f32.mrf.mxu0
  %v1770 = vadd.f32 %v1721, %v1769
  %v1771 = vpop.f32.mrf.mxu0
  %v1772 = vadd.f32 %v1723, %v1771
  %1773 = vmatmul.bf16.gmra.mxu0 %v774
  %v1774 = vpop.f32.mrf.mxu0
  %v1775 = vadd.f32 %v1726, %v1774
  %v1776 = vpop.f32.mrf.mxu0
  %v1777 = vadd.f32 %v1728, %v1776
  %1778 = vmatmul.bf16.gmra.mxu0 %v788
  %v1779 = vpop.f32.mrf.mxu0
  %v1780 = vadd.f32 %v1731, %v1779
  %v1781 = vpop.f32.mrf.mxu0
  %v1782 = vadd.f32 %v1733, %v1781
  %1783 = vdwg.mxu0
  %1784 = vmatpush.bf16.msra.mxu0 %v1382
  %1785 = vmatpush.bf16.msra.mxu0 %v1381
  %1786 = vmatpush.bf16.msra.mxu0 %v1380
  %1787 = vmatpush.bf16.msra.mxu0 %v1379
  %1788 = vmatpush.bf16.msra.mxu0 %v1378
  %1789 = vmatpush.bf16.msra.mxu0 %v1377
  %1790 = vmatpush.bf16.msra.mxu0 %v1376
  %1791 = vmatpush.bf16.msra.mxu0 %v1375
  %1792 = vmatmul.bf16.gmra.mxu0 %v691
  %v1793 = vpop.f32.mrf.mxu0
  %v1794 = vadd.f32 %v1745, %v1793
  %v1795 = vpop.f32.mrf.mxu0
  %v1796 = vadd.f32 %v1747, %v1795
  %1797 = vmatmul.bf16.gmra.mxu0 %v705
  %v1798 = vpop.f32.mrf.mxu0
  %v1799 = vadd.f32 %v1750, %v1798
  %v1800 = vpop.f32.mrf.mxu0
  %v1801 = vadd.f32 %v1752, %v1800
  %1802 = vmatmul.bf16.gmra.mxu0 %v719
  %v1803 = vpop.f32.mrf.mxu0
  %v1804 = vadd.f32 %v1755, %v1803
  %v1805 = vpop.f32.mrf.mxu0
  %v1806 = vadd.f32 %v1757, %v1805
  %1807 = vmatmul.bf16.gmra.mxu0 %v733
  %v1808 = vpop.f32.mrf.mxu0
  %v1809 = vadd.f32 %v1760, %v1808
  %v1810 = vpop.f32.mrf.mxu0
  %v1811 = vadd.f32 %v1762, %v1810
  %1812 = vmatmul.bf16.gmra.mxu0 %v747
  %v1813 = vpop.f32.mrf.mxu0
  %v1814 = vadd.f32 %v1765, %v1813
  %v1815 = vpop.f32.mrf.mxu0
  %v1816 = vadd.f32 %v1767, %v1815
  %1817 = vmatmul.bf16.gmra.mxu0 %v761
  %v1818 = vpop.f32.mrf.mxu0
  %v1819 = vadd.f32 %v1770, %v1818
  %v1820 = vpop.f32.mrf.mxu0
  %v1821 = vadd.f32 %v1772, %v1820
  %1822 = vmatmul.bf16.gmra.mxu0 %v775
  %v1823 = vpop.f32.mrf.mxu0
  %v1824 = vadd.f32 %v1775, %v1823
  %v1825 = vpop.f32.mrf.mxu0
  %v1826 = vadd.f32 %v1777, %v1825
  %1827 = vmatmul.bf16.gmra.mxu0 %v789
  %v1828 = vpop.f32.mrf.mxu0
  %v1829 = vadd.f32 %v1780, %v1828
  %v1830 = vpop.f32.mrf.mxu0
  %v1831 = vadd.f32 %v1782, %v1830
  %1832 = vdwg.mxu0
  %1833 = vmatpush.bf16.msra.mxu0 %v1390
  %1834 = vmatpush.bf16.msra.mxu0 %v1389
  %1835 = vmatpush.bf16.msra.mxu0 %v1388
  %1836 = vmatpush.bf16.msra.mxu0 %v1387
  %1837 = vmatpush.bf16.msra.mxu0 %v1386
  %1838 = vmatpush.bf16.msra.mxu0 %v1385
  %1839 = vmatpush.bf16.msra.mxu0 %v1384
  %1840 = vmatpush.bf16.msra.mxu0 %v1383
  %1841 = vmatmul.bf16.gmra.mxu0 %v692
  %v1842 = vpop.f32.mrf.mxu0
  %v1843 = vadd.f32 %v1794, %v1842
  %v1844 = vpop.f32.mrf.mxu0
  %v1845 = vadd.f32 %v1796, %v1844
  %1846 = vmatmul.bf16.gmra.mxu0 %v706
  %v1847 = vpop.f32.mrf.mxu0
  %v1848 = vadd.f32 %v1799, %v1847
  %v1849 = vpop.f32.mrf.mxu0
  %v1850 = vadd.f32 %v1801, %v1849
  %1851 = vmatmul.bf16.gmra.mxu0 %v720
  %v1852 = vpop.f32.mrf.mxu0
  %v1853 = vadd.f32 %v1804, %v1852
  %v1854 = vpop.f32.mrf.mxu0
  %v1855 = vadd.f32 %v1806, %v1854
  %1856 = vmatmul.bf16.gmra.mxu0 %v734
  %v1857 = vpop.f32.mrf.mxu0
  %v1858 = vadd.f32 %v1809, %v1857
  %v1859 = vpop.f32.mrf.mxu0
  %v1860 = vadd.f32 %v1811, %v1859
  %1861 = vmatmul.bf16.gmra.mxu0 %v748
  %v1862 = vpop.f32.mrf.mxu0
  %v1863 = vadd.f32 %v1814, %v1862
  %v1864 = vpop.f32.mrf.mxu0
  %v1865 = vadd.f32 %v1816, %v1864
  %1866 = vmatmul.bf16.gmra.mxu0 %v762
  %v1867 = vpop.f32.mrf.mxu0
  %v1868 = vadd.f32 %v1819, %v1867
  %v1869 = vpop.f32.mrf.mxu0
  %v1870 = vadd.f32 %v1821, %v1869
  %1871 = vmatmul.bf16.gmra.mxu0 %v776
  %v1872 = vpop.f32.mrf.mxu0
  %v1873 = vadd.f32 %v1824, %v1872
  %v1874 = vpop.f32.mrf.mxu0
  %v1875 = vadd.f32 %v1826, %v1874
  %1876 = vmatmul.bf16.gmra.mxu0 %v790
  %v1877 = vpop.f32.mrf.mxu0
  %v1878 = vadd.f32 %v1829, %v1877
  %v1879 = vpop.f32.mrf.mxu0
  %v1880 = vadd.f32 %v1831, %v1879
  %1881 = vdwg.mxu0
  %1882 = vmatpush.bf16.msra.mxu0 %v1398
  %1883 = vmatpush.bf16.msra.mxu0 %v1397
  %1884 = vmatpush.bf16.msra.mxu0 %v1396
  %1885 = vmatpush.bf16.msra.mxu0 %v1395
  %1886 = vmatpush.bf16.msra.mxu0 %v1394
  %1887 = vmatpush.bf16.msra.mxu0 %v1393
  %1888 = vmatpush.bf16.msra.mxu0 %v1392
  %1889 = vmatpush.bf16.msra.mxu0 %v1391
  %1890 = vmatmul.bf16.gmra.mxu0 %v693
  %v1891 = vpop.f32.mrf.mxu0
  %v1892 = vadd.f32 %v1843, %v1891
  %v1893 = vpop.f32.mrf.mxu0
  %v1894 = vadd.f32 %v1845, %v1893
  %1895 = vmatmul.bf16.gmra.mxu0 %v707
  %v1896 = vpop.f32.mrf.mxu0
  %v1897 = vadd.f32 %v1848, %v1896
  %v1898 = vpop.f32.mrf.mxu0
  %v1899 = vadd.f32 %v1850, %v1898
  %1900 = vmatmul.bf16.gmra.mxu0 %v721
  %v1901 = vpop.f32.mrf.mxu0
  %v1902 = vadd.f32 %v1853, %v1901
  %v1903 = vpop.f32.mrf.mxu0
  %v1904 = vadd.f32 %v1855, %v1903
  %1905 = vmatmul.bf16.gmra.mxu0 %v735
  %v1906 = vpop.f32.mrf.mxu0
  %v1907 = vadd.f32 %v1858, %v1906
  %v1908 = vpop.f32.mrf.mxu0
  %v1909 = vadd.f32 %v1860, %v1908
  %1910 = vmatmul.bf16.gmra.mxu0 %v749
  %v1911 = vpop.f32.mrf.mxu0
  %v1912 = vadd.f32 %v1863, %v1911
  %v1913 = vpop.f32.mrf.mxu0
  %v1914 = vadd.f32 %v1865, %v1913
  %1915 = vmatmul.bf16.gmra.mxu0 %v763
  %v1916 = vpop.f32.mrf.mxu0
  %v1917 = vadd.f32 %v1868, %v1916
  %v1918 = vpop.f32.mrf.mxu0
  %v1919 = vadd.f32 %v1870, %v1918
  %1920 = vmatmul.bf16.gmra.mxu0 %v777
  %v1921 = vpop.f32.mrf.mxu0
  %v1922 = vadd.f32 %v1873, %v1921
  %v1923 = vpop.f32.mrf.mxu0
  %v1924 = vadd.f32 %v1875, %v1923
  %1925 = vmatmul.bf16.gmra.mxu0 %v791
  %v1926 = vpop.f32.mrf.mxu0
  %v1927 = vadd.f32 %v1878, %v1926
  %v1928 = vpop.f32.mrf.mxu0
  %v1929 = vadd.f32 %v1880, %v1928
  %1930 = vdwg.mxu0
  %1931 = vmatpush.bf16.msra.mxu0 %v1406
  %1932 = vmatpush.bf16.msra.mxu0 %v1405
  %1933 = vmatpush.bf16.msra.mxu0 %v1404
  %1934 = vmatpush.bf16.msra.mxu0 %v1403
  %1935 = vmatpush.bf16.msra.mxu0 %v1402
  %1936 = vmatpush.bf16.msra.mxu0 %v1401
  %1937 = vmatpush.bf16.msra.mxu0 %v1400
  %1938 = vmatpush.bf16.msra.mxu0 %v1399
  %1939 = vmatmul.bf16.gmra.mxu0 %v694
  %v1940 = vpop.f32.mrf.mxu0
  %v1941 = vadd.f32 %v1892, %v1940
  %v1942 = vpop.f32.mrf.mxu0
  %v1943 = vadd.f32 %v1894, %v1942
  %1944 = vmatmul.bf16.gmra.mxu0 %v708
  %v1945 = vpop.f32.mrf.mxu0
  %v1946 = vadd.f32 %v1897, %v1945
  %v1947 = vpop.f32.mrf.mxu0
  %v1948 = vadd.f32 %v1899, %v1947
  %1949 = vmatmul.bf16.gmra.mxu0 %v722
  %v1950 = vpop.f32.mrf.mxu0
  %v1951 = vadd.f32 %v1902, %v1950
  %v1952 = vpop.f32.mrf.mxu0
  %v1953 = vadd.f32 %v1904, %v1952
  %1954 = vmatmul.bf16.gmra.mxu0 %v736
  %v1955 = vpop.f32.mrf.mxu0
  %v1956 = vadd.f32 %v1907, %v1955
  %v1957 = vpop.f32.mrf.mxu0
  %v1958 = vadd.f32 %v1909, %v1957
  %1959 = vmatmul.bf16.gmra.mxu0 %v750
  %v1960 = vpop.f32.mrf.mxu0
  %v1961 = vadd.f32 %v1912, %v1960
  %v1962 = vpop.f32.mrf.mxu0
  %v1963 = vadd.f32 %v1914, %v1962
  %1964 = vmatmul.bf16.gmra.mxu0 %v764
  %v1965 = vpop.f32.mrf.mxu0
  %v1966 = vadd.f32 %v1917, %v1965
  %v1967 = vpop.f32.mrf.mxu0
  %v1968 = vadd.f32 %v1919, %v1967
  %1969 = vmatmul.bf16.gmra.mxu0 %v778
  %v1970 = vpop.f32.mrf.mxu0
  %v1971 = vadd.f32 %v1922, %v1970
  %v1972 = vpop.f32.mrf.mxu0
  %v1973 = vadd.f32 %v1924, %v1972
  %1974 = vmatmul.bf16.gmra.mxu0 %v792
  %v1975 = vpop.f32.mrf.mxu0
  %v1976 = vadd.f32 %v1927, %v1975
  %v1977 = vpop.f32.mrf.mxu0
  %v1978 = vadd.f32 %v1929, %v1977
  %1979 = vdwg.mxu0
  %1980 = vmatpush.bf16.msra.mxu0 %v1414
  %1981 = vmatpush.bf16.msra.mxu0 %v1413
  %1982 = vmatpush.bf16.msra.mxu0 %v1412
  %1983 = vmatpush.bf16.msra.mxu0 %v1411
  %1984 = vmatpush.bf16.msra.mxu0 %v1410
  %1985 = vmatpush.bf16.msra.mxu0 %v1409
  %1986 = vmatpush.bf16.msra.mxu0 %v1408
  %1987 = vmatpush.bf16.msra.mxu0 %v1407
  %1988 = vmatmul.bf16.gmra.mxu0 %v695
  %v1989 = vpop.f32.mrf.mxu0
  %v1990 = vadd.f32 %v1941, %v1989
  %v1991 = vpop.f32.mrf.mxu0
  %v1992 = vadd.f32 %v1943, %v1991
  %1993 = vmatmul.bf16.gmra.mxu0 %v709
  %v1994 = vpop.f32.mrf.mxu0
  %v1995 = vadd.f32 %v1946, %v1994
  %v1996 = vpop.f32.mrf.mxu0
  %v1997 = vadd.f32 %v1948, %v1996
  %1998 = vmatmul.bf16.gmra.mxu0 %v723
  %v1999 = vpop.f32.mrf.mxu0
  %v2000 = vadd.f32 %v1951, %v1999
  %v2001 = vpop.f32.mrf.mxu0
  %v2002 = vadd.f32 %v1953, %v2001
  %2003 = vmatmul.bf16.gmra.mxu0 %v737
  %v2004 = vpop.f32.mrf.mxu0
  %v2005 = vadd.f32 %v1956, %v2004
  %v2006 = vpop.f32.mrf.mxu0
  %v2007 = vadd.f32 %v1958, %v2006
  %2008 = vmatmul.bf16.gmra.mxu0 %v751
  %v2009 = vpop.f32.mrf.mxu0
  %v2010 = vadd.f32 %v1961, %v2009
  %v2011 = vpop.f32.mrf.mxu0
  %v2012 = vadd.f32 %v1963, %v2011
  %2013 = vmatmul.bf16.gmra.mxu0 %v765
  %v2014 = vpop.f32.mrf.mxu0
  %v2015 = vadd.f32 %v1966, %v2014
  %v2016 = vpop.f32.mrf.mxu0
  %v2017 = vadd.f32 %v1968, %v2016
  %2018 = vmatmul.bf16.gmra.mxu0 %v779
  %v2019 = vpop.f32.mrf.mxu0
  %v2020 = vadd.f32 %v1971, %v2019
  %v2021 = vpop.f32.mrf.mxu0
  %v2022 = vadd.f32 %v1973, %v2021
  %2023 = vmatmul.bf16.gmra.mxu0 %v793
  %v2024 = vpop.f32.mrf.mxu0
  %v2025 = vadd.f32 %v1976, %v2024
  %v2026 = vpop.f32.mrf.mxu0
  %v2027 = vadd.f32 %v1978, %v2026
  %2028 = vdwg.mxu0
  %2029 = vmatpush.bf16.msra.mxu0 %v1422
  %2030 = vmatpush.bf16.msra.mxu0 %v1421
  %2031 = vmatpush.bf16.msra.mxu0 %v1420
  %2032 = vmatpush.bf16.msra.mxu0 %v1419
  %2033 = vmatpush.bf16.msra.mxu0 %v1418
  %2034 = vmatpush.bf16.msra.mxu0 %v1417
  %2035 = vmatpush.bf16.msra.mxu0 %v1416
  %2036 = vmatpush.bf16.msra.mxu0 %v1415
  %2037 = vmatmul.bf16.gmra.mxu0 %v696
  %v2038 = vpop.f32.mrf.mxu0
  %v2039 = vadd.f32 %v1990, %v2038
  %v2040 = vpop.f32.mrf.mxu0
  %v2041 = vadd.f32 %v1992, %v2040
  %2042 = vmatmul.bf16.gmra.mxu0 %v710
  %v2043 = vpop.f32.mrf.mxu0
  %v2044 = vadd.f32 %v1995, %v2043
  %v2045 = vpop.f32.mrf.mxu0
  %v2046 = vadd.f32 %v1997, %v2045
  %2047 = vmatmul.bf16.gmra.mxu0 %v724
  %v2048 = vpop.f32.mrf.mxu0
  %v2049 = vadd.f32 %v2000, %v2048
  %v2050 = vpop.f32.mrf.mxu0
  %v2051 = vadd.f32 %v2002, %v2050
  %2052 = vmatmul.bf16.gmra.mxu0 %v738
  %v2053 = vpop.f32.mrf.mxu0
  %v2054 = vadd.f32 %v2005, %v2053
  %v2055 = vpop.f32.mrf.mxu0
  %v2056 = vadd.f32 %v2007, %v2055
  %2057 = vmatmul.bf16.gmra.mxu0 %v752
  %v2058 = vpop.f32.mrf.mxu0
  %v2059 = vadd.f32 %v2010, %v2058
  %v2060 = vpop.f32.mrf.mxu0
  %v2061 = vadd.f32 %v2012, %v2060
  %2062 = vmatmul.bf16.gmra.mxu0 %v766
  %v2063 = vpop.f32.mrf.mxu0
  %v2064 = vadd.f32 %v2015, %v2063
  %v2065 = vpop.f32.mrf.mxu0
  %v2066 = vadd.f32 %v2017, %v2065
  %2067 = vmatmul.bf16.gmra.mxu0 %v780
  %v2068 = vpop.f32.mrf.mxu0
  %v2069 = vadd.f32 %v2020, %v2068
  %v2070 = vpop.f32.mrf.mxu0
  %v2071 = vadd.f32 %v2022, %v2070
  %2072 = vmatmul.bf16.gmra.mxu0 %v794
  %v2073 = vpop.f32.mrf.mxu0
  %v2074 = vadd.f32 %v2025, %v2073
  %v2075 = vpop.f32.mrf.mxu0
  %v2076 = vadd.f32 %v2027, %v2075
  %2077 = vdwg.mxu0
  %2078 = vmatpush.bf16.msra.mxu0 %v1430
  %2079 = vmatpush.bf16.msra.mxu0 %v1429
  %2080 = vmatpush.bf16.msra.mxu0 %v1428
  %2081 = vmatpush.bf16.msra.mxu0 %v1427
  %2082 = vmatpush.bf16.msra.mxu0 %v1426
  %2083 = vmatpush.bf16.msra.mxu0 %v1425
  %2084 = vmatpush.bf16.msra.mxu0 %v1424
  %2085 = vmatpush.bf16.msra.mxu0 %v1423
  %2086 = vmatmul.bf16.gmra.mxu0 %v697
  %v2087 = vpop.f32.mrf.mxu0
  %v2088 = vadd.f32 %v2039, %v2087
  %v2089 = vpop.f32.mrf.mxu0
  %v2090 = vadd.f32 %v2041, %v2089
  %2091 = vmatmul.bf16.gmra.mxu0 %v711
  %v2092 = vpop.f32.mrf.mxu0
  %v2093 = vadd.f32 %v2044, %v2092
  %v2094 = vpop.f32.mrf.mxu0
  %v2095 = vadd.f32 %v2046, %v2094
  %2096 = vmatmul.bf16.gmra.mxu0 %v725
  %v2097 = vpop.f32.mrf.mxu0
  %v2098 = vadd.f32 %v2049, %v2097
  %v2099 = vpop.f32.mrf.mxu0
  %v2100 = vadd.f32 %v2051, %v2099
  %2101 = vmatmul.bf16.gmra.mxu0 %v739
  %v2102 = vpop.f32.mrf.mxu0
  %v2103 = vadd.f32 %v2054, %v2102
  %v2104 = vpop.f32.mrf.mxu0
  %v2105 = vadd.f32 %v2056, %v2104
  %2106 = vmatmul.bf16.gmra.mxu0 %v753
  %v2107 = vpop.f32.mrf.mxu0
  %v2108 = vadd.f32 %v2059, %v2107
  %v2109 = vpop.f32.mrf.mxu0
  %v2110 = vadd.f32 %v2061, %v2109
  %2111 = vmatmul.bf16.gmra.mxu0 %v767
  %v2112 = vpop.f32.mrf.mxu0
  %v2113 = vadd.f32 %v2064, %v2112
  %v2114 = vpop.f32.mrf.mxu0
  %v2115 = vadd.f32 %v2066, %v2114
  %2116 = vmatmul.bf16.gmra.mxu0 %v781
  %v2117 = vpop.f32.mrf.mxu0
  %v2118 = vadd.f32 %v2069, %v2117
  %v2119 = vpop.f32.mrf.mxu0
  %v2120 = vadd.f32 %v2071, %v2119
  %2121 = vmatmul.bf16.gmra.mxu0 %v795
  %v2122 = vpop.f32.mrf.mxu0
  %v2123 = vadd.f32 %v2074, %v2122
  %v2124 = vpop.f32.mrf.mxu0
  %v2125 = vadd.f32 %v2076, %v2124
  %2126 = vdwg.mxu0
  %2127 = vmatpush.bf16.msra.mxu0 %v1438
  %2128 = vmatpush.bf16.msra.mxu0 %v1437
  %2129 = vmatpush.bf16.msra.mxu0 %v1436
  %2130 = vmatpush.bf16.msra.mxu0 %v1435
  %2131 = vmatpush.bf16.msra.mxu0 %v1434
  %2132 = vmatpush.bf16.msra.mxu0 %v1433
  %2133 = vmatpush.bf16.msra.mxu0 %v1432
  %2134 = vmatpush.bf16.msra.mxu0 %v1431
  %2135 = vmatmul.bf16.gmra.mxu0 %v698
  %v2136 = vpop.f32.mrf.mxu0
  %v2137 = vadd.f32 %v2088, %v2136
  %v2138 = vpop.f32.mrf.mxu0
  %v2139 = vadd.f32 %v2090, %v2138
  %2140 = vmatmul.bf16.gmra.mxu0 %v712
  %v2141 = vpop.f32.mrf.mxu0
  %v2142 = vadd.f32 %v2093, %v2141
  %v2143 = vpop.f32.mrf.mxu0
  %v2144 = vadd.f32 %v2095, %v2143
  %2145 = vmatmul.bf16.gmra.mxu0 %v726
  %v2146 = vpop.f32.mrf.mxu0
  %v2147 = vadd.f32 %v2098, %v2146
  %v2148 = vpop.f32.mrf.mxu0
  %v2149 = vadd.f32 %v2100, %v2148
  %2150 = vmatmul.bf16.gmra.mxu0 %v740
  %v2151 = vpop.f32.mrf.mxu0
  %v2152 = vadd.f32 %v2103, %v2151
  %v2153 = vpop.f32.mrf.mxu0
  %v2154 = vadd.f32 %v2105, %v2153
  %2155 = vmatmul.bf16.gmra.mxu0 %v754
  %v2156 = vpop.f32.mrf.mxu0
  %v2157 = vadd.f32 %v2108, %v2156
  %v2158 = vpop.f32.mrf.mxu0
  %v2159 = vadd.f32 %v2110, %v2158
  %2160 = vmatmul.bf16.gmra.mxu0 %v768
  %v2161 = vpop.f32.mrf.mxu0
  %v2162 = vadd.f32 %v2113, %v2161
  %v2163 = vpop.f32.mrf.mxu0
  %v2164 = vadd.f32 %v2115, %v2163
  %2165 = vmatmul.bf16.gmra.mxu0 %v782
  %v2166 = vpop.f32.mrf.mxu0
  %v2167 = vadd.f32 %v2118, %v2166
  %v2168 = vpop.f32.mrf.mxu0
  %v2169 = vadd.f32 %v2120, %v2168
  %2170 = vmatmul.bf16.gmra.mxu0 %v796
  %v2171 = vpop.f32.mrf.mxu0
  %v2172 = vadd.f32 %v2123, %v2171
  %v2173 = vpop.f32.mrf.mxu0
  %v2174 = vadd.f32 %v2125, %v2173
  %2175 = vdwg.mxu0
  %2176 = vmatpush.bf16.msra.mxu0 %v1446
  %2177 = vmatpush.bf16.msra.mxu0 %v1445
  %2178 = vmatpush.bf16.msra.mxu0 %v1444
  %2179 = vmatpush.bf16.msra.mxu0 %v1443
  %2180 = vmatpush.bf16.msra.mxu0 %v1442
  %2181 = vmatpush.bf16.msra.mxu0 %v1441
  %2182 = vmatpush.bf16.msra.mxu0 %v1440
  %2183 = vmatpush.bf16.msra.mxu0 %v1439
  %2184 = vmatmul.bf16.gmra.mxu0 %v699
  %v2185 = vpop.f32.mrf.mxu0
  %v2186 = vadd.f32 %v2137, %v2185
  %v2187 = vpop.f32.mrf.mxu0
  %v2188 = vadd.f32 %v2139, %v2187
  %2189 = vmatmul.bf16.gmra.mxu0 %v713
  %v2190 = vpop.f32.mrf.mxu0
  %v2191 = vadd.f32 %v2142, %v2190
  %v2192 = vpop.f32.mrf.mxu0
  %v2193 = vadd.f32 %v2144, %v2192
  %2194 = vmatmul.bf16.gmra.mxu0 %v727
  %v2195 = vpop.f32.mrf.mxu0
  %v2196 = vadd.f32 %v2147, %v2195
  %v2197 = vpop.f32.mrf.mxu0
  %v2198 = vadd.f32 %v2149, %v2197
  %2199 = vmatmul.bf16.gmra.mxu0 %v741
  %v2200 = vpop.f32.mrf.mxu0
  %v2201 = vadd.f32 %v2152, %v2200
  %v2202 = vpop.f32.mrf.mxu0
  %v2203 = vadd.f32 %v2154, %v2202
  %2204 = vmatmul.bf16.gmra.mxu0 %v755
  %v2205 = vpop.f32.mrf.mxu0
  %v2206 = vadd.f32 %v2157, %v2205
  %v2207 = vpop.f32.mrf.mxu0
  %v2208 = vadd.f32 %v2159, %v2207
  %2209 = vmatmul.bf16.gmra.mxu0 %v769
  %v2210 = vpop.f32.mrf.mxu0
  %v2211 = vadd.f32 %v2162, %v2210
  %v2212 = vpop.f32.mrf.mxu0
  %v2213 = vadd.f32 %v2164, %v2212
  %2214 = vmatmul.bf16.gmra.mxu0 %v783
  %v2215 = vpop.f32.mrf.mxu0
  %v2216 = vadd.f32 %v2167, %v2215
  %v2217 = vpop.f32.mrf.mxu0
  %v2218 = vadd.f32 %v2169, %v2217
  %2219 = vmatmul.bf16.gmra.mxu0 %v797
  %v2220 = vpop.f32.mrf.mxu0
  %v2221 = vadd.f32 %v2172, %v2220
  %v2222 = vpop.f32.mrf.mxu0
  %v2223 = vadd.f32 %v2174, %v2222
  %2224 = vdwg.mxu0
  %2225 = vmatpush.bf16.msra.mxu0 0
  %2226 = vmatpush.bf16.msra.mxu0 0
  %2227 = vmatpush.bf16.msra.mxu0 %v1452
  %2228 = vmatpush.bf16.msra.mxu0 %v1451
  %2229 = vmatpush.bf16.msra.mxu0 %v1450
  %2230 = vmatpush.bf16.msra.mxu0 %v1449
  %2231 = vmatpush.bf16.msra.mxu0 %v1448
  %2232 = vmatpush.bf16.msra.mxu0 %v1447
  %2233 = vmatmul.bf16.gmra.mxu0 %v1565
  %v2234 = vpop.f32.mrf.mxu0
  %v2235 = vadd.f32 %v2186, %v2234
  %v2236 = vpop.f32.mrf.mxu0
  %v2237 = vadd.f32 %v2188, %v2236
  %2238 = vmatmul.bf16.gmra.mxu0 %v1568
  %v2239 = vpop.f32.mrf.mxu0
  %v2240 = vadd.f32 %v2191, %v2239
  %v2241 = vpop.f32.mrf.mxu0
  %v2242 = vadd.f32 %v2193, %v2241
  %2243 = vmatmul.bf16.gmra.mxu0 %v1571
  %v2244 = vpop.f32.mrf.mxu0
  %v2245 = vadd.f32 %v2196, %v2244
  %v2246 = vpop.f32.mrf.mxu0
  %v2247 = vadd.f32 %v2198, %v2246
  %2248 = vmatmul.bf16.gmra.mxu0 %v1574
  %v2249 = vpop.f32.mrf.mxu0
  %v2250 = vadd.f32 %v2201, %v2249
  %v2251 = vpop.f32.mrf.mxu0
  %v2252 = vadd.f32 %v2203, %v2251
  %2253 = vmatmul.bf16.gmra.mxu0 %v1577
  %v2254 = vpop.f32.mrf.mxu0
  %v2255 = vadd.f32 %v2206, %v2254
  %v2256 = vpop.f32.mrf.mxu0
  %v2257 = vadd.f32 %v2208, %v2256
  %2258 = vmatmul.bf16.gmra.mxu0 %v1580
  %v2259 = vpop.f32.mrf.mxu0
  %v2260 = vadd.f32 %v2211, %v2259
  %v2261 = vpop.f32.mrf.mxu0
  %v2262 = vadd.f32 %v2213, %v2261
  %2263 = vmatmul.bf16.gmra.mxu0 %v1583
  %v2264 = vpop.f32.mrf.mxu0
  %v2265 = vadd.f32 %v2216, %v2264
  %v2266 = vpop.f32.mrf.mxu0
  %v2267 = vadd.f32 %v2218, %v2266
  %2268 = vmatmul.bf16.gmra.mxu0 %v1586
  %v2269 = vpop.f32.mrf.mxu0
  %v2270 = vadd.f32 %v2221, %v2269
  %v2271 = vpop.f32.mrf.mxu0
  %v2272 = vadd.f32 %v2223, %v2271
  %2273 = vdwg.mxu0
  %v2274 = vmax.f32 %v2235, 0.0
  %v2275 = vmax.f32 %v2237, 0.0
  %v2276 = vmax.f32 %v2240, 0.0
  %v2277 = vmax.f32 %v2242, 0.0
  %v2278 = vmax.f32 %v2245, 0.0
  %v2279 = vmax.f32 %v2247, 0.0
  %v2280 = vmax.f32 %v2250, 0.0
  %v2281 = vmax.f32 %v2252, 0.0
  %v2282 = vmax.f32 %v2255, 0.0
  %v2283 = vmax.f32 %v2257, 0.0
  %v2284 = vmax.f32 %v2260, 0.0
  %v2285 = vmax.f32 %v2262, 0.0
  %v2286 = vmax.f32 %v2265, 0.0
  %v2287 = vmax.f32 %v2267, 0.0
  %v2288 = vmax.f32 %v2270, 0.0
  %v2289 = vmax.f32 %v2272, 0.0
  %2290 = vst [vmem:[%s3] sm:$0xff] %v2274
  %2291 = vst [vmem:[%s3 + $0x8] sm:$0xff] %v2275
  %2292 = vst [vmem:[%s3 + $0x10] sm:$0xff] %v2276
  %2293 = vst [vmem:[%s3 + $0x18] sm:$0xff] %v2277
  %2294 = vst [vmem:[%s3 + $0x20] sm:$0xff] %v2278
  %2295 = vst [vmem:[%s3 + $0x28] sm:$0xff] %v2279
  %2296 = vst [vmem:[%s3 + $0x30] sm:$0xff] %v2280
  %2297 = vst [vmem:[%s3 + $0x38] sm:$0xff] %v2281
  %2298 = vst [vmem:[%s3 + $0x40] sm:$0xff] %v2282
  %2299 = vst [vmem:[%s3 + $0x48] sm:$0xff] %v2283
  %2300 = vst [vmem:[%s3 + $0x50] sm:$0xff] %v2284
  %2301 = vst [vmem:[%s3 + $0x58] sm:$0xff] %v2285
  %2302 = vst [vmem:[%s3 + $0x60] sm:$0xff] %v2286
  %2303 = vst [vmem:[%s3 + $0x68] sm:$0xff] %v2287
  %2304 = vst [vmem:[%s3 + $0x70] sm:$0xff] %v2288
  %2305 = vst [vmem:[%s3 + $0x78] sm:$0xff] %v2289
  // Predicated region
  $region14: #{forward.7} parent=0 // pred_check
    _
  $region15: #{forward.7} parent=0 // pred_check_branch
    %2307 = sbr.rel (0) target = $region17
  $region16: #{forward.7} parent=0 // pred_region
    _
  $region17: #{forward.7} parent=0 // pred_fallthru
    _
  // Predicated region
  $region18: #{forward.7} parent=0 // pred_check
    _
  $region19: #{forward.7} parent=0 // pred_check_branch
    %2309 = sbr.rel (0) target = $region21
  $region20: #{forward.7} parent=0 // pred_region
    _
  $region21: #{forward.7} parent=0 // pred_fallthru
    _

</llo_original>
